<compile_context>
chip_gen: v7x
topology: tpu7x:2x2x1
jax: 0.10.0
libtpu: 0.0.40
codegen_flags: <defaults>
</compile_context>

<pallas_src>
import functools

import jax
import jax.numpy as jnp
from jax.experimental import pallas as pl
from jax.experimental.pallas import tpu as pltpu


# ---------------------------------------------------------------------------
# In-kernel helpers
# ---------------------------------------------------------------------------
def _layernorm(x, w, b, eps=1e-6):
    # x: (M, D), w/b: (1, D)
    mu = jnp.mean(x, axis=-1, keepdims=True)
    var = jnp.mean((x - mu) ** 2, axis=-1, keepdims=True)
    return (x - mu) * jax.lax.rsqrt(var + eps) * w + b


def _erf(x):
    # Exact-erf GELU support: Abramowitz & Stegun 7.1.26 rational approximation,
    # |error| < 1.5e-7 (~fp32 eps).  The divide is kept exact: an approx
    # reciprocal here would add ~1e-4-level error through the polynomial.
    a1, a2, a3, a4, a5 = 0.254829592, -0.284496736, 1.421413741, -1.453152027, 1.061405429
    p = 0.3275911
    ax = jnp.abs(x)
    t = 1.0 / (1.0 + p * ax)
    poly = ((((a5 * t + a4) * t + a3) * t + a2) * t + a1) * t
    y = 1.0 - poly * jnp.exp(-ax * ax)
    return jnp.where(x >= 0, y, -y)


def _gelu_exact(x):
    return 0.5 * x * (1.0 + _erf(x * 0.7071067811865476))


# ---------------------------------------------------------------------------
# Fused kernel: one grid step = (one batch block, one transformer block)
# ---------------------------------------------------------------------------
def cross_stack_kernel(
    x1_ref, x2_ref,          # flattened (M, D) activation tiles
    wd_ref,                  # packed per-depth params, D-wide columns   (1, Rd, D)
    wh_ref,                  # packed per-depth params, hidden-wide cols (1, Rh, H4)
    out_ref,                 # final x[2] tile (M, D)
    xs_ref,                  # VMEM-resident state slab (3M, D): [x0; x1; x2]
    *, n_heads, head_dim, scale, bblk, tokens, dim, hidden, off,
):
    d = pl.program_id(1)
    nd = pl.num_programs(1)

    D, T, H, hd = dim, tokens, n_heads, head_dim
    M = bblk * T

    # Initialise the resident state at the first block of each batch block:
    # x = [x1, x2, x2]  (pos_drop has p=0.0 -> identity).
    @pl.when(d == 0)
    def _init():
        xs_ref[0:M, :] = x1_ref[...].astype(jnp.float32)
        xs_ref[M:2 * M, :] = x2_ref[...].astype(jnp.float32)
        xs_ref[2 * M:3 * M, :] = x2_ref[...].astype(jnp.float32)

    # --- per-depth parameter slices (static, 8-aligned row offsets) ---------
    def seg(ref, r, n):
        return ref[0, r:r + n, :]

    ln1w = seg(wd_ref, off["ln1_w"], 1)
    ln1b = seg(wd_ref, off["ln1_b"], 1)
    wq = seg(wd_ref, off["wq"], D)
    wk = seg(wd_ref, off["wk"], D)
    wv = seg(wd_ref, off["wv"], D)
    wp = seg(wd_ref, off["wp"], D)
    bq = seg(wd_ref, off["bq"], 1)
    bk = seg(wd_ref, off["bk"], 1)
    bv = seg(wd_ref, off["bv"], 1)
    bp = seg(wd_ref, off["bp"], 1)
    ln2w = seg(wd_ref, off["ln2_w"], 1)
    ln2b = seg(wd_ref, off["ln2_b"], 1)
    w2 = seg(wd_ref, off["w2"], hidden)
    b2 = seg(wd_ref, off["b2"], 1)
    normw = seg(wd_ref, off["norm_w"], 1)
    normb = seg(wd_ref, off["norm_b"], 1)
    w1 = seg(wh_ref, off["w1"], D)
    b1 = seg(wh_ref, off["b1"], 1)

    # --- fused norm1 over all three resident streams in one pass -----------
    ncat = _layernorm(xs_ref[...], ln1w, ln1b)       # (3M, D)
    n0 = ncat[0:M]
    n1 = ncat[M:2 * M]
    n2 = ncat[2 * M:3 * M]
    x2 = xs_ref[2 * M:3 * M, :]                      # residual stream

    # --- batch-flattened projections; softmax scale folded into q ----------
    q = (jnp.dot(n0, wq, preferred_element_type=jnp.float32) + bq) * scale
    k = jnp.dot(n1, wk, preferred_element_type=jnp.float32) + bk
    v = jnp.dot(n2, wv, preferred_element_type=jnp.float32) + bv

    # --- multi-head attention, O(H) head split/merge ------------------------
    head_outs = []
    for h in range(H):
        lo = h * hd
        qh = q[:, lo:lo + hd].reshape(bblk, T, hd)
        kh = k[:, lo:lo + hd].reshape(bblk, T, hd)
        vh = v[:, lo:lo + hd].reshape(bblk, T, hd)
        s = jnp.einsum('bqd,bkd->bqk', qh, kh, preferred_element_type=jnp.float32)
        s = s - jnp.max(s, axis=-1, keepdims=True)   # stabilised softmax
        e = jnp.exp(s)
        den = jnp.sum(e, axis=-1, keepdims=True)
        o = jnp.einsum('bqk,bkd->bqd', e, vh, preferred_element_type=jnp.float32)
        # Deferred normalisation on the (b, T, hd) output; EUP approx recip.
        o = o * pl.reciprocal(den, approx=True)
        head_outs.append(o.reshape(M, hd))
    # Single H-way lane concat: matches torch transpose(1,2).flatten(2).
    weighted = jnp.concatenate(head_outs, axis=-1)   # (M, D)

    attn_out = jnp.dot(weighted, wp, preferred_element_type=jnp.float32) + bp

    # residual 1 (residual stream is x[2] in the cross branch)
    out = x2 + attn_out

    # MLP on norm2(out), residual 2
    nout = _layernorm(out, ln2w, ln2b)
    hid = jnp.dot(nout, w1, preferred_element_type=jnp.float32) + b1
    hid = _gelu_exact(hid)
    out = out + jnp.dot(hid, w2, preferred_element_type=jnp.float32) + b2

    # module-level self.norm applied to x[2] after every block
    out_n = _layernorm(out, normw, normb)

    @pl.when(d == nd - 1)
    def _final():
        out_ref[...] = out_n.astype(out_ref.dtype)

    # Carry the state for the next block; skipped on the last block (x[0]/x[1]
    # of the final block are never consumed, so never stored).
    @pl.when(d != nd - 1)
    def _carry():
        xs_ref[0:M, :] = n0
        xs_ref[M:2 * M, :] = out
        xs_ref[2 * M:3 * M, :] = out_n


# ---------------------------------------------------------------------------
# Parameter packing: 2 depth-blocked slabs instead of ~18 tiny streams
# ---------------------------------------------------------------------------
def _round_up(x, m):
    return (x + m - 1) // m * m


def pack_params(params):
    depth, D, _ = params["wq"].shape
    hidden = params["w1"].shape[-1]

    off = {}
    off["wq"] = 0
    off["wk"] = D
    off["wv"] = 2 * D
    off["wp"] = 3 * D
    off["w2"] = _round_up(4 * D, 8)
    bias_start = _round_up(off["w2"] + hidden, 8)
    bias_names = ["ln1_w", "ln1_b", "bq", "bk", "bv", "bp",
                  "ln2_w", "ln2_b", "b2", "norm_w", "norm_b"]
    for i, name in enumerate(bias_names):
        off[name] = bias_start + i
    rows_d = _round_up(bias_start + len(bias_names), 8)

    wd = jnp.zeros((depth, rows_d, D), jnp.float32)
    wd = wd.at[:, off["wq"]:off["wq"] + D, :].set(params["wq"])
    wd = wd.at[:, off["wk"]:off["wk"] + D, :].set(params["wk"])
    wd = wd.at[:, off["wv"]:off["wv"] + D, :].set(params["wv"])
    wd = wd.at[:, off["wp"]:off["wp"] + D, :].set(params["wp"])
    wd = wd.at[:, off["w2"]:off["w2"] + hidden, :].set(params["w2"])
    for name in ["ln1_w", "ln1_b", "bq", "bk", "bv", "bp", "ln2_w", "ln2_b", "b2"]:
        wd = wd.at[:, off[name]:off[name] + 1, :].set(params[name])
    # Module-level final LayerNorm replicated per depth (removes 2 extra streams).
    wd = wd.at[:, off["norm_w"]:off["norm_w"] + 1, :].set(
        jnp.broadcast_to(params["norm_w"][None], (depth, 1, D)))
    wd = wd.at[:, off["norm_b"]:off["norm_b"] + 1, :].set(
        jnp.broadcast_to(params["norm_b"][None], (depth, 1, D)))

    off["w1"] = 0
    off["b1"] = D
    rows_h = _round_up(D + 1, 8)
    wh = jnp.zeros((depth, rows_h, hidden), jnp.float32)
    wh = wh.at[:, off["w1"]:off["w1"] + D, :].set(params["w1"])
    wh = wh.at[:, off["b1"]:off["b1"] + 1, :].set(params["b1"])

    return wd, wh, off


# ---------------------------------------------------------------------------
# Batch-block selection (per performance review)
# ---------------------------------------------------------------------------
def _pick_batch_block(B, T, m_lo=128, m_hi=512):
    """Pick bblk | B so M = bblk*T targets [m_lo, m_hi] rows.

    Only keep >= 2 batch-grid steps (v7x megacore) when each step still gets
    >= m_lo rows; otherwise give all rows to one step.  v5e/v6e could raise
    m_hi to ~1024; 512 is a safe common cap.
    """
    divs = [b for b in range(1, B + 1) if B % b == 0]
    cand = [b for b in divs if (b * T) % 8 == 0 or b == B]   # sublane-aligned rows
    in_range = [b for b in cand if m_lo <= b * T <= m_hi]
    if in_range:
        pool = in_range
    else:
        under = [b for b in cand if b * T <= m_hi]
        pool = under or [min(cand, key=lambda b: b * T)]
    multi = [b for b in pool if B // b >= 2 and b * T >= m_lo]
    pool = multi or pool
    return max(pool, key=lambda b: b * T)


# ---------------------------------------------------------------------------
# Wrapper: one pallas_call for the whole block stack
# ---------------------------------------------------------------------------
def cross_atten_forward(x1_ori, x2_ori, params, n_heads):
    B, T, D = x1_ori.shape
    assert D % n_heads == 0
    depth = params["wq"].shape[0]
    hidden = params["w1"].shape[-1]
    hd = D // n_heads
    scale = float(hd) ** -0.5

    bblk = _pick_batch_block(B, T)
    nb = B // bblk
    M = bblk * T

    # Batch-flatten outside the kernel: every in-kernel matmul sees (M, D) rows.
    x1f = x1_ori.reshape(B * T, D)
    x2f = x2_ori.reshape(B * T, D)

    wd, wh, off = pack_params(params)
    Rd, Rh = wd.shape[1], wh.shape[1]

    seq_spec = pl.BlockSpec((M, D), lambda b, d: (b, 0))
    wd_spec = pl.BlockSpec((1, Rd, D), lambda b, d: (d, 0, 0))
    wh_spec = pl.BlockSpec((1, Rh, hidden), lambda b, d: (d, 0, 0))

    kernel = functools.partial(
        cross_stack_kernel,
        n_heads=n_heads, head_dim=hd, scale=scale, bblk=bblk, tokens=T,
        dim=D, hidden=hidden, off=off)

    # VMEM budget from actual (tile-padded, double-buffered) buffer sizes.
    def tile_bytes(r, c):
        return _round_up(r, 8) * _round_up(c, 128) * 4
    est = (2 * 2 * tile_bytes(M, D)        # x1/x2 tiles, double-buffered
           + 2 * tile_bytes(M, D)          # output tile
           + 2 * tile_bytes(Rd, D)         # packed D-wide params
           + 2 * tile_bytes(Rh, hidden)    # packed hidden-wide params
           + tile_bytes(3 * M, D))         # resident activation scratch
    vmem_limit = int(min(64 * 1024 * 1024, max(32 * 1024 * 1024, 4 * est)))

    out = pl.pallas_call(
        kernel,
        grid=(nb, depth),
        in_specs=[seq_spec, seq_spec, wd_spec, wh_spec],
        out_specs=seq_spec,
        out_shape=jax.ShapeDtypeStruct((B * T, D), x1_ori.dtype),
        scratch_shapes=[
            pltpu.VMEM((3 * M, D), jnp.float32),   # [x0; x1; x2] state slab
        ],
        compiler_params=pltpu.CompilerParams(
            dimension_semantics=("parallel", "arbitrary"),
            vmem_limit_bytes=vmem_limit,
        ),
    )(x1f, x2f, wd, wh)

    return out.reshape(B, T, D)


# ---------------------------------------------------------------------------
# Deterministic parameter init (synthetic weights; depth-stacked layout)
# ---------------------------------------------------------------------------
def init_params(key, depth, dim, hidden):
    def lin(k, fan_in, fan_out):
        kw, kb = jax.random.split(k)
        w = jax.random.normal(kw, (depth, fan_in, fan_out), jnp.float32) * 0.02
        b = jax.random.normal(kb, (depth, 1, fan_out), jnp.float32) * 0.02
        return w, b

    ks = jax.random.split(key, 6)
    wq, bq = lin(ks[0], dim, dim)
    wk, bk = lin(ks[1], dim, dim)
    wv, bv = lin(ks[2], dim, dim)
    wp, bp = lin(ks[3], dim, dim)
    w1, b1 = lin(ks[4], dim, hidden)
    w2, b2 = lin(ks[5], hidden, dim)
    return dict(
        ln1_w=jnp.ones((depth, 1, dim), jnp.float32),
        ln1_b=jnp.zeros((depth, 1, dim), jnp.float32),
        wq=wq, bq=bq, wk=wk, bk=bk, wv=wv, bv=bv, wp=wp, bp=bp,
        ln2_w=jnp.ones((depth, 1, dim), jnp.float32),
        ln2_b=jnp.zeros((depth, 1, dim), jnp.float32),
        w1=w1, b1=b1, w2=w2, b2=b2,
        norm_w=jnp.ones((1, dim), jnp.float32),
        norm_b=jnp.zeros((1, dim), jnp.float32),
    )


# ---------------------------------------------------------------------------
# Pure-JAX reference (mirrors the PyTorch forward) for self-check
# ---------------------------------------------------------------------------
def ref_forward(x1_ori, x2_ori, params, n_heads):
    def ln(x, w, b, eps=1e-6):
        mu = x.mean(-1, keepdims=True)
        var = ((x - mu) ** 2).mean(-1, keepdims=True)
        return (x - mu) / jnp.sqrt(var + eps) * w + b

    B, T, D = x1_ori.shape
    depth = params["wq"].shape[0]
    hd = D // n_heads
    scale = float(hd) ** -0.5
    x = [x1_ori, x2_ori, x2_ori]
    for i in range(depth):
        n0 = ln(x[0], params["ln1_w"][i], params["ln1_b"][i])
        n1 = ln(x[1], params["ln1_w"][i], params["ln1_b"][i])
        n2 = ln(x[2], params["ln1_w"][i], params["ln1_b"][i])
        q = n0 @ params["wq"][i] + params["bq"][i]
        k = n1 @ params["wk"][i] + params["bk"][i]
        v = n2 @ params["wv"][i] + params["bv"][i]
        qh = q.reshape(B, T, n_heads, hd).transpose(0, 2, 1, 3)
        kh = k.reshape(B, T, n_heads, hd).transpose(0, 2, 1, 3)
        vh = v.reshape(B, T, n_heads, hd).transpose(0, 2, 1, 3)
        s = (qh @ kh.transpose(0, 1, 3, 2)) * scale
        attn = jax.nn.softmax(s, axis=-1)
        wa = (attn @ vh).transpose(0, 2, 1, 3).reshape(B, T, D)
        out = x[2] + (wa @ params["wp"][i] + params["bp"][i])
        nout = ln(out, params["ln2_w"][i], params["ln2_b"][i])
        h = jax.nn.gelu(nout @ params["w1"][i] + params["b1"][i], approximate=False)
        out = out + (h @ params["w2"][i] + params["b2"][i])
        x = [n0, out, ln(out, params["norm_w"], params["norm_b"])]
    return x[2]


# ---------------------------------------------------------------------------
if __name__ == "__main__":
    B, T, D = 2, 8, 32          # batch, num_patches (tokens), embed_dim
    n_heads = 4                 # head_dim = 8
    depth = 2
    hidden = int(D * 4.0)

    key = jax.random.PRNGKey(0)
    kx1, kx2, kp = jax.random.split(key, 3)
    x1 = jax.random.normal(kx1, (B, T, D), jnp.float32)
    x2 = jax.random.normal(kx2, (B, T, D), jnp.float32)
    params = init_params(kp, depth, D, hidden)

    out = cross_atten_forward(x1, x2, params, n_heads)
    out = jax.block_until_ready(out)

    ref = ref_forward(x1, x2, params, n_heads)
    assert out.shape == (B, T, D), out.shape
    max_err = float(jnp.max(jnp.abs(out - ref)))
    # Tolerance 5e-4: allows the EUP approximate-reciprocal softmax
    # normalisation (review item) while still catching any structural bug.
    if not bool(jnp.allclose(out, ref, atol=5e-4, rtol=5e-4)):
        raise SystemExit(f"mismatch vs reference, max_err={max_err:e}")

    print("KERNEL_OK")
</pallas_src>

<mosaic_0001>
module attributes {stable_mosaic.version = 11 : i64} {
  func.func @cross_stack_kernel(%arg0: i32, %arg1: i32, %arg2: memref<16x32xf32, #tpu.memory_space<vmem>>, %arg3: memref<16x32xf32, #tpu.memory_space<vmem>>, %arg4: memref<1x272x32xf32, #tpu.memory_space<vmem>>, %arg5: memref<1x40x128xf32, #tpu.memory_space<vmem>>, %arg6: memref<16x32xf32, #tpu.memory_space<vmem>>, %arg7: memref<48x32xf32, #tpu.memory_space<vmem>>) attributes {dimension_semantics = [#tpu.dimension_semantics<parallel>, #tpu.dimension_semantics<arbitrary>], iteration_bounds = array<i64: 1, 2>, scalar_prefetch = 0 : i64, scratch_operands = 1 : i64, tpu.core_type = #tpu.core_type<tc>, window_params = [{transform_indices = @transform_0, window_bounds = array<i64: 16, 32>}, {transform_indices = @transform_1, window_bounds = array<i64: 16, 32>}, {transform_indices = @transform_2, window_bounds = array<i64: 1, 272, 32>}, {transform_indices = @transform_3, window_bounds = array<i64: 1, 40, 128>}, {transform_indices = @transform_4, window_bounds = array<i64: 16, 32>}]} {
    %c0_i32 = arith.constant 0 : i32
    %0 = arith.cmpi eq, %arg1, %c0_i32 : i32
    %1 = arith.extui %0 : i1 to i32
    %c0_i32_0 = arith.constant 0 : i32
    %2 = arith.cmpi ne, %1, %c0_i32_0 : i32
    scf.if %2 {
      %c0_98 = arith.constant 0 : index
      %c0_99 = arith.constant 0 : index
      %255 = vector.load %arg2[%c0_98, %c0_99] : memref<16x32xf32, #tpu.memory_space<vmem>>, vector<16x32xf32>
      %c0_100 = arith.constant 0 : index
      %c0_101 = arith.constant 0 : index
      %256 = vector.load %arg7[%c0_100, %c0_101] : memref<48x32xf32, #tpu.memory_space<vmem>>, vector<16x32xf32>
      tpu.vector_store %arg7[%c0_100, %c0_101], %255 {strides = array<i32>} : memref<48x32xf32, #tpu.memory_space<vmem>>, vector<16x32xf32>,
      %c0_102 = arith.constant 0 : index
      %c0_103 = arith.constant 0 : index
      %257 = vector.load %arg3[%c0_102, %c0_103] : memref<16x32xf32, #tpu.memory_space<vmem>>, vector<16x32xf32>
      %c16 = arith.constant 16 : index
      %c0_104 = arith.constant 0 : index
      %258 = vector.load %arg7[%c16, %c0_104] : memref<48x32xf32, #tpu.memory_space<vmem>>, vector<16x32xf32>
      tpu.vector_store %arg7[%c16, %c0_104], %257 {strides = array<i32>} : memref<48x32xf32, #tpu.memory_space<vmem>>, vector<16x32xf32>,
      %c0_105 = arith.constant 0 : index
      %c0_106 = arith.constant 0 : index
      %259 = vector.load %arg3[%c0_105, %c0_106] : memref<16x32xf32, #tpu.memory_space<vmem>>, vector<16x32xf32>
      %c32_107 = arith.constant 32 : index
      %c0_108 = arith.constant 0 : index
      %260 = vector.load %arg7[%c32_107, %c0_108] : memref<48x32xf32, #tpu.memory_space<vmem>>, vector<16x32xf32>
      tpu.vector_store %arg7[%c32_107, %c0_108], %259 {strides = array<i32>} : memref<48x32xf32, #tpu.memory_space<vmem>>, vector<16x32xf32>,
    } else {
    }
    %c0 = arith.constant 0 : index
    %c256 = arith.constant 256 : index
    %c0_1 = arith.constant 0 : index
    %3 = vector.load %arg4[%c0, %c256, %c0_1] : memref<1x272x32xf32, #tpu.memory_space<vmem>>, vector<1x1x32xf32>
    %4 = vector.shape_cast %3 : vector<1x1x32xf32> to vector<1x32xf32>
    %c0_2 = arith.constant 0 : index
    %c257 = arith.constant 257 : index
    %c0_3 = arith.constant 0 : index
    %5 = vector.load %arg4[%c0_2, %c257, %c0_3] : memref<1x272x32xf32, #tpu.memory_space<vmem>>, vector<1x1x32xf32>
    %6 = vector.shape_cast %5 : vector<1x1x32xf32> to vector<1x32xf32>
    %c0_4 = arith.constant 0 : index
    %c0_5 = arith.constant 0 : index
    %c0_6 = arith.constant 0 : index
    %7 = vector.load %arg4[%c0_4, %c0_5, %c0_6] : memref<1x272x32xf32, #tpu.memory_space<vmem>>, vector<1x32x32xf32>
    %8 = vector.shape_cast %7 : vector<1x32x32xf32> to vector<32x32xf32>
    %c0_7 = arith.constant 0 : index
    %c32 = arith.constant 32 : index
    %c0_8 = arith.constant 0 : index
    %9 = vector.load %arg4[%c0_7, %c32, %c0_8] : memref<1x272x32xf32, #tpu.memory_space<vmem>>, vector<1x32x32xf32>
    %10 = vector.shape_cast %9 : vector<1x32x32xf32> to vector<32x32xf32>
    %c0_9 = arith.constant 0 : index
    %c64 = arith.constant 64 : index
    %c0_10 = arith.constant 0 : index
    %11 = vector.load %arg4[%c0_9, %c64, %c0_10] : memref<1x272x32xf32, #tpu.memory_space<vmem>>, vector<1x32x32xf32>
    %12 = vector.shape_cast %11 : vector<1x32x32xf32> to vector<32x32xf32>
    %c0_11 = arith.constant 0 : index
    %c96 = arith.constant 96 : index
    %c0_12 = arith.constant 0 : index
    %13 = vector.load %arg4[%c0_11, %c96, %c0_12] : memref<1x272x32xf32, #tpu.memory_space<vmem>>, vector<1x32x32xf32>
    %14 = vector.shape_cast %13 : vector<1x32x32xf32> to vector<32x32xf32>
    %c0_13 = arith.constant 0 : index
    %c258 = arith.constant 258 : index
    %c0_14 = arith.constant 0 : index
    %15 = vector.load %arg4[%c0_13, %c258, %c0_14] : memref<1x272x32xf32, #tpu.memory_space<vmem>>, vector<1x1x32xf32>
    %16 = vector.shape_cast %15 : vector<1x1x32xf32> to vector<1x32xf32>
    %c0_15 = arith.constant 0 : index
    %c259 = arith.constant 259 : index
    %c0_16 = arith.constant 0 : index
    %17 = vector.load %arg4[%c0_15, %c259, %c0_16] : memref<1x272x32xf32, #tpu.memory_space<vmem>>, vector<1x1x32xf32>
    %18 = vector.shape_cast %17 : vector<1x1x32xf32> to vector<1x32xf32>
    %c0_17 = arith.constant 0 : index
    %c260 = arith.constant 260 : index
    %c0_18 = arith.constant 0 : index
    %19 = vector.load %arg4[%c0_17, %c260, %c0_18] : memref<1x272x32xf32, #tpu.memory_space<vmem>>, vector<1x1x32xf32>
    %20 = vector.shape_cast %19 : vector<1x1x32xf32> to vector<1x32xf32>
    %c0_19 = arith.constant 0 : index
    %c261 = arith.constant 261 : index
    %c0_20 = arith.constant 0 : index
    %21 = vector.load %arg4[%c0_19, %c261, %c0_20] : memref<1x272x32xf32, #tpu.memory_space<vmem>>, vector<1x1x32xf32>
    %22 = vector.shape_cast %21 : vector<1x1x32xf32> to vector<1x32xf32>
    %c0_21 = arith.constant 0 : index
    %c262 = arith.constant 262 : index
    %c0_22 = arith.constant 0 : index
    %23 = vector.load %arg4[%c0_21, %c262, %c0_22] : memref<1x272x32xf32, #tpu.memory_space<vmem>>, vector<1x1x32xf32>
    %24 = vector.shape_cast %23 : vector<1x1x32xf32> to vector<1x32xf32>
    %c0_23 = arith.constant 0 : index
    %c263 = arith.constant 263 : index
    %c0_24 = arith.constant 0 : index
    %25 = vector.load %arg4[%c0_23, %c263, %c0_24] : memref<1x272x32xf32, #tpu.memory_space<vmem>>, vector<1x1x32xf32>
    %26 = vector.shape_cast %25 : vector<1x1x32xf32> to vector<1x32xf32>
    %c0_25 = arith.constant 0 : index
    %c128 = arith.constant 128 : index
    %c0_26 = arith.constant 0 : index
    %27 = vector.load %arg4[%c0_25, %c128, %c0_26] : memref<1x272x32xf32, #tpu.memory_space<vmem>>, vector<1x128x32xf32>
    %28 = vector.shape_cast %27 : vector<1x128x32xf32> to vector<128x32xf32>
    %c0_27 = arith.constant 0 : index
    %c264 = arith.constant 264 : index
    %c0_28 = arith.constant 0 : index
    %29 = vector.load %arg4[%c0_27, %c264, %c0_28] : memref<1x272x32xf32, #tpu.memory_space<vmem>>, vector<1x1x32xf32>
    %30 = vector.shape_cast %29 : vector<1x1x32xf32> to vector<1x32xf32>
    %c0_29 = arith.constant 0 : index
    %c265 = arith.constant 265 : index
    %c0_30 = arith.constant 0 : index
    %31 = vector.load %arg4[%c0_29, %c265, %c0_30] : memref<1x272x32xf32, #tpu.memory_space<vmem>>, vector<1x1x32xf32>
    %32 = vector.shape_cast %31 : vector<1x1x32xf32> to vector<1x32xf32>
    %c0_31 = arith.constant 0 : index
    %c266 = arith.constant 266 : index
    %c0_32 = arith.constant 0 : index
    %33 = vector.load %arg4[%c0_31, %c266, %c0_32] : memref<1x272x32xf32, #tpu.memory_space<vmem>>, vector<1x1x32xf32>
    %34 = vector.shape_cast %33 : vector<1x1x32xf32> to vector<1x32xf32>
    %c0_33 = arith.constant 0 : index
    %c0_34 = arith.constant 0 : index
    %c0_35 = arith.constant 0 : index
    %35 = vector.load %arg5[%c0_33, %c0_34, %c0_35] : memref<1x40x128xf32, #tpu.memory_space<vmem>>, vector<1x32x128xf32>
    %36 = vector.shape_cast %35 : vector<1x32x128xf32> to vector<32x128xf32>
    %c0_36 = arith.constant 0 : index
    %c32_37 = arith.constant 32 : index
    %c0_38 = arith.constant 0 : index
    %37 = vector.load %arg5[%c0_36, %c32_37, %c0_38] : memref<1x40x128xf32, #tpu.memory_space<vmem>>, vector<1x1x128xf32>
    %38 = vector.shape_cast %37 : vector<1x1x128xf32> to vector<1x128xf32>
    %c0_39 = arith.constant 0 : index
    %c0_40 = arith.constant 0 : index
    %39 = vector.load %arg7[%c0_39, %c0_40] : memref<48x32xf32, #tpu.memory_space<vmem>>, vector<48x32xf32>
    %cst = arith.constant dense<0.000000e+00> : vector<48xf32>
    %40 = vector.multi_reduction <add>, %39, %cst [1] : vector<48x32xf32> to vector<48xf32>
    %41 = vector.shape_cast %40 : vector<48xf32> to vector<48x1xf32>
    %cst_41 = arith.constant 3.200000e+01 : f32
    %42 = vector.broadcast %cst_41 : f32 to vector<48x1xf32>
    %43 = arith.divf %41, %42 : vector<48x1xf32>
    %44 = vector.broadcast %43 : vector<48x1xf32> to vector<48x32xf32>
    %45 = arith.subf %39, %44 : vector<48x32xf32>
    %46 = arith.mulf %45, %45 : vector<48x32xf32>
    %cst_42 = arith.constant dense<0.000000e+00> : vector<48xf32>
    %47 = vector.multi_reduction <add>, %46, %cst_42 [1] : vector<48x32xf32> to vector<48xf32>
    %48 = vector.shape_cast %47 : vector<48xf32> to vector<48x1xf32>
    %cst_43 = arith.constant 3.200000e+01 : f32
    %49 = vector.broadcast %cst_43 : f32 to vector<48x1xf32>
    %50 = arith.divf %48, %49 : vector<48x1xf32>
    %51 = vector.broadcast %43 : vector<48x1xf32> to vector<48x32xf32>
    %52 = arith.subf %39, %51 : vector<48x32xf32>
    %cst_44 = arith.constant 9.99999997E-7 : f32
    %53 = vector.broadcast %cst_44 : f32 to vector<48x1xf32>
    %54 = arith.addf %50, %53 : vector<48x1xf32>
    %55 = math.rsqrt %54 : vector<48x1xf32>
    %56 = vector.broadcast %55 : vector<48x1xf32> to vector<48x32xf32>
    %57 = arith.mulf %52, %56 : vector<48x32xf32>
    %58 = vector.broadcast %4 : vector<1x32xf32> to vector<48x32xf32>
    %59 = arith.mulf %57, %58 : vector<48x32xf32>
    %60 = vector.broadcast %6 : vector<1x32xf32> to vector<48x32xf32>
    %61 = arith.addf %59, %60 : vector<48x32xf32>
    %62 = vector.extract_strided_slice %61 {offsets = [0, 0], sizes = [16, 32], strides = [1, 1]} : vector<48x32xf32> to vector<16x32xf32>
    %63 = vector.extract_strided_slice %61 {offsets = [16, 0], sizes = [16, 32], strides = [1, 1]} : vector<48x32xf32> to vector<16x32xf32>
    %64 = vector.extract_strided_slice %61 {offsets = [32, 0], sizes = [16, 32], strides = [1, 1]} : vector<48x32xf32> to vector<16x32xf32>
    %c32_45 = arith.constant 32 : index
    %c0_46 = arith.constant 0 : index
    %65 = vector.load %arg7[%c32_45, %c0_46] : memref<48x32xf32, #tpu.memory_space<vmem>>, vector<16x32xf32>
    %cst_47 = arith.constant dense<0.000000e+00> : vector<16x32xf32>
    %66 = tpu.matmul %62, %8, %cst_47 {dimension_numbers = #tpu.dot_dimension_numbers<[1], [0], [0], [1], [0, 0, 1, 1], [], []>} : vector<16x32xf32>, vector<32x32xf32>, vector<16x32xf32> -> vector<16x32xf32>
    %67 = vector.broadcast %16 : vector<1x32xf32> to vector<16x32xf32>
    %68 = arith.addf %66, %67 : vector<16x32xf32>
    %cst_48 = arith.constant 0.353553385 : f32
    %69 = vector.broadcast %cst_48 : f32 to vector<16x32xf32>
    %70 = arith.mulf %68, %69 : vector<16x32xf32>
    %cst_49 = arith.constant dense<0.000000e+00> : vector<16x32xf32>
    %71 = tpu.matmul %63, %10, %cst_49 {dimension_numbers = #tpu.dot_dimension_numbers<[1], [0], [0], [1], [0, 0, 1, 1], [], []>} : vector<16x32xf32>, vector<32x32xf32>, vector<16x32xf32> -> vector<16x32xf32>
    %72 = vector.broadcast %18 : vector<1x32xf32> to vector<16x32xf32>
    %73 = arith.addf %71, %72 : vector<16x32xf32>
    %cst_50 = arith.constant dense<0.000000e+00> : vector<16x32xf32>
    %74 = tpu.matmul %64, %12, %cst_50 {dimension_numbers = #tpu.dot_dimension_numbers<[1], [0], [0], [1], [0, 0, 1, 1], [], []>} : vector<16x32xf32>, vector<32x32xf32>, vector<16x32xf32> -> vector<16x32xf32>
    %75 = vector.broadcast %20 : vector<1x32xf32> to vector<16x32xf32>
    %76 = arith.addf %74, %75 : vector<16x32xf32>
    %77 = vector.extract_strided_slice %70 {offsets = [0, 0], sizes = [16, 8], strides = [1, 1]} : vector<16x32xf32> to vector<16x8xf32>
    %78 = vector.shape_cast %77 : vector<16x8xf32> to vector<2x8x8xf32>
    %79 = vector.extract_strided_slice %73 {offsets = [0, 0], sizes = [16, 8], strides = [1, 1]} : vector<16x32xf32> to vector<16x8xf32>
    %80 = vector.shape_cast %79 : vector<16x8xf32> to vector<2x8x8xf32>
    %81 = vector.extract_strided_slice %76 {offsets = [0, 0], sizes = [16, 8], strides = [1, 1]} : vector<16x32xf32> to vector<16x8xf32>
    %82 = vector.shape_cast %81 : vector<16x8xf32> to vector<2x8x8xf32>
    "tpu.trace_start"() <{level = 10 : i32, message = "bqd,bkd->bqk"}> : () -> ()
    %cst_51 = arith.constant dense<0.000000e+00> : vector<2x8x8xf32>
    %83 = tpu.matmul %78, %80, %cst_51 {dimension_numbers = #tpu.dot_dimension_numbers<[2], [2], [1], [1], [0, 0, 0, 1, 1, 1], [0], [0]>} : vector<2x8x8xf32>, vector<2x8x8xf32>, vector<2x8x8xf32> -> vector<2x8x8xf32>
    "tpu.trace_stop"() : () -> ()
    %cst_52 = arith.constant dense<0xFF800000> : vector<2x8xf32>
    %84 = vector.multi_reduction <maximumf>, %83, %cst_52 [2] : vector<2x8x8xf32> to vector<2x8xf32>
    %85 = vector.shape_cast %84 : vector<2x8xf32> to vector<2x8x1xf32>
    %86 = vector.broadcast %85 : vector<2x8x1xf32> to vector<2x8x8xf32>
    %87 = arith.subf %83, %86 : vector<2x8x8xf32>
    %88 = math.exp %87 : vector<2x8x8xf32>
    %cst_53 = arith.constant dense<0.000000e+00> : vector<2x8xf32>
    %89 = vector.multi_reduction <add>, %88, %cst_53 [2] : vector<2x8x8xf32> to vector<2x8xf32>
    %90 = vector.shape_cast %89 : vector<2x8xf32> to vector<2x8x1xf32>
    "tpu.trace_start"() <{level = 10 : i32, message = "bqk,bkd->bqd"}> : () -> ()
    %cst_54 = arith.constant dense<0.000000e+00> : vector<2x8x8xf32>
    %91 = tpu.matmul %88, %82, %cst_54 {dimension_numbers = #tpu.dot_dimension_numbers<[2], [1], [1], [2], [0, 0, 0, 1, 1, 2], [0], [0]>} : vector<2x8x8xf32>, vector<2x8x8xf32>, vector<2x8x8xf32> -> vector<2x8x8xf32>
    "tpu.trace_stop"() : () -> ()
    %92 = tpu.reciprocal %90 {approx = true} : vector<2x8x1xf32> -> vector<2x8x1xf32>
    %93 = vector.broadcast %92 : vector<2x8x1xf32> to vector<2x8x8xf32>
    %94 = arith.mulf %91, %93 : vector<2x8x8xf32>
    %95 = vector.shape_cast %94 : vector<2x8x8xf32> to vector<16x8xf32>
    %96 = vector.extract_strided_slice %70 {offsets = [0, 8], sizes = [16, 8], strides = [1, 1]} : vector<16x32xf32> to vector<16x8xf32>
    %97 = vector.shape_cast %96 : vector<16x8xf32> to vector<2x8x8xf32>
    %98 = vector.extract_strided_slice %73 {offsets = [0, 8], sizes = [16, 8], strides = [1, 1]} : vector<16x32xf32> to vector<16x8xf32>
    %99 = vector.shape_cast %98 : vector<16x8xf32> to vector<2x8x8xf32>
    %100 = vector.extract_strided_slice %76 {offsets = [0, 8], sizes = [16, 8], strides = [1, 1]} : vector<16x32xf32> to vector<16x8xf32>
    %101 = vector.shape_cast %100 : vector<16x8xf32> to vector<2x8x8xf32>
    "tpu.trace_start"() <{level = 10 : i32, message = "bqd,bkd->bqk"}> : () -> ()
    %cst_55 = arith.constant dense<0.000000e+00> : vector<2x8x8xf32>
    %102 = tpu.matmul %97, %99, %cst_55 {dimension_numbers = #tpu.dot_dimension_numbers<[2], [2], [1], [1], [0, 0, 0, 1, 1, 1], [0], [0]>} : vector<2x8x8xf32>, vector<2x8x8xf32>, vector<2x8x8xf32> -> vector<2x8x8xf32>
    "tpu.trace_stop"() : () -> ()
    %cst_56 = arith.constant dense<0xFF800000> : vector<2x8xf32>
    %103 = vector.multi_reduction <maximumf>, %102, %cst_56 [2] : vector<2x8x8xf32> to vector<2x8xf32>
    %104 = vector.shape_cast %103 : vector<2x8xf32> to vector<2x8x1xf32>
    %105 = vector.broadcast %104 : vector<2x8x1xf32> to vector<2x8x8xf32>
    %106 = arith.subf %102, %105 : vector<2x8x8xf32>
    %107 = math.exp %106 : vector<2x8x8xf32>
    %cst_57 = arith.constant dense<0.000000e+00> : vector<2x8xf32>
    %108 = vector.multi_reduction <add>, %107, %cst_57 [2] : vector<2x8x8xf32> to vector<2x8xf32>
    %109 = vector.shape_cast %108 : vector<2x8xf32> to vector<2x8x1xf32>
    "tpu.trace_start"() <{level = 10 : i32, message = "bqk,bkd->bqd"}> : () -> ()
    %cst_58 = arith.constant dense<0.000000e+00> : vector<2x8x8xf32>
    %110 = tpu.matmul %107, %101, %cst_58 {dimension_numbers = #tpu.dot_dimension_numbers<[2], [1], [1], [2], [0, 0, 0, 1, 1, 2], [0], [0]>} : vector<2x8x8xf32>, vector<2x8x8xf32>, vector<2x8x8xf32> -> vector<2x8x8xf32>
    "tpu.trace_stop"() : () -> ()
    %111 = tpu.reciprocal %109 {approx = true} : vector<2x8x1xf32> -> vector<2x8x1xf32>
    %112 = vector.broadcast %111 : vector<2x8x1xf32> to vector<2x8x8xf32>
    %113 = arith.mulf %110, %112 : vector<2x8x8xf32>
    %114 = vector.shape_cast %113 : vector<2x8x8xf32> to vector<16x8xf32>
    %115 = vector.extract_strided_slice %70 {offsets = [0, 16], sizes = [16, 8], strides = [1, 1]} : vector<16x32xf32> to vector<16x8xf32>
    %116 = vector.shape_cast %115 : vector<16x8xf32> to vector<2x8x8xf32>
    %117 = vector.extract_strided_slice %73 {offsets = [0, 16], sizes = [16, 8], strides = [1, 1]} : vector<16x32xf32> to vector<16x8xf32>
    %118 = vector.shape_cast %117 : vector<16x8xf32> to vector<2x8x8xf32>
    %119 = vector.extract_strided_slice %76 {offsets = [0, 16], sizes = [16, 8], strides = [1, 1]} : vector<16x32xf32> to vector<16x8xf32>
    %120 = vector.shape_cast %119 : vector<16x8xf32> to vector<2x8x8xf32>
    "tpu.trace_start"() <{level = 10 : i32, message = "bqd,bkd->bqk"}> : () -> ()
    %cst_59 = arith.constant dense<0.000000e+00> : vector<2x8x8xf32>
    %121 = tpu.matmul %116, %118, %cst_59 {dimension_numbers = #tpu.dot_dimension_numbers<[2], [2], [1], [1], [0, 0, 0, 1, 1, 1], [0], [0]>} : vector<2x8x8xf32>, vector<2x8x8xf32>, vector<2x8x8xf32> -> vector<2x8x8xf32>
    "tpu.trace_stop"() : () -> ()
    %cst_60 = arith.constant dense<0xFF800000> : vector<2x8xf32>
    %122 = vector.multi_reduction <maximumf>, %121, %cst_60 [2] : vector<2x8x8xf32> to vector<2x8xf32>
    %123 = vector.shape_cast %122 : vector<2x8xf32> to vector<2x8x1xf32>
    %124 = vector.broadcast %123 : vector<2x8x1xf32> to vector<2x8x8xf32>
    %125 = arith.subf %121, %124 : vector<2x8x8xf32>
    %126 = math.exp %125 : vector<2x8x8xf32>
    %cst_61 = arith.constant dense<0.000000e+00> : vector<2x8xf32>
    %127 = vector.multi_reduction <add>, %126, %cst_61 [2] : vector<2x8x8xf32> to vector<2x8xf32>
    %128 = vector.shape_cast %127 : vector<2x8xf32> to vector<2x8x1xf32>
    "tpu.trace_start"() <{level = 10 : i32, message = "bqk,bkd->bqd"}> : () -> ()
    %cst_62 = arith.constant dense<0.000000e+00> : vector<2x8x8xf32>
    %129 = tpu.matmul %126, %120, %cst_62 {dimension_numbers = #tpu.dot_dimension_numbers<[2], [1], [1], [2], [0, 0, 0, 1, 1, 2], [0], [0]>} : vector<2x8x8xf32>, vector<2x8x8xf32>, vector<2x8x8xf32> -> vector<2x8x8xf32>
    "tpu.trace_stop"() : () -> ()
    %130 = tpu.reciprocal %128 {approx = true} : vector<2x8x1xf32> -> vector<2x8x1xf32>
    %131 = vector.broadcast %130 : vector<2x8x1xf32> to vector<2x8x8xf32>
    %132 = arith.mulf %129, %131 : vector<2x8x8xf32>
    %133 = vector.shape_cast %132 : vector<2x8x8xf32> to vector<16x8xf32>
    %134 = vector.extract_strided_slice %70 {offsets = [0, 24], sizes = [16, 8], strides = [1, 1]} : vector<16x32xf32> to vector<16x8xf32>
    %135 = vector.shape_cast %134 : vector<16x8xf32> to vector<2x8x8xf32>
    %136 = vector.extract_strided_slice %73 {offsets = [0, 24], sizes = [16, 8], strides = [1, 1]} : vector<16x32xf32> to vector<16x8xf32>
    %137 = vector.shape_cast %136 : vector<16x8xf32> to vector<2x8x8xf32>
    %138 = vector.extract_strided_slice %76 {offsets = [0, 24], sizes = [16, 8], strides = [1, 1]} : vector<16x32xf32> to vector<16x8xf32>
    %139 = vector.shape_cast %138 : vector<16x8xf32> to vector<2x8x8xf32>
    "tpu.trace_start"() <{level = 10 : i32, message = "bqd,bkd->bqk"}> : () -> ()
    %cst_63 = arith.constant dense<0.000000e+00> : vector<2x8x8xf32>
    %140 = tpu.matmul %135, %137, %cst_63 {dimension_numbers = #tpu.dot_dimension_numbers<[2], [2], [1], [1], [0, 0, 0, 1, 1, 1], [0], [0]>} : vector<2x8x8xf32>, vector<2x8x8xf32>, vector<2x8x8xf32> -> vector<2x8x8xf32>
    "tpu.trace_stop"() : () -> ()
    %cst_64 = arith.constant dense<0xFF800000> : vector<2x8xf32>
    %141 = vector.multi_reduction <maximumf>, %140, %cst_64 [2] : vector<2x8x8xf32> to vector<2x8xf32>
    %142 = vector.shape_cast %141 : vector<2x8xf32> to vector<2x8x1xf32>
    %143 = vector.broadcast %142 : vector<2x8x1xf32> to vector<2x8x8xf32>
    %144 = arith.subf %140, %143 : vector<2x8x8xf32>
    %145 = math.exp %144 : vector<2x8x8xf32>
    %cst_65 = arith.constant dense<0.000000e+00> : vector<2x8xf32>
    %146 = vector.multi_reduction <add>, %145, %cst_65 [2] : vector<2x8x8xf32> to vector<2x8xf32>
    %147 = vector.shape_cast %146 : vector<2x8xf32> to vector<2x8x1xf32>
    "tpu.trace_start"() <{level = 10 : i32, message = "bqk,bkd->bqd"}> : () -> ()
    %cst_66 = arith.constant dense<0.000000e+00> : vector<2x8x8xf32>
    %148 = tpu.matmul %145, %139, %cst_66 {dimension_numbers = #tpu.dot_dimension_numbers<[2], [1], [1], [2], [0, 0, 0, 1, 1, 2], [0], [0]>} : vector<2x8x8xf32>, vector<2x8x8xf32>, vector<2x8x8xf32> -> vector<2x8x8xf32>
    "tpu.trace_stop"() : () -> ()
    %149 = tpu.reciprocal %147 {approx = true} : vector<2x8x1xf32> -> vector<2x8x1xf32>
    %150 = vector.broadcast %149 : vector<2x8x1xf32> to vector<2x8x8xf32>
    %151 = arith.mulf %148, %150 : vector<2x8x8xf32>
    %152 = vector.shape_cast %151 : vector<2x8x8xf32> to vector<16x8xf32>
    %153 = tpu.concatenate %95, %114, %133, %152 in 1 : vector<16x8xf32>, vector<16x8xf32>, vector<16x8xf32>, vector<16x8xf32> -> vector<16x32xf32>
    %cst_67 = arith.constant dense<0.000000e+00> : vector<16x32xf32>
    %154 = tpu.matmul %153, %14, %cst_67 {dimension_numbers = #tpu.dot_dimension_numbers<[1], [0], [0], [1], [0, 0, 1, 1], [], []>} : vector<16x32xf32>, vector<32x32xf32>, vector<16x32xf32> -> vector<16x32xf32>
    %155 = vector.broadcast %22 : vector<1x32xf32> to vector<16x32xf32>
    %156 = arith.addf %154, %155 : vector<16x32xf32>
    %157 = arith.addf %65, %156 : vector<16x32xf32>
    %cst_68 = arith.constant dense<0.000000e+00> : vector<16xf32>
    %158 = vector.multi_reduction <add>, %157, %cst_68 [1] : vector<16x32xf32> to vector<16xf32>
    %159 = vector.shape_cast %158 : vector<16xf32> to vector<16x1xf32>
    %cst_69 = arith.constant 3.200000e+01 : f32
    %160 = vector.broadcast %cst_69 : f32 to vector<16x1xf32>
    %161 = arith.divf %159, %160 : vector<16x1xf32>
    %162 = vector.broadcast %161 : vector<16x1xf32> to vector<16x32xf32>
    %163 = arith.subf %157, %162 : vector<16x32xf32>
    %164 = arith.mulf %163, %163 : vector<16x32xf32>
    %cst_70 = arith.constant dense<0.000000e+00> : vector<16xf32>
    %165 = vector.multi_reduction <add>, %164, %cst_70 [1] : vector<16x32xf32> to vector<16xf32>
    %166 = vector.shape_cast %165 : vector<16xf32> to vector<16x1xf32>
    %cst_71 = arith.constant 3.200000e+01 : f32
    %167 = vector.broadcast %cst_71 : f32 to vector<16x1xf32>
    %168 = arith.divf %166, %167 : vector<16x1xf32>
    %169 = vector.broadcast %161 : vector<16x1xf32> to vector<16x32xf32>
    %170 = arith.subf %157, %169 : vector<16x32xf32>
    %cst_72 = arith.constant 9.99999997E-7 : f32
    %171 = vector.broadcast %cst_72 : f32 to vector<16x1xf32>
    %172 = arith.addf %168, %171 : vector<16x1xf32>
    %173 = math.rsqrt %172 : vector<16x1xf32>
    %174 = vector.broadcast %173 : vector<16x1xf32> to vector<16x32xf32>
    %175 = arith.mulf %170, %174 : vector<16x32xf32>
    %176 = vector.broadcast %24 : vector<1x32xf32> to vector<16x32xf32>
    %177 = arith.mulf %175, %176 : vector<16x32xf32>
    %178 = vector.broadcast %26 : vector<1x32xf32> to vector<16x32xf32>
    %179 = arith.addf %177, %178 : vector<16x32xf32>
    %cst_73 = arith.constant dense<0.000000e+00> : vector<16x128xf32>
    %180 = tpu.matmul %179, %36, %cst_73 {dimension_numbers = #tpu.dot_dimension_numbers<[1], [0], [0], [1], [0, 0, 1, 1], [], []>} : vector<16x32xf32>, vector<32x128xf32>, vector<16x128xf32> -> vector<16x128xf32>
    %181 = vector.broadcast %38 : vector<1x128xf32> to vector<16x128xf32>
    %182 = arith.addf %180, %181 : vector<16x128xf32>
    %cst_74 = arith.constant 5.000000e-01 : f32
    %183 = vector.broadcast %cst_74 : f32 to vector<16x128xf32>
    %184 = arith.mulf %183, %182 : vector<16x128xf32>
    %cst_75 = arith.constant 0.707106769 : f32
    %185 = vector.broadcast %cst_75 : f32 to vector<16x128xf32>
    %186 = arith.mulf %182, %185 : vector<16x128xf32>
    %187 = math.absf %186 : vector<16x128xf32>
    %cst_76 = arith.constant 0.327591091 : f32
    %188 = vector.broadcast %cst_76 : f32 to vector<16x128xf32>
    %189 = arith.mulf %188, %187 : vector<16x128xf32>
    %cst_77 = arith.constant 1.000000e+00 : f32
    %190 = vector.broadcast %cst_77 : f32 to vector<16x128xf32>
    %191 = arith.addf %190, %189 : vector<16x128xf32>
    %cst_78 = arith.constant 1.000000e+00 : f32
    %192 = vector.broadcast %cst_78 : f32 to vector<16x128xf32>
    %193 = arith.divf %192, %191 : vector<16x128xf32>
    %cst_79 = arith.constant 1.06140542 : f32
    %194 = vector.broadcast %cst_79 : f32 to vector<16x128xf32>
    %195 = arith.mulf %194, %193 : vector<16x128xf32>
    %cst_80 = arith.constant -1.45315206 : f32
    %196 = vector.broadcast %cst_80 : f32 to vector<16x128xf32>
    %197 = arith.addf %195, %196 : vector<16x128xf32>
    %198 = arith.mulf %197, %193 : vector<16x128xf32>
    %cst_81 = arith.constant 1.42141378 : f32
    %199 = vector.broadcast %cst_81 : f32 to vector<16x128xf32>
    %200 = arith.addf %198, %199 : vector<16x128xf32>
    %201 = arith.mulf %200, %193 : vector<16x128xf32>
    %cst_82 = arith.constant -0.284496725 : f32
    %202 = vector.broadcast %cst_82 : f32 to vector<16x128xf32>
    %203 = arith.addf %201, %202 : vector<16x128xf32>
    %204 = arith.mulf %203, %193 : vector<16x128xf32>
    %cst_83 = arith.constant 0.254829586 : f32
    %205 = vector.broadcast %cst_83 : f32 to vector<16x128xf32>
    %206 = arith.addf %204, %205 : vector<16x128xf32>
    %207 = arith.mulf %206, %193 : vector<16x128xf32>
    %cst_84 = arith.constant 0.000000e+00 : f32
    %208 = vector.broadcast %cst_84 : f32 to vector<16x128xf32>
    %209 = arith.subf %208, %187 : vector<16x128xf32>
    %210 = arith.mulf %209, %187 : vector<16x128xf32>
    %211 = math.exp %210 : vector<16x128xf32>
    %212 = arith.mulf %207, %211 : vector<16x128xf32>
    %cst_85 = arith.constant 1.000000e+00 : f32
    %213 = vector.broadcast %cst_85 : f32 to vector<16x128xf32>
    %214 = arith.subf %213, %212 : vector<16x128xf32>
    %cst_86 = arith.constant 0.000000e+00 : f32
    %215 = vector.broadcast %cst_86 : f32 to vector<16x128xf32>
    %216 = arith.cmpf oge, %186, %215 : vector<16x128xf32>
    %cst_87 = arith.constant 0.000000e+00 : f32
    %217 = vector.broadcast %cst_87 : f32 to vector<16x128xf32>
    %218 = arith.subf %217, %214 : vector<16x128xf32>
    %219 = arith.select %216, %214, %218 : vector<16x128xi1>, vector<16x128xf32>
    %cst_88 = arith.constant 1.000000e+00 : f32
    %220 = vector.broadcast %cst_88 : f32 to vector<16x128xf32>
    %221 = arith.addf %220, %219 : vector<16x128xf32>
    %222 = arith.mulf %184, %221 : vector<16x128xf32>
    %cst_89 = arith.constant dense<0.000000e+00> : vector<16x32xf32>
    %223 = tpu.matmul %222, %28, %cst_89 {dimension_numbers = #tpu.dot_dimension_numbers<[1], [0], [0], [1], [0, 0, 1, 1], [], []>} : vector<16x128xf32>, vector<128x32xf32>, vector<16x32xf32> -> vector<16x32xf32>
    %224 = arith.addf %157, %223 : vector<16x32xf32>
    %225 = vector.broadcast %30 : vector<1x32xf32> to vector<16x32xf32>
    %226 = arith.addf %224, %225 : vector<16x32xf32>
    %cst_90 = arith.constant dense<0.000000e+00> : vector<16xf32>
    %227 = vector.multi_reduction <add>, %226, %cst_90 [1] : vector<16x32xf32> to vector<16xf32>
    %228 = vector.shape_cast %227 : vector<16xf32> to vector<16x1xf32>
    %cst_91 = arith.constant 3.200000e+01 : f32
    %229 = vector.broadcast %cst_91 : f32 to vector<16x1xf32>
    %230 = arith.divf %228, %229 : vector<16x1xf32>
    %231 = vector.broadcast %230 : vector<16x1xf32> to vector<16x32xf32>
    %232 = arith.subf %226, %231 : vector<16x32xf32>
    %233 = arith.mulf %232, %232 : vector<16x32xf32>
    %cst_92 = arith.constant dense<0.000000e+00> : vector<16xf32>
    %234 = vector.multi_reduction <add>, %233, %cst_92 [1] : vector<16x32xf32> to vector<16xf32>
    %235 = vector.shape_cast %234 : vector<16xf32> to vector<16x1xf32>
    %cst_93 = arith.constant 3.200000e+01 : f32
    %236 = vector.broadcast %cst_93 : f32 to vector<16x1xf32>
    %237 = arith.divf %235, %236 : vector<16x1xf32>
    %238 = vector.broadcast %230 : vector<16x1xf32> to vector<16x32xf32>
    %239 = arith.subf %226, %238 : vector<16x32xf32>
    %cst_94 = arith.constant 9.99999997E-7 : f32
    %240 = vector.broadcast %cst_94 : f32 to vector<16x1xf32>
    %241 = arith.addf %237, %240 : vector<16x1xf32>
    %242 = math.rsqrt %241 : vector<16x1xf32>
    %243 = vector.broadcast %242 : vector<16x1xf32> to vector<16x32xf32>
    %244 = arith.mulf %239, %243 : vector<16x32xf32>
    %245 = vector.broadcast %32 : vector<1x32xf32> to vector<16x32xf32>
    %246 = arith.mulf %244, %245 : vector<16x32xf32>
    %247 = vector.broadcast %34 : vector<1x32xf32> to vector<16x32xf32>
    %248 = arith.addf %246, %247 : vector<16x32xf32>
    %c1_i32 = arith.constant 1 : i32
    %249 = arith.cmpi eq, %arg1, %c1_i32 : i32
    %250 = arith.extui %249 : i1 to i32
    %c0_i32_95 = arith.constant 0 : i32
    %251 = arith.cmpi ne, %250, %c0_i32_95 : i32
    scf.if %251 {
      %c0_98 = arith.constant 0 : index
      %c0_99 = arith.constant 0 : index
      %255 = vector.load %arg6[%c0_98, %c0_99] : memref<16x32xf32, #tpu.memory_space<vmem>>, vector<16x32xf32>
      tpu.vector_store %arg6[%c0_98, %c0_99], %248 {strides = array<i32>} : memref<16x32xf32, #tpu.memory_space<vmem>>, vector<16x32xf32>,
    } else {
    }
    %c1_i32_96 = arith.constant 1 : i32
    %252 = arith.cmpi ne, %arg1, %c1_i32_96 : i32
    %253 = arith.extui %252 : i1 to i32
    %c0_i32_97 = arith.constant 0 : i32
    %254 = arith.cmpi ne, %253, %c0_i32_97 : i32
    scf.if %254 {
      %c0_98 = arith.constant 0 : index
      %c0_99 = arith.constant 0 : index
      %255 = vector.load %arg7[%c0_98, %c0_99] : memref<48x32xf32, #tpu.memory_space<vmem>>, vector<16x32xf32>
      tpu.vector_store %arg7[%c0_98, %c0_99], %62 {strides = array<i32>} : memref<48x32xf32, #tpu.memory_space<vmem>>, vector<16x32xf32>,
      %c16 = arith.constant 16 : index
      %c0_100 = arith.constant 0 : index
      %256 = vector.load %arg7[%c16, %c0_100] : memref<48x32xf32, #tpu.memory_space<vmem>>, vector<16x32xf32>
      tpu.vector_store %arg7[%c16, %c0_100], %226 {strides = array<i32>} : memref<48x32xf32, #tpu.memory_space<vmem>>, vector<16x32xf32>,
      %c32_101 = arith.constant 32 : index
      %c0_102 = arith.constant 0 : index
      %257 = vector.load %arg7[%c32_101, %c0_102] : memref<48x32xf32, #tpu.memory_space<vmem>>, vector<16x32xf32>
      tpu.vector_store %arg7[%c32_101, %c0_102], %248 {strides = array<i32>} : memref<48x32xf32, #tpu.memory_space<vmem>>, vector<16x32xf32>,
    } else {
    }
    return
  }
  func.func @transform_0(%arg0: i32, %arg1: i32) -> (i32, i32) {
    %c0_i32 = arith.constant 0 : i32
    %c0_i32_0 = arith.constant 0 : i32
    return %arg0, %c0_i32 : i32, i32
  }
  func.func @transform_1(%arg0: i32, %arg1: i32) -> (i32, i32) {
    %c0_i32 = arith.constant 0 : i32
    %c0_i32_0 = arith.constant 0 : i32
    return %arg0, %c0_i32 : i32, i32
  }
  func.func @transform_2(%arg0: i32, %arg1: i32) -> (i32, i32, i32) {
    %c0_i32 = arith.constant 0 : i32
    %c0_i32_0 = arith.constant 0 : i32
    %c0_i32_1 = arith.constant 0 : i32
    return %arg1, %c0_i32, %c0_i32_0 : i32, i32, i32
  }
  func.func @transform_3(%arg0: i32, %arg1: i32) -> (i32, i32, i32) {
    %c0_i32 = arith.constant 0 : i32
    %c0_i32_0 = arith.constant 0 : i32
    %c0_i32_1 = arith.constant 0 : i32
    return %arg1, %c0_i32, %c0_i32_0 : i32, i32, i32
  }
  func.func @transform_4(%arg0: i32, %arg1: i32) -> (i32, i32) {
    %c0_i32 = arith.constant 0 : i32
    %c0_i32_0 = arith.constant 0 : i32
    return %arg0, %c0_i32 : i32, i32
  }
}

</mosaic_0001>

<llo_original>
// kernel: tpu_custom_call.1
$region0: #{tpu_custom_call.1}
  #allocation0 [shape = 'u32[]', space=smem, size = 0x4, offset = 0x4, fixed_abs, tag = 'smem constant byte address 0x4 - core index']
  #allocation1 [shape = 'u32[144,128]{1,0:T(1,128)}', space=vmem, size = 0x12000, scoped, tag = 'internal scratch']
  #allocation2 [shape = 'f32[48,32]{1,0:T(8,128)}', space=vmem, size = 0x6000, scoped, tag = 'scratch operand']
  %s0 = inlined_call_operand.vmem [shape: f32[16,32], index: 0, kind: input, shape index: {}]
  %s1 = inlined_call_operand.vmem [shape: f32[16,32], index: 1, kind: input, shape index: {}]
  %s2 = inlined_call_operand.vmem [shape: f32[2,272,32], index: 2, kind: input, shape index: {}]
  %s3 = inlined_call_operand.vmem [shape: f32[2,40,128], index: 3, kind: input, shape index: {}]
  %s4 = inlined_call_operand.hbm [shape: f32[16,32], index: 4, kind: output, shape index: {}]
  %s5 = sld [smem:[#allocation0]]
  $region61: #{tpu_custom_call.1} parent=0
    _
  %s7 = ssub.s32 1, %s5
  %s8 = scalar_select 0, %s7, %s5
  $region1: #{tpu_custom_call.1} parent=0
    #allocation3 [shape = 'u8[8192]{0}', space=vmem, size = 0x2000, scoped, tag = 'output window, operand 0, single buffered']
    #allocation4 [shape = 's32[2]{0}', space=sflag, size = 0x8, scoped, tag = 'scoped memory for tpu_custom_call.1']
    %9 = vsyncpa [#allocation4], 0
    loop: start=0, step=1, limit=4
    $region2: #{tpu_custom_call.1} parent=1 // loop_pre_header
      _
    $region3: #{tpu_custom_call.1} parent=1 // loop_header
      %s11 = sphi 0, %s15
      %p12 = scmp.ge.s32.totalorder %s11, 4
      %s18 = sphi 0, %s30
      %s19 = sphi 0, %s26
      %s20 = sphi 0, %s18
      %s21 = sphi 0, %s19
      %s22 = sphi 0, %s20
      %s23 = sphi 0, %s21
      %s33 = sphi 0, %s35
      %s36 = sphi 0, %s33
      %s37 = sphi 0, %s36
      %s53 = sphi 0, %s37
      %s59 = sphi 0, %s61
      %s62 = sphi 0, %s59
      %s63 = sphi 0, %s62
      %s79 = sphi 0, %s63
      %s85 = sphi 0, %s87
      %s88 = sphi 0, %s85
      %s89 = sphi 0, %s88
      %s105 = sphi 0, %s89
      %s111 = sphi 0, %s113
      %s114 = sphi 0, %s111
      %s115 = sphi 0, %s114
      %s131 = sphi 0, %s115
      %s137 = sphi 0, %s139
      %s140 = sphi 0, %s137
      %s141 = sphi 0, %s140
      %s157 = sphi 0, %s141
    $region4: #{tpu_custom_call.1} parent=1 // loop_header_branch
      %14 = sbr.rel (%p12) target = $region8
    $region5: #{tpu_custom_call.1} parent=1 // loop_body
      %s16 = ssub.s32 %s11, 1
      %s17 = ssub.s32 %s11, 2
      %s24 = sadd.s32 1, %s19
      %p25 = scmp.ge.s32.totalorder %s24, 2
      %s26 = scalar_select %p25, 0, %s24
      %s27 = sadd.s32 1, %s18
      %s28 = scalar_select %p25, %s27, %s18
      %p29 = scmp.ge.s32.totalorder %s28, 1
      %s30 = scalar_select %p29, 0, %s28
      %s31 = ssub.s32 %s18, %s30
      %p32 = scmp.eq.s32.totalorder %s31, 0
      %s34 = sadd.s32 %s33, 1
      %s35 = scalar_select %p32, %s33, %s34
      %p38 = pneg %p32
      %p39 = scmp.eq.s32.totalorder %s11, 1
      %p40 = por %p38, %p39
      %p41 = scmp.ne.s32.totalorder %s33, %s36
      %p42 = scmp.eq.s32.totalorder %s11, 0
      %p43 = por %p41, %p42
      %p44 = scmp.ne.s32.totalorder %s33, %s36
      %p45 = scmp.eq.s32.totalorder %s16, 1
      %p46 = por %p44, %p45
      %p47 = scmp.ne.s32.totalorder %s36, %s37
      %p48 = scmp.eq.s32.totalorder %s16, 0
      %p49 = por %p47, %p48
      %p50 = scmp.ne.s32.totalorder %s36, %s37
      %p51 = scmp.eq.s32.totalorder %s17, 1
      %p52 = por %p50, %p51
      %p54 = scmp.ne.s32.totalorder %s37, %s53
      %p55 = scmp.eq.s32.totalorder %s17, 0
      %p56 = por %p54, %p55
      %s57 = ssub.s32 %s18, %s30
      %p58 = scmp.eq.s32.totalorder %s57, 0
      %s60 = sadd.s32 %s59, 1
      %s61 = scalar_select %p58, %s59, %s60
      %p64 = pneg %p58
      %p65 = scmp.eq.s32.totalorder %s11, 1
      %p66 = por %p64, %p65
      %p67 = scmp.ne.s32.totalorder %s59, %s62
      %p68 = scmp.eq.s32.totalorder %s11, 0
      %p69 = por %p67, %p68
      %p70 = scmp.ne.s32.totalorder %s59, %s62
      %p71 = scmp.eq.s32.totalorder %s16, 1
      %p72 = por %p70, %p71
      %p73 = scmp.ne.s32.totalorder %s62, %s63
      %p74 = scmp.eq.s32.totalorder %s16, 0
      %p75 = por %p73, %p74
      %p76 = scmp.ne.s32.totalorder %s62, %s63
      %p77 = scmp.eq.s32.totalorder %s17, 1
      %p78 = por %p76, %p77
      %p80 = scmp.ne.s32.totalorder %s63, %s79
      %p81 = scmp.eq.s32.totalorder %s17, 0
      %p82 = por %p80, %p81
      %s83 = ssub.s32 %s19, %s26
      %p84 = scmp.eq.s32.totalorder %s83, 0
      %s86 = sadd.s32 %s85, 1
      %s87 = scalar_select %p84, %s85, %s86
      %p90 = pneg %p84
      %p91 = scmp.eq.s32.totalorder %s11, 1
      %p92 = por %p90, %p91
      %p93 = scmp.ne.s32.totalorder %s85, %s88
      %p94 = scmp.eq.s32.totalorder %s11, 0
      %p95 = por %p93, %p94
      %p96 = scmp.ne.s32.totalorder %s85, %s88
      %p97 = scmp.eq.s32.totalorder %s16, 1
      %p98 = por %p96, %p97
      %p99 = scmp.ne.s32.totalorder %s88, %s89
      %p100 = scmp.eq.s32.totalorder %s16, 0
      %p101 = por %p99, %p100
      %p102 = scmp.ne.s32.totalorder %s88, %s89
      %p103 = scmp.eq.s32.totalorder %s17, 1
      %p104 = por %p102, %p103
      %p106 = scmp.ne.s32.totalorder %s89, %s105
      %p107 = scmp.eq.s32.totalorder %s17, 0
      %p108 = por %p106, %p107
      %s109 = ssub.s32 %s19, %s26
      %p110 = scmp.eq.s32.totalorder %s109, 0
      %s112 = sadd.s32 %s111, 1
      %s113 = scalar_select %p110, %s111, %s112
      %p116 = pneg %p110
      %p117 = scmp.eq.s32.totalorder %s11, 1
      %p118 = por %p116, %p117
      %p119 = scmp.ne.s32.totalorder %s111, %s114
      %p120 = scmp.eq.s32.totalorder %s11, 0
      %p121 = por %p119, %p120
      %p122 = scmp.ne.s32.totalorder %s111, %s114
      %p123 = scmp.eq.s32.totalorder %s16, 1
      %p124 = por %p122, %p123
      %p125 = scmp.ne.s32.totalorder %s114, %s115
      %p126 = scmp.eq.s32.totalorder %s16, 0
      %p127 = por %p125, %p126
      %p128 = scmp.ne.s32.totalorder %s114, %s115
      %p129 = scmp.eq.s32.totalorder %s17, 1
      %p130 = por %p128, %p129
      %p132 = scmp.ne.s32.totalorder %s115, %s131
      %p133 = scmp.eq.s32.totalorder %s17, 0
      %p134 = por %p132, %p133
      %s135 = ssub.s32 %s18, %s30
      %p136 = scmp.eq.s32.totalorder %s135, 0
      %s138 = sadd.s32 %s137, 1
      %s139 = scalar_select %p136, %s137, %s138
      %p142 = pneg %p136
      %p143 = scmp.eq.s32.totalorder %s11, 1
      %p144 = por %p142, %p143
      %p145 = scmp.ne.s32.totalorder %s137, %s140
      %p146 = scmp.eq.s32.totalorder %s11, 0
      %p147 = por %p145, %p146
      %p148 = scmp.ne.s32.totalorder %s137, %s140
      %p149 = scmp.eq.s32.totalorder %s16, 1
      %p150 = por %p148, %p149
      %p151 = scmp.ne.s32.totalorder %s140, %s141
      %p152 = scmp.eq.s32.totalorder %s16, 0
      %p153 = por %p151, %p152
      %p154 = scmp.ne.s32.totalorder %s140, %s141
      %p155 = scmp.eq.s32.totalorder %s17, 1
      %p156 = por %p154, %p155
      %p158 = scmp.ne.s32.totalorder %s141, %s157
      %p159 = scmp.eq.s32.totalorder %s17, 0
      %p160 = por %p158, %p159
      %p161 = scmp.le.s32.totalorder 1, %s11
      %p162 = scmp.lt.s32.totalorder %s11, 3
      %p163 = pnand %p161, %p162
      %p164 = pneg %p163
      // Predicated region
      $region9: #{tpu_custom_call.1} parent=5 // pred_check
        _
      $region10: #{tpu_custom_call.1} parent=5 // pred_check_branch
        %166 = sbr.rel (%p163) target = $region12
      $region11: #{tpu_custom_call.1} parent=5 // pred_region
        %s167 = ssub.s32 %s11, 1
        // Predicated region
        $region13: #{tpu_custom_call.1} parent=11 // pred_check
          %p168 = pneg %p49
        $region14: #{tpu_custom_call.1} parent=11 // pred_check_branch
          %170 = sbr.rel (%p168) target = $region16
        $region15: #{tpu_custom_call.1} parent=11 // pred_region
          %s171 = smul.u32 2, %s20
          %p172 = scmp.lt.s32.totalorder %s171, 1
          %s173 = scalar_select %p172, %s171, 1
          %s174 = smul.addr %s173, 8
          %s175 = scalar_lea.vmem %s0, %s174
          %s176 = smul.u32 2, %s20
        $region16: #{tpu_custom_call.1} parent=11 // pred_fallthru
          _
        // Predicated region
        $region17: #{tpu_custom_call.1} parent=11 // pred_check
          %p177 = pneg %p75
        $region18: #{tpu_custom_call.1} parent=11 // pred_check_branch
          %179 = sbr.rel (%p177) target = $region20
        $region19: #{tpu_custom_call.1} parent=11 // pred_region
          %s180 = smul.u32 2, %s20
          %p181 = scmp.lt.s32.totalorder %s180, 1
          %s182 = scalar_select %p181, %s180, 1
          %s183 = smul.addr %s182, 8
          %s184 = scalar_lea.vmem %s1, %s183
          %s185 = smul.u32 2, %s20
        $region20: #{tpu_custom_call.1} parent=11 // pred_fallthru
          _
      $region12: #{tpu_custom_call.1} parent=5 // pred_fallthru
        _
      %p186 = scmp.lt.s32.totalorder %s11, 2
      // Predicated region
      $region21: #{tpu_custom_call.1} parent=5 // pred_check
        %p187 = pneg %p186
      $region22: #{tpu_custom_call.1} parent=5 // pred_check_branch
        %189 = sbr.rel (%p187) target = $region24
      $region23: #{tpu_custom_call.1} parent=5 // pred_region
        // Predicated region
        $region25: #{tpu_custom_call.1} parent=23 // pred_check
          %p190 = pneg %p95
        $region26: #{tpu_custom_call.1} parent=23 // pred_check_branch
          %192 = sbr.rel (%p190) target = $region28
        $region27: #{tpu_custom_call.1} parent=23 // pred_region
          %p193 = scmp.lt.s32.totalorder %s19, 1
          %s194 = scalar_select %p193, %s19, 1
          %s195 = smul.addr %s194, 34
          %s196 = smul.addr %s195, 8
          %s197 = scalar_lea.vmem %s2, %s196
        $region28: #{tpu_custom_call.1} parent=23 // pred_fallthru
          _
        // Predicated region
        $region29: #{tpu_custom_call.1} parent=23 // pred_check
          %p198 = pneg %p121
        $region30: #{tpu_custom_call.1} parent=23 // pred_check_branch
          %200 = sbr.rel (%p198) target = $region32
        $region31: #{tpu_custom_call.1} parent=23 // pred_region
          %p201 = scmp.lt.s32.totalorder %s19, 1
          %s202 = scalar_select %p201, %s19, 1
          %s203 = smul.addr %s202, 5
          %s204 = smul.addr %s203, 8
          %s205 = scalar_lea.vmem %s3, %s204
        $region32: #{tpu_custom_call.1} parent=23 // pred_fallthru
          _
      $region24: #{tpu_custom_call.1} parent=5 // pred_fallthru
        _
      %p206 = scmp.le.s32.totalorder 1, %s11
      %p207 = scmp.lt.s32.totalorder %s11, 3
      %p208 = pnand %p206, %p207
      %p209 = pneg %p208
      // Predicated region
      $region33: #{tpu_custom_call.1} parent=5 // pred_check
        _
      $region34: #{tpu_custom_call.1} parent=5 // pred_check_branch
        %211 = sbr.rel (%p208) target = $region36
      $region35: #{tpu_custom_call.1} parent=5 // pred_region
        %s212 = ssub.s32 %s11, 1
        %s213 = smul.u32 2, %s20
        %p214 = scmp.lt.s32.totalorder %s213, 1
        %s215 = scalar_select %p214, %s213, 1
        %s216 = smul.addr %s215, 8
        %s217 = scalar_lea.vmem %s0, %s216
        %p218 = pneg %p49
        %p219 = pneg %p46
        %s220 = smul.u32 2, %s20
        %p221 = scmp.lt.s32.totalorder %s220, 1
        %s222 = scalar_select %p221, %s220, 1
        %s223 = smul.addr %s222, 8
        %s224 = scalar_lea.vmem %s1, %s223
        %p225 = pneg %p75
        %p226 = pneg %p72
        %p227 = scmp.lt.s32.totalorder %s21, 1
        %s228 = scalar_select %p227, %s21, 1
        %s229 = smul.addr %s228, 34
        %s230 = smul.addr %s229, 8
        %s231 = scalar_lea.vmem %s2, %s230
        %p232 = pneg %p101
        %p233 = pneg %p98
        %p234 = scmp.lt.s32.totalorder %s21, 1
        %s235 = scalar_select %p234, %s21, 1
        %s236 = smul.addr %s235, 5
        %s237 = smul.addr %s236, 8
        %s238 = scalar_lea.vmem %s3, %s237
        %p239 = pneg %p127
        %p240 = pneg %p124
        %p241 = pneg %p153
        %p242 = pneg %p150
        %s243 = smul.u32 2, %s20
        %p244 = scmp.lt.s32.totalorder %s243, 1
        %s245 = scalar_select %p244, %s243, 1
        %s246 = smul.addr %s245, 8
        %s247 = scalar_lea.vmem %s0, %s246
        %s248 = smul.u32 2, %s20
        %s249 = smul.u32 2, %s20
        %p250 = scmp.lt.s32.totalorder %s249, 1
        %s251 = scalar_select %p250, %s249, 1
        %s252 = smul.addr %s251, 8
        %s253 = scalar_lea.vmem %s1, %s252
        %s254 = smul.u32 2, %s20
        %p255 = scmp.lt.s32.totalorder %s21, 1
        %s256 = scalar_select %p255, %s21, 1
        %s257 = smul.addr %s256, 34
        %s258 = smul.addr %s257, 8
        %s259 = scalar_lea.vmem %s2, %s258
        %p260 = scmp.lt.s32.totalorder %s21, 1
        %s261 = scalar_select %p260, %s21, 1
        %s262 = smul.addr %s261, 5
        %s263 = smul.addr %s262, 8
        %s264 = scalar_lea.vmem %s3, %s263
        %s265 = smul.u32 2, %s20
        %p266 = scmp.eq.s32.totalorder %s21, 0
        // Predicated region
        $region37: #{tpu_custom_call.1} parent=35 // pred_check
          %p267 = pneg %p266
        $region38: #{tpu_custom_call.1} parent=35 // pred_check_branch
          %269 = sbr.rel (%p267) target = $region40
        $region39: #{tpu_custom_call.1} parent=35 // pred_region
          %v270 = vld [vmem:[%s247] sm:$0xff]
          %v271 = vld [vmem:[%s247 + $0x8] sm:$0xff]
          %vm272 = vcmask 261120
          %273 = vst.msk [vmem:[#allocation2] sm:$0xff] %vm272, %v270
          %274 = vst.msk [vmem:[#allocation2 + $0x8] sm:$0xff] %vm272, %v271
          %v275 = vld [vmem:[%s253] sm:$0xff]
          %v276 = vld [vmem:[%s253 + $0x8] sm:$0xff]
          %277 = vst.msk [vmem:[#allocation2 + $0x10] sm:$0xff] %vm272, %v275
          %278 = vst.msk [vmem:[#allocation2 + $0x18] sm:$0xff] %vm272, %v276
          %v279 = vld [vmem:[%s253] sm:$0xff]
          %v280 = vld [vmem:[%s253 + $0x8] sm:$0xff]
          %281 = vst.msk [vmem:[#allocation2 + $0x20] sm:$0xff] %vm272, %v279
          %282 = vst.msk [vmem:[#allocation2 + $0x28] sm:$0xff] %vm272, %v280
        $region40: #{tpu_custom_call.1} parent=35 // pred_fallthru
          _
        %v283 = vld [vmem:[%s259 + $0x100] sm:$0x1]
        %v284 = vld [vmem:[%s259 + $0x101] sm:$0x1]
        %v285 = vld [vmem:[%s259] sm:$0xff]
        %v286 = vld [vmem:[%s259 + $0x8] sm:$0xff]
        %v287 = vld [vmem:[%s259 + $0x10] sm:$0xff]
        %v288 = vld [vmem:[%s259 + $0x18] sm:$0xff]
        %v289 = vld [vmem:[%s259 + $0x20] sm:$0xff]
        %v290 = vld [vmem:[%s259 + $0x28] sm:$0xff]
        %v291 = vld [vmem:[%s259 + $0x30] sm:$0xff]
        %v292 = vld [vmem:[%s259 + $0x38] sm:$0xff]
        %v293 = vld [vmem:[%s259 + $0x40] sm:$0xff]
        %v294 = vld [vmem:[%s259 + $0x48] sm:$0xff]
        %v295 = vld [vmem:[%s259 + $0x50] sm:$0xff]
        %v296 = vld [vmem:[%s259 + $0x58] sm:$0xff]
        %v297 = vld [vmem:[%s259 + $0x60] sm:$0xff]
        %v298 = vld [vmem:[%s259 + $0x68] sm:$0xff]
        %v299 = vld [vmem:[%s259 + $0x70] sm:$0xff]
        %v300 = vld [vmem:[%s259 + $0x78] sm:$0xff]
        %v301 = vld [vmem:[%s259 + $0x102] sm:$0x1]
        %v302 = vld [vmem:[%s259 + $0x103] sm:$0x1]
        %v303 = vld [vmem:[%s259 + $0x104] sm:$0x1]
        %v304 = vld [vmem:[%s259 + $0x105] sm:$0x1]
        %v305 = vld [vmem:[%s259 + $0x106] sm:$0x1]
        %v306 = vld [vmem:[%s259 + $0x107] sm:$0x1]
        %v307 = vld [vmem:[%s259 + $0x80] sm:$0xff]
        %v308 = vld [vmem:[%s259 + $0x88] sm:$0xff]
        %v309 = vld [vmem:[%s259 + $0x90] sm:$0xff]
        %v310 = vld [vmem:[%s259 + $0x98] sm:$0xff]
        %v311 = vld [vmem:[%s259 + $0xa0] sm:$0xff]
        %v312 = vld [vmem:[%s259 + $0xa8] sm:$0xff]
        %v313 = vld [vmem:[%s259 + $0xb0] sm:$0xff]
        %v314 = vld [vmem:[%s259 + $0xb8] sm:$0xff]
        %v315 = vld [vmem:[%s259 + $0xc0] sm:$0xff]
        %v316 = vld [vmem:[%s259 + $0xc8] sm:$0xff]
        %v317 = vld [vmem:[%s259 + $0xd0] sm:$0xff]
        %v318 = vld [vmem:[%s259 + $0xd8] sm:$0xff]
        %v319 = vld [vmem:[%s259 + $0xe0] sm:$0xff]
        %v320 = vld [vmem:[%s259 + $0xe8] sm:$0xff]
        %v321 = vld [vmem:[%s259 + $0xf0] sm:$0xff]
        %v322 = vld [vmem:[%s259 + $0xf8] sm:$0xff]
        %v323 = vld [vmem:[%s259 + $0x108] sm:$0x1]
        %v324 = vld [vmem:[%s259 + $0x109] sm:$0x1]
        %v325 = vld [vmem:[%s259 + $0x10a] sm:$0x1]
        %v326 = vld [vmem:[%s264] sm:$0xff]
        %v327 = vld [vmem:[%s264 + $0x8] sm:$0xff]
        %v328 = vld [vmem:[%s264 + $0x10] sm:$0xff]
        %v329 = vld [vmem:[%s264 + $0x18] sm:$0xff]
        %v330 = vld [vmem:[%s264 + $0x20] sm:$0x1]
        %v331 = vld [vmem:[#allocation2] sm:$0xff]
        %v332 = vld [vmem:[#allocation2 + $0x8] sm:$0xff]
        %v333 = vld [vmem:[#allocation2 + $0x10] sm:$0xff]
        %v334 = vld [vmem:[#allocation2 + $0x18] sm:$0xff]
        %v335 = vld [vmem:[#allocation2 + $0x20] sm:$0xff]
        %v336 = vld [vmem:[#allocation2 + $0x28] sm:$0xff]
        %vm337 = vcmask 261120
        %v338 = vsel %vm337, %v331, 0.0
        %339 = vadd.xlane.f32.xlu0 %v338
        %v340 = vpop.xlane.xlu0 %339
        %v341 = vsel %vm337, %v332, 0.0
        %342 = vadd.xlane.f32.xlu0 %v341
        %v343 = vpop.xlane.xlu0 %342
        %v344 = vsel %vm337, %v333, 0.0
        %345 = vadd.xlane.f32.xlu0 %v344
        %v346 = vpop.xlane.xlu0 %345
        %v347 = vsel %vm337, %v334, 0.0
        %348 = vadd.xlane.f32.xlu0 %v347
        %v349 = vpop.xlane.xlu0 %348
        %v350 = vsel %vm337, %v335, 0.0
        %351 = vadd.xlane.f32.xlu0 %v350
        %v352 = vpop.xlane.xlu0 %351
        %v353 = vsel %vm337, %v336, 0.0
        %354 = vadd.xlane.f32.xlu0 %v353
        %v355 = vpop.xlane.xlu0 %354
        %v356 = vrcp.pop 32.0
        %v357 = vmul.f32 %v340, %v356
        %v358 = vmul.f32 %v343, %v356
        %v359 = vmul.f32 %v346, %v356
        %v360 = vmul.f32 %v349, %v356
        %v361 = vmul.f32 %v352, %v356
        %v362 = vmul.f32 %v355, %v356
        %v363 = vsub.f32 %v331, %v357
        %v364 = vsub.f32 %v332, %v358
        %v365 = vsub.f32 %v333, %v359
        %v366 = vsub.f32 %v334, %v360
        %v367 = vsub.f32 %v335, %v361
        %v368 = vsub.f32 %v336, %v362
        %v369 = vmul.f32 %v363, %v363
        %v370 = vmul.f32 %v364, %v364
        %v371 = vmul.f32 %v365, %v365
        %v372 = vmul.f32 %v366, %v366
        %v373 = vmul.f32 %v367, %v367
        %v374 = vmul.f32 %v368, %v368
        %v375 = vsel %vm337, %v369, 0.0
        %376 = vadd.xlane.f32.xlu0 %v375
        %v377 = vpop.xlane.xlu0 %376
        %v378 = vsel %vm337, %v370, 0.0
        %379 = vadd.xlane.f32.xlu0 %v378
        %v380 = vpop.xlane.xlu0 %379
        %v381 = vsel %vm337, %v371, 0.0
        %382 = vadd.xlane.f32.xlu0 %v381
        %v383 = vpop.xlane.xlu0 %382
        %v384 = vsel %vm337, %v372, 0.0
        %385 = vadd.xlane.f32.xlu0 %v384
        %v386 = vpop.xlane.xlu0 %385
        %v387 = vsel %vm337, %v373, 0.0
        %388 = vadd.xlane.f32.xlu0 %v387
        %v389 = vpop.xlane.xlu0 %388
        %v390 = vsel %vm337, %v374, 0.0
        %391 = vadd.xlane.f32.xlu0 %v390
        %v392 = vpop.xlane.xlu0 %391
        %v393 = vmul.f32 %v377, %v356
        %v394 = vmul.f32 %v380, %v356
        %v395 = vmul.f32 %v383, %v356
        %v396 = vmul.f32 %v386, %v356
        %v397 = vmul.f32 %v389, %v356
        %v398 = vmul.f32 %v392, %v356
        %v399 = vadd.f32 %v393, 1e-06
        %v400 = vadd.f32 %v394, 1e-06
        %v401 = vadd.f32 %v395, 1e-06
        %v402 = vadd.f32 %v396, 1e-06
        %v403 = vadd.f32 %v397, 1e-06
        %v404 = vadd.f32 %v398, 1e-06
        %v405 = vrsqrt.pop %v399
        %v406 = vrsqrt.pop %v400
        %v407 = vrsqrt.pop %v401
        %v408 = vrsqrt.pop %v402
        %v409 = vrsqrt.pop %v403
        %v410 = vrsqrt.pop %v404
        %v411 = vmul.f32 %v363, %v405
        %v412 = vmul.f32 %v364, %v406
        %v413 = vmul.f32 %v365, %v407
        %v414 = vmul.f32 %v366, %v408
        %v415 = vmul.f32 %v367, %v409
        %v416 = vmul.f32 %v368, %v410
        %v417 = vlaneseq
        %v418 = vshrl.u32 %v417, 7
        %v419 = vsub.s32 0, %v418
        %v420 = vrot.slane %v283, %v419
        %v421 = vmul.f32 %v411, %v420
        %v422 = vmul.f32 %v412, %v420
        %v423 = vmul.f32 %v413, %v420
        %v424 = vmul.f32 %v414, %v420
        %v425 = vmul.f32 %v415, %v420
        %v426 = vmul.f32 %v416, %v420
        %v427 = vlaneseq
        %v428 = vshrl.u32 %v427, 7
        %v429 = vsub.s32 0, %v428
        %v430 = vrot.slane %v284, %v429
        %v431 = vadd.f32 %v421, %v430
        %v432 = vadd.f32 %v422, %v430
        %v433 = vadd.f32 %v423, %v430
        %v434 = vadd.f32 %v424, %v430
        %v435 = vadd.f32 %v425, %v430
        %v436 = vadd.f32 %v426, %v430
        %v437 = vlaneseq
        %v438 = vshrl.u32 %v437, 7
        %v439 = vsub.s32 0, %v438
        %v440 = vrot.slane %v301, %v439
        %v442 = vsel %vm337, %v431, 0
        %v445 = vsel %vm337, %v432, 0
        %447 = vmatprep.subr.mxu0 0.0
        %448 = vmatpush1.msra.mxu0 %v285
        %449 = vmatprep.subr.mxu0 0.0
        %450 = vmatpush1.msra.mxu0 %v286
        %451 = vmatprep.subr.mxu0 0.0
        %452 = vmatpush1.msra.mxu0 %v287
        %453 = vmatprep.subr.mxu0 0.0
        %454 = vmatpush1.msra.mxu0 %v288
        %455 = vmatprep.subr.mxu0 0.0
        %456 = vmatpush1.msra.mxu0 0.0
        %457 = vmatprep.subr.mxu0 0.0
        %458 = vmatpush1.msra.mxu0 0.0
        %459 = vmatprep.subr.mxu0 0.0
        %460 = vmatpush1.msra.mxu0 0.0
        %461 = vmatprep.subr.mxu0 0.0
        %462 = vmatpush1.msra.mxu0 0.0
        %463 = vmatprep.subr.mxu0 0.0
        %464 = vmatpush1.msra.mxu0 0.0
        %465 = vmatprep.subr.mxu0 0.0
        %466 = vmatpush1.msra.mxu0 0.0
        %467 = vmatprep.subr.mxu0 0.0
        %468 = vmatpush1.msra.mxu0 0.0
        %469 = vmatprep.subr.mxu0 0.0
        %470 = vmatpush1.msra.mxu0 0.0
        %471 = vmatprep.subr.mxu0 0.0
        %472 = vmatpush1.msra.mxu0 0.0
        %473 = vmatprep.subr.mxu0 0.0
        %474 = vmatpush1.msra.mxu0 0.0
        %475 = vmatprep.subr.mxu0 0.0
        %476 = vmatpush1.msra.mxu0 0.0
        %477 = vmatprep.subr.mxu0 0.0
        %478 = vmatpush1.msra.mxu0 0.0
        %479 = vmatprep.subr.mxu0 0.0
        %480 = vmatpush1.msra.mxu0 0.0
        %481 = vmatprep.subr.mxu0 0.0
        %482 = vmatpush1.msra.mxu0 0.0
        %483 = vmatprep.subr.mxu0 0.0
        %484 = vmatpush1.msra.mxu0 0.0
        %485 = vmatprep.subr.mxu0 0.0
        %486 = vmatpush1.msra.mxu0 0.0
        %487 = vmatprep.subr.mxu0 0.0
        %488 = vmatpush1.msra.mxu0 0.0
        %489 = vmatprep.subr.mxu0 0.0
        %490 = vmatpush1.msra.mxu0 0.0
        %491 = vmatprep.subr.mxu0 0.0
        %492 = vmatpush1.msra.mxu0 0.0
        %493 = vmatprep.subr.mxu0 0.0
        %494 = vmatpush1.msra.mxu0 0.0
        %495 = vmatprep.subr.mxu0 0.0
        %496 = vmatpush1.msra.mxu0 0.0
        %497 = vmatprep.subr.mxu0 0.0
        %498 = vmatpush1.msra.mxu0 0.0
        %499 = vmatprep.subr.mxu0 0.0
        %500 = vmatpush1.msra.mxu0 0.0
        %501 = vmatprep.subr.mxu0 0.0
        %502 = vmatpush1.msra.mxu0 0.0
        %503 = vmatprep.subr.mxu0 0.0
        %504 = vmatpush1.msra.mxu0 0.0
        %505 = vmatprep.subr.mxu0 0.0
        %506 = vmatpush1.msra.mxu0 0.0
        %507 = vmatprep.subr.mxu0 0.0
        %508 = vmatpush1.msra.mxu0 0.0
        %509 = vmatprep.subr.mxu0 0.0
        %510 = vmatpush1.msra.mxu0 0.0
        %511 = vmatprep.mubr.f32.mxu0 0.0
        %512 = vmatmul.mubr.f32.gmra.mrb[0].mxu0 %v442
        %v513 = vpop.f32.mrb[0].mxu0
        %v514 = vadd.f32 %v440, %v513
        %v515 = vpop.f32.mrb[0].mxu0
        %516 = vmatprep.mubr.f32.mxu0 0.0
        %517 = vmatmul.mubr.f32.gmra.mrb[0].mxu0 %v445
        %v518 = vpop.f32.mrb[0].mxu0
        %v519 = vadd.f32 %v440, %v518
        %v520 = vpop.f32.mrb[0].mxu0
        %521 = vdwg.mxu0
        %v522 = vmul.f32 %v514, 0.35355338
        %v523 = vmul.f32 %v519, 0.35355338
        %v524 = vlaneseq
        %v525 = vshrl.u32 %v524, 7
        %v526 = vsub.s32 0, %v525
        %v527 = vrot.slane %v302, %v526
        %v529 = vsel %vm337, %v433, 0
        %v532 = vsel %vm337, %v434, 0
        %534 = vmatprep.subr.mxu0 0.0
        %535 = vmatpush1.msra.mxu0 %v289
        %536 = vmatprep.subr.mxu0 0.0
        %537 = vmatpush1.msra.mxu0 %v290
        %538 = vmatprep.subr.mxu0 0.0
        %539 = vmatpush1.msra.mxu0 %v291
        %540 = vmatprep.subr.mxu0 0.0
        %541 = vmatpush1.msra.mxu0 %v292
        %542 = vmatprep.subr.mxu0 0.0
        %543 = vmatpush1.msra.mxu0 0.0
        %544 = vmatprep.subr.mxu0 0.0
        %545 = vmatpush1.msra.mxu0 0.0
        %546 = vmatprep.subr.mxu0 0.0
        %547 = vmatpush1.msra.mxu0 0.0
        %548 = vmatprep.subr.mxu0 0.0
        %549 = vmatpush1.msra.mxu0 0.0
        %550 = vmatprep.subr.mxu0 0.0
        %551 = vmatpush1.msra.mxu0 0.0
        %552 = vmatprep.subr.mxu0 0.0
        %553 = vmatpush1.msra.mxu0 0.0
        %554 = vmatprep.subr.mxu0 0.0
        %555 = vmatpush1.msra.mxu0 0.0
        %556 = vmatprep.subr.mxu0 0.0
        %557 = vmatpush1.msra.mxu0 0.0
        %558 = vmatprep.subr.mxu0 0.0
        %559 = vmatpush1.msra.mxu0 0.0
        %560 = vmatprep.subr.mxu0 0.0
        %561 = vmatpush1.msra.mxu0 0.0
        %562 = vmatprep.subr.mxu0 0.0
        %563 = vmatpush1.msra.mxu0 0.0
        %564 = vmatprep.subr.mxu0 0.0
        %565 = vmatpush1.msra.mxu0 0.0
        %566 = vmatprep.subr.mxu0 0.0
        %567 = vmatpush1.msra.mxu0 0.0
        %568 = vmatprep.subr.mxu0 0.0
        %569 = vmatpush1.msra.mxu0 0.0
        %570 = vmatprep.subr.mxu0 0.0
        %571 = vmatpush1.msra.mxu0 0.0
        %572 = vmatprep.subr.mxu0 0.0
        %573 = vmatpush1.msra.mxu0 0.0
        %574 = vmatprep.subr.mxu0 0.0
        %575 = vmatpush1.msra.mxu0 0.0
        %576 = vmatprep.subr.mxu0 0.0
        %577 = vmatpush1.msra.mxu0 0.0
        %578 = vmatprep.subr.mxu0 0.0
        %579 = vmatpush1.msra.mxu0 0.0
        %580 = vmatprep.subr.mxu0 0.0
        %581 = vmatpush1.msra.mxu0 0.0
        %582 = vmatprep.subr.mxu0 0.0
        %583 = vmatpush1.msra.mxu0 0.0
        %584 = vmatprep.subr.mxu0 0.0
        %585 = vmatpush1.msra.mxu0 0.0
        %586 = vmatprep.subr.mxu0 0.0
        %587 = vmatpush1.msra.mxu0 0.0
        %588 = vmatprep.subr.mxu0 0.0
        %589 = vmatpush1.msra.mxu0 0.0
        %590 = vmatprep.subr.mxu0 0.0
        %591 = vmatpush1.msra.mxu0 0.0
        %592 = vmatprep.subr.mxu0 0.0
        %593 = vmatpush1.msra.mxu0 0.0
        %594 = vmatprep.subr.mxu0 0.0
        %595 = vmatpush1.msra.mxu0 0.0
        %596 = vmatprep.subr.mxu0 0.0
        %597 = vmatpush1.msra.mxu0 0.0
        %598 = vmatprep.mubr.f32.mxu0 0.0
        %599 = vmatmul.mubr.f32.gmra.mrb[0].mxu0 %v529
        %v600 = vpop.f32.mrb[0].mxu0
        %v601 = vadd.f32 %v527, %v600
        %v602 = vpop.f32.mrb[0].mxu0
        %603 = vmatprep.mubr.f32.mxu0 0.0
        %604 = vmatmul.mubr.f32.gmra.mrb[0].mxu0 %v532
        %v605 = vpop.f32.mrb[0].mxu0
        %v606 = vadd.f32 %v527, %v605
        %v607 = vpop.f32.mrb[0].mxu0
        %608 = vdwg.mxu0
        %v609 = vlaneseq
        %v610 = vshrl.u32 %v609, 7
        %v611 = vsub.s32 0, %v610
        %v612 = vrot.slane %v303, %v611
        %v614 = vsel %vm337, %v435, 0
        %v617 = vsel %vm337, %v436, 0
        %619 = vmatprep.subr.mxu0 0.0
        %620 = vmatpush1.msra.mxu0 %v293
        %621 = vmatprep.subr.mxu0 0.0
        %622 = vmatpush1.msra.mxu0 %v294
        %623 = vmatprep.subr.mxu0 0.0
        %624 = vmatpush1.msra.mxu0 %v295
        %625 = vmatprep.subr.mxu0 0.0
        %626 = vmatpush1.msra.mxu0 %v296
        %627 = vmatprep.subr.mxu0 0.0
        %628 = vmatpush1.msra.mxu0 0.0
        %629 = vmatprep.subr.mxu0 0.0
        %630 = vmatpush1.msra.mxu0 0.0
        %631 = vmatprep.subr.mxu0 0.0
        %632 = vmatpush1.msra.mxu0 0.0
        %633 = vmatprep.subr.mxu0 0.0
        %634 = vmatpush1.msra.mxu0 0.0
        %635 = vmatprep.subr.mxu0 0.0
        %636 = vmatpush1.msra.mxu0 0.0
        %637 = vmatprep.subr.mxu0 0.0
        %638 = vmatpush1.msra.mxu0 0.0
        %639 = vmatprep.subr.mxu0 0.0
        %640 = vmatpush1.msra.mxu0 0.0
        %641 = vmatprep.subr.mxu0 0.0
        %642 = vmatpush1.msra.mxu0 0.0
        %643 = vmatprep.subr.mxu0 0.0
        %644 = vmatpush1.msra.mxu0 0.0
        %645 = vmatprep.subr.mxu0 0.0
        %646 = vmatpush1.msra.mxu0 0.0
        %647 = vmatprep.subr.mxu0 0.0
        %648 = vmatpush1.msra.mxu0 0.0
        %649 = vmatprep.subr.mxu0 0.0
        %650 = vmatpush1.msra.mxu0 0.0
        %651 = vmatprep.subr.mxu0 0.0
        %652 = vmatpush1.msra.mxu0 0.0
        %653 = vmatprep.subr.mxu0 0.0
        %654 = vmatpush1.msra.mxu0 0.0
        %655 = vmatprep.subr.mxu0 0.0
        %656 = vmatpush1.msra.mxu0 0.0
        %657 = vmatprep.subr.mxu0 0.0
        %658 = vmatpush1.msra.mxu0 0.0
        %659 = vmatprep.subr.mxu0 0.0
        %660 = vmatpush1.msra.mxu0 0.0
        %661 = vmatprep.subr.mxu0 0.0
        %662 = vmatpush1.msra.mxu0 0.0
        %663 = vmatprep.subr.mxu0 0.0
        %664 = vmatpush1.msra.mxu0 0.0
        %665 = vmatprep.subr.mxu0 0.0
        %666 = vmatpush1.msra.mxu0 0.0
        %667 = vmatprep.subr.mxu0 0.0
        %668 = vmatpush1.msra.mxu0 0.0
        %669 = vmatprep.subr.mxu0 0.0
        %670 = vmatpush1.msra.mxu0 0.0
        %671 = vmatprep.subr.mxu0 0.0
        %672 = vmatpush1.msra.mxu0 0.0
        %673 = vmatprep.subr.mxu0 0.0
        %674 = vmatpush1.msra.mxu0 0.0
        %675 = vmatprep.subr.mxu0 0.0
        %676 = vmatpush1.msra.mxu0 0.0
        %677 = vmatprep.subr.mxu0 0.0
        %678 = vmatpush1.msra.mxu0 0.0
        %679 = vmatprep.subr.mxu0 0.0
        %680 = vmatpush1.msra.mxu0 0.0
        %681 = vmatprep.subr.mxu0 0.0
        %682 = vmatpush1.msra.mxu0 0.0
        %683 = vmatprep.mubr.f32.mxu0 0.0
        %684 = vmatmul.mubr.f32.gmra.mrb[0].mxu0 %v614
        %v685 = vpop.f32.mrb[0].mxu0
        %v686 = vadd.f32 %v612, %v685
        %v687 = vpop.f32.mrb[0].mxu0
        %688 = vmatprep.mubr.f32.mxu0 0.0
        %689 = vmatmul.mubr.f32.gmra.mrb[0].mxu0 %v617
        %v690 = vpop.f32.mrb[0].mxu0
        %v691 = vadd.f32 %v612, %v690
        %v692 = vpop.f32.mrb[0].mxu0
        %693 = vdwg.mxu0
        %vm694 = vcmask 64512
        %v696 = vsel %vm694, %v522, 0
        %v699 = vsel %vm694, %v601, 0
        %701 = vmatprep.subr.mxu0 0.0
        %702 = vmatpush1.xpose.msra.mxu0 %v699
        %703 = vmatprep.subr.mxu0 0.0
        %704 = vmatpush1.xpose.msra.mxu0 0.0
        %705 = vmatprep.subr.mxu0 0.0
        %706 = vmatpush1.xpose.msra.mxu0 0.0
        %707 = vmatprep.subr.mxu0 0.0
        %708 = vmatpush1.xpose.msra.mxu0 0.0
        %709 = vmatprep.subr.mxu0 0.0
        %710 = vmatpush1.xpose.msra.mxu0 0.0
        %711 = vmatprep.subr.mxu0 0.0
        %712 = vmatpush1.xpose.msra.mxu0 0.0
        %713 = vmatprep.subr.mxu0 0.0
        %714 = vmatpush1.xpose.msra.mxu0 0.0
        %715 = vmatprep.subr.mxu0 0.0
        %716 = vmatpush1.xpose.msra.mxu0 0.0
        %717 = vmatprep.subr.mxu0 0.0
        %718 = vmatpush1.xpose.msra.mxu0 0.0
        %719 = vmatprep.subr.mxu0 0.0
        %720 = vmatpush1.xpose.msra.mxu0 0.0
        %721 = vmatprep.subr.mxu0 0.0
        %722 = vmatpush1.xpose.msra.mxu0 0.0
        %723 = vmatprep.subr.mxu0 0.0
        %724 = vmatpush1.xpose.msra.mxu0 0.0
        %725 = vmatprep.subr.mxu0 0.0
        %726 = vmatpush1.xpose.msra.mxu0 0.0
        %727 = vmatprep.subr.mxu0 0.0
        %728 = vmatpush1.xpose.msra.mxu0 0.0
        %729 = vmatprep.subr.mxu0 0.0
        %730 = vmatpush1.xpose.msra.mxu0 0.0
        %731 = vmatprep.subr.mxu0 0.0
        %732 = vmatpush1.xpose.msra.mxu0 0.0
        %733 = vmatprep.subr.mxu0 0.0
        %734 = vmatpush1.xpose.msra.mxu0 0.0
        %735 = vmatprep.subr.mxu0 0.0
        %736 = vmatpush1.xpose.msra.mxu0 0.0
        %737 = vmatprep.subr.mxu0 0.0
        %738 = vmatpush1.xpose.msra.mxu0 0.0
        %739 = vmatprep.subr.mxu0 0.0
        %740 = vmatpush1.xpose.msra.mxu0 0.0
        %741 = vmatprep.subr.mxu0 0.0
        %742 = vmatpush1.xpose.msra.mxu0 0.0
        %743 = vmatprep.subr.mxu0 0.0
        %744 = vmatpush1.xpose.msra.mxu0 0.0
        %745 = vmatprep.subr.mxu0 0.0
        %746 = vmatpush1.xpose.msra.mxu0 0.0
        %747 = vmatprep.subr.mxu0 0.0
        %748 = vmatpush1.xpose.msra.mxu0 0.0
        %749 = vmatprep.subr.mxu0 0.0
        %750 = vmatpush1.xpose.msra.mxu0 0.0
        %751 = vmatprep.subr.mxu0 0.0
        %752 = vmatpush1.xpose.msra.mxu0 0.0
        %753 = vmatprep.subr.mxu0 0.0
        %754 = vmatpush1.xpose.msra.mxu0 0.0
        %755 = vmatprep.subr.mxu0 0.0
        %756 = vmatpush1.xpose.msra.mxu0 0.0
        %757 = vmatprep.subr.mxu0 0.0
        %758 = vmatpush1.xpose.msra.mxu0 0.0
        %759 = vmatprep.subr.mxu0 0.0
        %760 = vmatpush1.xpose.msra.mxu0 0.0
        %761 = vmatprep.subr.mxu0 0.0
        %762 = vmatpush1.xpose.msra.mxu0 0.0
        %763 = vmatprep.subr.mxu0 0.0
        %764 = vmatpush1.xpose.msra.mxu0 0.0
        %765 = vmatprep.mubr.f32.mxu0 0.0
        %766 = vmatmul.mubr.f32.gmra.mrb[0].mxu0 %v696
        %v767 = vpop.f32.mrb[0].mxu0
        %v768 = vadd.f32 0.0, %v767
        %v769 = vpop.f32.mrb[0].mxu0
        %770 = vdwg.mxu0
        %v772 = vsel %vm694, %v523, 0
        %v775 = vsel %vm694, %v606, 0
        %777 = vmatprep.subr.mxu0 0.0
        %778 = vmatpush1.xpose.msra.mxu0 %v775
        %779 = vmatprep.subr.mxu0 0.0
        %780 = vmatpush1.xpose.msra.mxu0 0.0
        %781 = vmatprep.subr.mxu0 0.0
        %782 = vmatpush1.xpose.msra.mxu0 0.0
        %783 = vmatprep.subr.mxu0 0.0
        %784 = vmatpush1.xpose.msra.mxu0 0.0
        %785 = vmatprep.subr.mxu0 0.0
        %786 = vmatpush1.xpose.msra.mxu0 0.0
        %787 = vmatprep.subr.mxu0 0.0
        %788 = vmatpush1.xpose.msra.mxu0 0.0
        %789 = vmatprep.subr.mxu0 0.0
        %790 = vmatpush1.xpose.msra.mxu0 0.0
        %791 = vmatprep.subr.mxu0 0.0
        %792 = vmatpush1.xpose.msra.mxu0 0.0
        %793 = vmatprep.subr.mxu0 0.0
        %794 = vmatpush1.xpose.msra.mxu0 0.0
        %795 = vmatprep.subr.mxu0 0.0
        %796 = vmatpush1.xpose.msra.mxu0 0.0
        %797 = vmatprep.subr.mxu0 0.0
        %798 = vmatpush1.xpose.msra.mxu0 0.0
        %799 = vmatprep.subr.mxu0 0.0
        %800 = vmatpush1.xpose.msra.mxu0 0.0
        %801 = vmatprep.subr.mxu0 0.0
        %802 = vmatpush1.xpose.msra.mxu0 0.0
        %803 = vmatprep.subr.mxu0 0.0
        %804 = vmatpush1.xpose.msra.mxu0 0.0
        %805 = vmatprep.subr.mxu0 0.0
        %806 = vmatpush1.xpose.msra.mxu0 0.0
        %807 = vmatprep.subr.mxu0 0.0
        %808 = vmatpush1.xpose.msra.mxu0 0.0
        %809 = vmatprep.subr.mxu0 0.0
        %810 = vmatpush1.xpose.msra.mxu0 0.0
        %811 = vmatprep.subr.mxu0 0.0
        %812 = vmatpush1.xpose.msra.mxu0 0.0
        %813 = vmatprep.subr.mxu0 0.0
        %814 = vmatpush1.xpose.msra.mxu0 0.0
        %815 = vmatprep.subr.mxu0 0.0
        %816 = vmatpush1.xpose.msra.mxu0 0.0
        %817 = vmatprep.subr.mxu0 0.0
        %818 = vmatpush1.xpose.msra.mxu0 0.0
        %819 = vmatprep.subr.mxu0 0.0
        %820 = vmatpush1.xpose.msra.mxu0 0.0
        %821 = vmatprep.subr.mxu0 0.0
        %822 = vmatpush1.xpose.msra.mxu0 0.0
        %823 = vmatprep.subr.mxu0 0.0
        %824 = vmatpush1.xpose.msra.mxu0 0.0
        %825 = vmatprep.subr.mxu0 0.0
        %826 = vmatpush1.xpose.msra.mxu0 0.0
        %827 = vmatprep.subr.mxu0 0.0
        %828 = vmatpush1.xpose.msra.mxu0 0.0
        %829 = vmatprep.subr.mxu0 0.0
        %830 = vmatpush1.xpose.msra.mxu0 0.0
        %831 = vmatprep.subr.mxu0 0.0
        %832 = vmatpush1.xpose.msra.mxu0 0.0
        %833 = vmatprep.subr.mxu0 0.0
        %834 = vmatpush1.xpose.msra.mxu0 0.0
        %835 = vmatprep.subr.mxu0 0.0
        %836 = vmatpush1.xpose.msra.mxu0 0.0
        %837 = vmatprep.subr.mxu0 0.0
        %838 = vmatpush1.xpose.msra.mxu0 0.0
        %839 = vmatprep.subr.mxu0 0.0
        %840 = vmatpush1.xpose.msra.mxu0 0.0
        %841 = vmatprep.mubr.f32.mxu0 0.0
        %842 = vmatmul.mubr.f32.gmra.mrb[0].mxu0 %v772
        %v843 = vpop.f32.mrb[0].mxu0
        %v844 = vadd.f32 0.0, %v843
        %v845 = vpop.f32.mrb[0].mxu0
        %846 = vdwg.mxu0
        %v847 = vsel %vm694, %v768, -inf
        %848 = vmax.xlane.f32.xlu0 %v847
        %v849 = vpop.xlane.xlu0 %848
        %v850 = vsel %vm694, %v844, -inf
        %851 = vmax.xlane.f32.xlu0 %v850
        %v852 = vpop.xlane.xlu0 %851
        %v853 = vsub.f32 %v768, %v849
        %v854 = vsub.f32 %v844, %v852
        %v855 = vmul.f32 %v853, 1.442695
        %v856 = vpow.pop %v855
        %v857 = vmul.f32 %v854, 1.442695
        %v858 = vpow.pop %v857
        %v859 = vsel %vm694, %v856, 0.0
        %860 = vadd.xlane.f32.xlu0 %v859
        %v861 = vpop.xlane.xlu0 %860
        %v862 = vsel %vm694, %v858, 0.0
        %863 = vadd.xlane.f32.xlu0 %v862
        %v864 = vpop.xlane.xlu0 %863
        %v866 = vsel %vm694, %v856, 0
        %868 = vmatprep.subr.mxu0 0.0
        %869 = vmatpush1.msra.mxu0 %v686
        %870 = vmatprep.subr.mxu0 0.0
        %871 = vmatpush1.msra.mxu0 0.0
        %872 = vmatprep.subr.mxu0 0.0
        %873 = vmatpush1.msra.mxu0 0.0
        %874 = vmatprep.subr.mxu0 0.0
        %875 = vmatpush1.msra.mxu0 0.0
        %876 = vmatprep.subr.mxu0 0.0
        %877 = vmatpush1.msra.mxu0 0.0
        %878 = vmatprep.subr.mxu0 0.0
        %879 = vmatpush1.msra.mxu0 0.0
        %880 = vmatprep.subr.mxu0 0.0
        %881 = vmatpush1.msra.mxu0 0.0
        %882 = vmatprep.subr.mxu0 0.0
        %883 = vmatpush1.msra.mxu0 0.0
        %884 = vmatprep.subr.mxu0 0.0
        %885 = vmatpush1.msra.mxu0 0.0
        %886 = vmatprep.subr.mxu0 0.0
        %887 = vmatpush1.msra.mxu0 0.0
        %888 = vmatprep.subr.mxu0 0.0
        %889 = vmatpush1.msra.mxu0 0.0
        %890 = vmatprep.subr.mxu0 0.0
        %891 = vmatpush1.msra.mxu0 0.0
        %892 = vmatprep.subr.mxu0 0.0
        %893 = vmatpush1.msra.mxu0 0.0
        %894 = vmatprep.subr.mxu0 0.0
        %895 = vmatpush1.msra.mxu0 0.0
        %896 = vmatprep.subr.mxu0 0.0
        %897 = vmatpush1.msra.mxu0 0.0
        %898 = vmatprep.subr.mxu0 0.0
        %899 = vmatpush1.msra.mxu0 0.0
        %900 = vmatprep.subr.mxu0 0.0
        %901 = vmatpush1.msra.mxu0 0.0
        %902 = vmatprep.subr.mxu0 0.0
        %903 = vmatpush1.msra.mxu0 0.0
        %904 = vmatprep.subr.mxu0 0.0
        %905 = vmatpush1.msra.mxu0 0.0
        %906 = vmatprep.subr.mxu0 0.0
        %907 = vmatpush1.msra.mxu0 0.0
        %908 = vmatprep.subr.mxu0 0.0
        %909 = vmatpush1.msra.mxu0 0.0
        %910 = vmatprep.subr.mxu0 0.0
        %911 = vmatpush1.msra.mxu0 0.0
        %912 = vmatprep.subr.mxu0 0.0
        %913 = vmatpush1.msra.mxu0 0.0
        %914 = vmatprep.subr.mxu0 0.0
        %915 = vmatpush1.msra.mxu0 0.0
        %916 = vmatprep.subr.mxu0 0.0
        %917 = vmatpush1.msra.mxu0 0.0
        %918 = vmatprep.subr.mxu0 0.0
        %919 = vmatpush1.msra.mxu0 0.0
        %920 = vmatprep.subr.mxu0 0.0
        %921 = vmatpush1.msra.mxu0 0.0
        %922 = vmatprep.subr.mxu0 0.0
        %923 = vmatpush1.msra.mxu0 0.0
        %924 = vmatprep.subr.mxu0 0.0
        %925 = vmatpush1.msra.mxu0 0.0
        %926 = vmatprep.subr.mxu0 0.0
        %927 = vmatpush1.msra.mxu0 0.0
        %928 = vmatprep.subr.mxu0 0.0
        %929 = vmatpush1.msra.mxu0 0.0
        %930 = vmatprep.subr.mxu0 0.0
        %931 = vmatpush1.msra.mxu0 0.0
        %932 = vmatprep.mubr.f32.mxu0 0.0
        %933 = vmatmul.mubr.f32.gmra.mrb[0].mxu0 %v866
        %v934 = vpop.f32.mrb[0].mxu0
        %v935 = vadd.f32 0.0, %v934
        %v936 = vpop.f32.mrb[0].mxu0
        %937 = vdwg.mxu0
        %v939 = vsel %vm694, %v858, 0
        %941 = vmatprep.subr.mxu0 0.0
        %942 = vmatpush1.msra.mxu0 %v691
        %943 = vmatprep.subr.mxu0 0.0
        %944 = vmatpush1.msra.mxu0 0.0
        %945 = vmatprep.subr.mxu0 0.0
        %946 = vmatpush1.msra.mxu0 0.0
        %947 = vmatprep.subr.mxu0 0.0
        %948 = vmatpush1.msra.mxu0 0.0
        %949 = vmatprep.subr.mxu0 0.0
        %950 = vmatpush1.msra.mxu0 0.0
        %951 = vmatprep.subr.mxu0 0.0
        %952 = vmatpush1.msra.mxu0 0.0
        %953 = vmatprep.subr.mxu0 0.0
        %954 = vmatpush1.msra.mxu0 0.0
        %955 = vmatprep.subr.mxu0 0.0
        %956 = vmatpush1.msra.mxu0 0.0
        %957 = vmatprep.subr.mxu0 0.0
        %958 = vmatpush1.msra.mxu0 0.0
        %959 = vmatprep.subr.mxu0 0.0
        %960 = vmatpush1.msra.mxu0 0.0
        %961 = vmatprep.subr.mxu0 0.0
        %962 = vmatpush1.msra.mxu0 0.0
        %963 = vmatprep.subr.mxu0 0.0
        %964 = vmatpush1.msra.mxu0 0.0
        %965 = vmatprep.subr.mxu0 0.0
        %966 = vmatpush1.msra.mxu0 0.0
        %967 = vmatprep.subr.mxu0 0.0
        %968 = vmatpush1.msra.mxu0 0.0
        %969 = vmatprep.subr.mxu0 0.0
        %970 = vmatpush1.msra.mxu0 0.0
        %971 = vmatprep.subr.mxu0 0.0
        %972 = vmatpush1.msra.mxu0 0.0
        %973 = vmatprep.subr.mxu0 0.0
        %974 = vmatpush1.msra.mxu0 0.0
        %975 = vmatprep.subr.mxu0 0.0
        %976 = vmatpush1.msra.mxu0 0.0
        %977 = vmatprep.subr.mxu0 0.0
        %978 = vmatpush1.msra.mxu0 0.0
        %979 = vmatprep.subr.mxu0 0.0
        %980 = vmatpush1.msra.mxu0 0.0
        %981 = vmatprep.subr.mxu0 0.0
        %982 = vmatpush1.msra.mxu0 0.0
        %983 = vmatprep.subr.mxu0 0.0
        %984 = vmatpush1.msra.mxu0 0.0
        %985 = vmatprep.subr.mxu0 0.0
        %986 = vmatpush1.msra.mxu0 0.0
        %987 = vmatprep.subr.mxu0 0.0
        %988 = vmatpush1.msra.mxu0 0.0
        %989 = vmatprep.subr.mxu0 0.0
        %990 = vmatpush1.msra.mxu0 0.0
        %991 = vmatprep.subr.mxu0 0.0
        %992 = vmatpush1.msra.mxu0 0.0
        %993 = vmatprep.subr.mxu0 0.0
        %994 = vmatpush1.msra.mxu0 0.0
        %995 = vmatprep.subr.mxu0 0.0
        %996 = vmatpush1.msra.mxu0 0.0
        %997 = vmatprep.subr.mxu0 0.0
        %998 = vmatpush1.msra.mxu0 0.0
        %999 = vmatprep.subr.mxu0 0.0
        %1000 = vmatpush1.msra.mxu0 0.0
        %1001 = vmatprep.subr.mxu0 0.0
        %1002 = vmatpush1.msra.mxu0 0.0
        %1003 = vmatprep.subr.mxu0 0.0
        %1004 = vmatpush1.msra.mxu0 0.0
        %1005 = vmatprep.mubr.f32.mxu0 0.0
        %1006 = vmatmul.mubr.f32.gmra.mrb[0].mxu0 %v939
        %v1007 = vpop.f32.mrb[0].mxu0
        %v1008 = vadd.f32 0.0, %v1007
        %v1009 = vpop.f32.mrb[0].mxu0
        %1010 = vdwg.mxu0
        %v1011 = vrcp.pop %v861
        %v1012 = vrcp.pop %v864
        %v1013 = vmul.f32 %v935, %v1011
        %v1014 = vmul.f32 %v1008, %v1012
        %1015 = vrot.lane.b32.xlu0 %v522, 120
        %v1016 = vpop.permute.xlu0 %1015
        %1017 = vrot.lane.b32.xlu0 %v601, 120
        %v1018 = vpop.permute.xlu0 %1017
        %v1019 = vsel %vm694, %v1016, 0
        %v1021 = vsel %vm694, %v1018, 0
        %1023 = vmatprep.subr.mxu0 0.0
        %1024 = vmatpush1.xpose.msra.mxu0 %v1021
        %1025 = vmatprep.subr.mxu0 0.0
        %1026 = vmatpush1.xpose.msra.mxu0 0.0
        %1027 = vmatprep.subr.mxu0 0.0
        %1028 = vmatpush1.xpose.msra.mxu0 0.0
        %1029 = vmatprep.subr.mxu0 0.0
        %1030 = vmatpush1.xpose.msra.mxu0 0.0
        %1031 = vmatprep.subr.mxu0 0.0
        %1032 = vmatpush1.xpose.msra.mxu0 0.0
        %1033 = vmatprep.subr.mxu0 0.0
        %1034 = vmatpush1.xpose.msra.mxu0 0.0
        %1035 = vmatprep.subr.mxu0 0.0
        %1036 = vmatpush1.xpose.msra.mxu0 0.0
        %1037 = vmatprep.subr.mxu0 0.0
        %1038 = vmatpush1.xpose.msra.mxu0 0.0
        %1039 = vmatprep.subr.mxu0 0.0
        %1040 = vmatpush1.xpose.msra.mxu0 0.0
        %1041 = vmatprep.subr.mxu0 0.0
        %1042 = vmatpush1.xpose.msra.mxu0 0.0
        %1043 = vmatprep.subr.mxu0 0.0
        %1044 = vmatpush1.xpose.msra.mxu0 0.0
        %1045 = vmatprep.subr.mxu0 0.0
        %1046 = vmatpush1.xpose.msra.mxu0 0.0
        %1047 = vmatprep.subr.mxu0 0.0
        %1048 = vmatpush1.xpose.msra.mxu0 0.0
        %1049 = vmatprep.subr.mxu0 0.0
        %1050 = vmatpush1.xpose.msra.mxu0 0.0
        %1051 = vmatprep.subr.mxu0 0.0
        %1052 = vmatpush1.xpose.msra.mxu0 0.0
        %1053 = vmatprep.subr.mxu0 0.0
        %1054 = vmatpush1.xpose.msra.mxu0 0.0
        %1055 = vmatprep.subr.mxu0 0.0
        %1056 = vmatpush1.xpose.msra.mxu0 0.0
        %1057 = vmatprep.subr.mxu0 0.0
        %1058 = vmatpush1.xpose.msra.mxu0 0.0
        %1059 = vmatprep.subr.mxu0 0.0
        %1060 = vmatpush1.xpose.msra.mxu0 0.0
        %1061 = vmatprep.subr.mxu0 0.0
        %1062 = vmatpush1.xpose.msra.mxu0 0.0
        %1063 = vmatprep.subr.mxu0 0.0
        %1064 = vmatpush1.xpose.msra.mxu0 0.0
        %1065 = vmatprep.subr.mxu0 0.0
        %1066 = vmatpush1.xpose.msra.mxu0 0.0
        %1067 = vmatprep.subr.mxu0 0.0
        %1068 = vmatpush1.xpose.msra.mxu0 0.0
        %1069 = vmatprep.subr.mxu0 0.0
        %1070 = vmatpush1.xpose.msra.mxu0 0.0
        %1071 = vmatprep.subr.mxu0 0.0
        %1072 = vmatpush1.xpose.msra.mxu0 0.0
        %1073 = vmatprep.subr.mxu0 0.0
        %1074 = vmatpush1.xpose.msra.mxu0 0.0
        %1075 = vmatprep.subr.mxu0 0.0
        %1076 = vmatpush1.xpose.msra.mxu0 0.0
        %1077 = vmatprep.subr.mxu0 0.0
        %1078 = vmatpush1.xpose.msra.mxu0 0.0
        %1079 = vmatprep.subr.mxu0 0.0
        %1080 = vmatpush1.xpose.msra.mxu0 0.0
        %1081 = vmatprep.subr.mxu0 0.0
        %1082 = vmatpush1.xpose.msra.mxu0 0.0
        %1083 = vmatprep.subr.mxu0 0.0
        %1084 = vmatpush1.xpose.msra.mxu0 0.0
        %1085 = vmatprep.subr.mxu0 0.0
        %1086 = vmatpush1.xpose.msra.mxu0 0.0
        %1087 = vmatprep.mubr.f32.mxu0 0.0
        %1088 = vmatmul.mubr.f32.gmra.mrb[0].mxu0 %v1019
        %v1089 = vpop.f32.mrb[0].mxu0
        %v1090 = vadd.f32 0.0, %v1089
        %v1091 = vpop.f32.mrb[0].mxu0
        %1092 = vdwg.mxu0
        %1093 = vrot.lane.b32.xlu0 %v523, 120
        %v1094 = vpop.permute.xlu0 %1093
        %1095 = vrot.lane.b32.xlu0 %v606, 120
        %v1096 = vpop.permute.xlu0 %1095
        %v1097 = vsel %vm694, %v1094, 0
        %v1099 = vsel %vm694, %v1096, 0
        %1101 = vmatprep.subr.mxu0 0.0
        %1102 = vmatpush1.xpose.msra.mxu0 %v1099
        %1103 = vmatprep.subr.mxu0 0.0
        %1104 = vmatpush1.xpose.msra.mxu0 0.0
        %1105 = vmatprep.subr.mxu0 0.0
        %1106 = vmatpush1.xpose.msra.mxu0 0.0
        %1107 = vmatprep.subr.mxu0 0.0
        %1108 = vmatpush1.xpose.msra.mxu0 0.0
        %1109 = vmatprep.subr.mxu0 0.0
        %1110 = vmatpush1.xpose.msra.mxu0 0.0
        %1111 = vmatprep.subr.mxu0 0.0
        %1112 = vmatpush1.xpose.msra.mxu0 0.0
        %1113 = vmatprep.subr.mxu0 0.0
        %1114 = vmatpush1.xpose.msra.mxu0 0.0
        %1115 = vmatprep.subr.mxu0 0.0
        %1116 = vmatpush1.xpose.msra.mxu0 0.0
        %1117 = vmatprep.subr.mxu0 0.0
        %1118 = vmatpush1.xpose.msra.mxu0 0.0
        %1119 = vmatprep.subr.mxu0 0.0
        %1120 = vmatpush1.xpose.msra.mxu0 0.0
        %1121 = vmatprep.subr.mxu0 0.0
        %1122 = vmatpush1.xpose.msra.mxu0 0.0
        %1123 = vmatprep.subr.mxu0 0.0
        %1124 = vmatpush1.xpose.msra.mxu0 0.0
        %1125 = vmatprep.subr.mxu0 0.0
        %1126 = vmatpush1.xpose.msra.mxu0 0.0
        %1127 = vmatprep.subr.mxu0 0.0
        %1128 = vmatpush1.xpose.msra.mxu0 0.0
        %1129 = vmatprep.subr.mxu0 0.0
        %1130 = vmatpush1.xpose.msra.mxu0 0.0
        %1131 = vmatprep.subr.mxu0 0.0
        %1132 = vmatpush1.xpose.msra.mxu0 0.0
        %1133 = vmatprep.subr.mxu0 0.0
        %1134 = vmatpush1.xpose.msra.mxu0 0.0
        %1135 = vmatprep.subr.mxu0 0.0
        %1136 = vmatpush1.xpose.msra.mxu0 0.0
        %1137 = vmatprep.subr.mxu0 0.0
        %1138 = vmatpush1.xpose.msra.mxu0 0.0
        %1139 = vmatprep.subr.mxu0 0.0
        %1140 = vmatpush1.xpose.msra.mxu0 0.0
        %1141 = vmatprep.subr.mxu0 0.0
        %1142 = vmatpush1.xpose.msra.mxu0 0.0
        %1143 = vmatprep.subr.mxu0 0.0
        %1144 = vmatpush1.xpose.msra.mxu0 0.0
        %1145 = vmatprep.subr.mxu0 0.0
        %1146 = vmatpush1.xpose.msra.mxu0 0.0
        %1147 = vmatprep.subr.mxu0 0.0
        %1148 = vmatpush1.xpose.msra.mxu0 0.0
        %1149 = vmatprep.subr.mxu0 0.0
        %1150 = vmatpush1.xpose.msra.mxu0 0.0
        %1151 = vmatprep.subr.mxu0 0.0
        %1152 = vmatpush1.xpose.msra.mxu0 0.0
        %1153 = vmatprep.subr.mxu0 0.0
        %1154 = vmatpush1.xpose.msra.mxu0 0.0
        %1155 = vmatprep.subr.mxu0 0.0
        %1156 = vmatpush1.xpose.msra.mxu0 0.0
        %1157 = vmatprep.subr.mxu0 0.0
        %1158 = vmatpush1.xpose.msra.mxu0 0.0
        %1159 = vmatprep.subr.mxu0 0.0
        %1160 = vmatpush1.xpose.msra.mxu0 0.0
        %1161 = vmatprep.subr.mxu0 0.0
        %1162 = vmatpush1.xpose.msra.mxu0 0.0
        %1163 = vmatprep.subr.mxu0 0.0
        %1164 = vmatpush1.xpose.msra.mxu0 0.0
        %1165 = vmatprep.mubr.f32.mxu0 0.0
        %1166 = vmatmul.mubr.f32.gmra.mrb[0].mxu0 %v1097
        %v1167 = vpop.f32.mrb[0].mxu0
        %v1168 = vadd.f32 0.0, %v1167
        %v1169 = vpop.f32.mrb[0].mxu0
        %1170 = vdwg.mxu0
        %v1171 = vsel %vm694, %v1090, -inf
        %1172 = vmax.xlane.f32.xlu0 %v1171
        %v1173 = vpop.xlane.xlu0 %1172
        %v1174 = vsel %vm694, %v1168, -inf
        %1175 = vmax.xlane.f32.xlu0 %v1174
        %v1176 = vpop.xlane.xlu0 %1175
        %v1177 = vsub.f32 %v1090, %v1173
        %v1178 = vsub.f32 %v1168, %v1176
        %v1179 = vmul.f32 %v1177, 1.442695
        %v1180 = vpow.pop %v1179
        %v1181 = vmul.f32 %v1178, 1.442695
        %v1182 = vpow.pop %v1181
        %v1183 = vsel %vm694, %v1180, 0.0
        %1184 = vadd.xlane.f32.xlu0 %v1183
        %v1185 = vpop.xlane.xlu0 %1184
        %v1186 = vsel %vm694, %v1182, 0.0
        %1187 = vadd.xlane.f32.xlu0 %v1186
        %v1188 = vpop.xlane.xlu0 %1187
        %1190 = vrot.lane.b32.xlu0 %v686, 120
        %v1191 = vpop.permute.xlu0 %1190
        %v1194 = vsel %vm694, %v1180, 0
        %1196 = vmatprep.subr.mxu0 0.0
        %1197 = vmatpush1.msra.mxu0 %v1191
        %1198 = vmatprep.subr.mxu0 0.0
        %1199 = vmatpush1.msra.mxu0 0.0
        %1200 = vmatprep.subr.mxu0 0.0
        %1201 = vmatpush1.msra.mxu0 0.0
        %1202 = vmatprep.subr.mxu0 0.0
        %1203 = vmatpush1.msra.mxu0 0.0
        %1204 = vmatprep.subr.mxu0 0.0
        %1205 = vmatpush1.msra.mxu0 0.0
        %1206 = vmatprep.subr.mxu0 0.0
        %1207 = vmatpush1.msra.mxu0 0.0
        %1208 = vmatprep.subr.mxu0 0.0
        %1209 = vmatpush1.msra.mxu0 0.0
        %1210 = vmatprep.subr.mxu0 0.0
        %1211 = vmatpush1.msra.mxu0 0.0
        %1212 = vmatprep.subr.mxu0 0.0
        %1213 = vmatpush1.msra.mxu0 0.0
        %1214 = vmatprep.subr.mxu0 0.0
        %1215 = vmatpush1.msra.mxu0 0.0
        %1216 = vmatprep.subr.mxu0 0.0
        %1217 = vmatpush1.msra.mxu0 0.0
        %1218 = vmatprep.subr.mxu0 0.0
        %1219 = vmatpush1.msra.mxu0 0.0
        %1220 = vmatprep.subr.mxu0 0.0
        %1221 = vmatpush1.msra.mxu0 0.0
        %1222 = vmatprep.subr.mxu0 0.0
        %1223 = vmatpush1.msra.mxu0 0.0
        %1224 = vmatprep.subr.mxu0 0.0
        %1225 = vmatpush1.msra.mxu0 0.0
        %1226 = vmatprep.subr.mxu0 0.0
        %1227 = vmatpush1.msra.mxu0 0.0
        %1228 = vmatprep.subr.mxu0 0.0
        %1229 = vmatpush1.msra.mxu0 0.0
        %1230 = vmatprep.subr.mxu0 0.0
        %1231 = vmatpush1.msra.mxu0 0.0
        %1232 = vmatprep.subr.mxu0 0.0
        %1233 = vmatpush1.msra.mxu0 0.0
        %1234 = vmatprep.subr.mxu0 0.0
        %1235 = vmatpush1.msra.mxu0 0.0
        %1236 = vmatprep.subr.mxu0 0.0
        %1237 = vmatpush1.msra.mxu0 0.0
        %1238 = vmatprep.subr.mxu0 0.0
        %1239 = vmatpush1.msra.mxu0 0.0
        %1240 = vmatprep.subr.mxu0 0.0
        %1241 = vmatpush1.msra.mxu0 0.0
        %1242 = vmatprep.subr.mxu0 0.0
        %1243 = vmatpush1.msra.mxu0 0.0
        %1244 = vmatprep.subr.mxu0 0.0
        %1245 = vmatpush1.msra.mxu0 0.0
        %1246 = vmatprep.subr.mxu0 0.0
        %1247 = vmatpush1.msra.mxu0 0.0
        %1248 = vmatprep.subr.mxu0 0.0
        %1249 = vmatpush1.msra.mxu0 0.0
        %1250 = vmatprep.subr.mxu0 0.0
        %1251 = vmatpush1.msra.mxu0 0.0
        %1252 = vmatprep.subr.mxu0 0.0
        %1253 = vmatpush1.msra.mxu0 0.0
        %1254 = vmatprep.subr.mxu0 0.0
        %1255 = vmatpush1.msra.mxu0 0.0
        %1256 = vmatprep.subr.mxu0 0.0
        %1257 = vmatpush1.msra.mxu0 0.0
        %1258 = vmatprep.subr.mxu0 0.0
        %1259 = vmatpush1.msra.mxu0 0.0
        %1260 = vmatprep.mubr.f32.mxu0 0.0
        %1261 = vmatmul.mubr.f32.gmra.mrb[0].mxu0 %v1194
        %v1262 = vpop.f32.mrb[0].mxu0
        %v1263 = vadd.f32 0.0, %v1262
        %v1264 = vpop.f32.mrb[0].mxu0
        %1265 = vdwg.mxu0
        %1267 = vrot.lane.b32.xlu0 %v691, 120
        %v1268 = vpop.permute.xlu0 %1267
        %v1271 = vsel %vm694, %v1182, 0
        %1273 = vmatprep.subr.mxu0 0.0
        %1274 = vmatpush1.msra.mxu0 %v1268
        %1275 = vmatprep.subr.mxu0 0.0
        %1276 = vmatpush1.msra.mxu0 0.0
        %1277 = vmatprep.subr.mxu0 0.0
        %1278 = vmatpush1.msra.mxu0 0.0
        %1279 = vmatprep.subr.mxu0 0.0
        %1280 = vmatpush1.msra.mxu0 0.0
        %1281 = vmatprep.subr.mxu0 0.0
        %1282 = vmatpush1.msra.mxu0 0.0
        %1283 = vmatprep.subr.mxu0 0.0
        %1284 = vmatpush1.msra.mxu0 0.0
        %1285 = vmatprep.subr.mxu0 0.0
        %1286 = vmatpush1.msra.mxu0 0.0
        %1287 = vmatprep.subr.mxu0 0.0
        %1288 = vmatpush1.msra.mxu0 0.0
        %1289 = vmatprep.subr.mxu0 0.0
        %1290 = vmatpush1.msra.mxu0 0.0
        %1291 = vmatprep.subr.mxu0 0.0
        %1292 = vmatpush1.msra.mxu0 0.0
        %1293 = vmatprep.subr.mxu0 0.0
        %1294 = vmatpush1.msra.mxu0 0.0
        %1295 = vmatprep.subr.mxu0 0.0
        %1296 = vmatpush1.msra.mxu0 0.0
        %1297 = vmatprep.subr.mxu0 0.0
        %1298 = vmatpush1.msra.mxu0 0.0
        %1299 = vmatprep.subr.mxu0 0.0
        %1300 = vmatpush1.msra.mxu0 0.0
        %1301 = vmatprep.subr.mxu0 0.0
        %1302 = vmatpush1.msra.mxu0 0.0
        %1303 = vmatprep.subr.mxu0 0.0
        %1304 = vmatpush1.msra.mxu0 0.0
        %1305 = vmatprep.subr.mxu0 0.0
        %1306 = vmatpush1.msra.mxu0 0.0
        %1307 = vmatprep.subr.mxu0 0.0
        %1308 = vmatpush1.msra.mxu0 0.0
        %1309 = vmatprep.subr.mxu0 0.0
        %1310 = vmatpush1.msra.mxu0 0.0
        %1311 = vmatprep.subr.mxu0 0.0
        %1312 = vmatpush1.msra.mxu0 0.0
        %1313 = vmatprep.subr.mxu0 0.0
        %1314 = vmatpush1.msra.mxu0 0.0
        %1315 = vmatprep.subr.mxu0 0.0
        %1316 = vmatpush1.msra.mxu0 0.0
        %1317 = vmatprep.subr.mxu0 0.0
        %1318 = vmatpush1.msra.mxu0 0.0
        %1319 = vmatprep.subr.mxu0 0.0
        %1320 = vmatpush1.msra.mxu0 0.0
        %1321 = vmatprep.subr.mxu0 0.0
        %1322 = vmatpush1.msra.mxu0 0.0
        %1323 = vmatprep.subr.mxu0 0.0
        %1324 = vmatpush1.msra.mxu0 0.0
        %1325 = vmatprep.subr.mxu0 0.0
        %1326 = vmatpush1.msra.mxu0 0.0
        %1327 = vmatprep.subr.mxu0 0.0
        %1328 = vmatpush1.msra.mxu0 0.0
        %1329 = vmatprep.subr.mxu0 0.0
        %1330 = vmatpush1.msra.mxu0 0.0
        %1331 = vmatprep.subr.mxu0 0.0
        %1332 = vmatpush1.msra.mxu0 0.0
        %1333 = vmatprep.subr.mxu0 0.0
        %1334 = vmatpush1.msra.mxu0 0.0
        %1335 = vmatprep.subr.mxu0 0.0
        %1336 = vmatpush1.msra.mxu0 0.0
        %1337 = vmatprep.mubr.f32.mxu0 0.0
        %1338 = vmatmul.mubr.f32.gmra.mrb[0].mxu0 %v1271
        %v1339 = vpop.f32.mrb[0].mxu0
        %v1340 = vadd.f32 0.0, %v1339
        %v1341 = vpop.f32.mrb[0].mxu0
        %1342 = vdwg.mxu0
        %v1343 = vrcp.pop %v1185
        %v1344 = vrcp.pop %v1188
        %v1345 = vmul.f32 %v1263, %v1343
        %v1346 = vmul.f32 %v1340, %v1344
        %1347 = vrot.lane.b32.xlu0 %v522, 112
        %v1348 = vpop.permute.xlu0 %1347
        %1349 = vrot.lane.b32.xlu0 %v601, 112
        %v1350 = vpop.permute.xlu0 %1349
        %v1351 = vsel %vm694, %v1348, 0
        %v1353 = vsel %vm694, %v1350, 0
        %1355 = vmatprep.subr.mxu0 0.0
        %1356 = vmatpush1.xpose.msra.mxu0 %v1353
        %1357 = vmatprep.subr.mxu0 0.0
        %1358 = vmatpush1.xpose.msra.mxu0 0.0
        %1359 = vmatprep.subr.mxu0 0.0
        %1360 = vmatpush1.xpose.msra.mxu0 0.0
        %1361 = vmatprep.subr.mxu0 0.0
        %1362 = vmatpush1.xpose.msra.mxu0 0.0
        %1363 = vmatprep.subr.mxu0 0.0
        %1364 = vmatpush1.xpose.msra.mxu0 0.0
        %1365 = vmatprep.subr.mxu0 0.0
        %1366 = vmatpush1.xpose.msra.mxu0 0.0
        %1367 = vmatprep.subr.mxu0 0.0
        %1368 = vmatpush1.xpose.msra.mxu0 0.0
        %1369 = vmatprep.subr.mxu0 0.0
        %1370 = vmatpush1.xpose.msra.mxu0 0.0
        %1371 = vmatprep.subr.mxu0 0.0
        %1372 = vmatpush1.xpose.msra.mxu0 0.0
        %1373 = vmatprep.subr.mxu0 0.0
        %1374 = vmatpush1.xpose.msra.mxu0 0.0
        %1375 = vmatprep.subr.mxu0 0.0
        %1376 = vmatpush1.xpose.msra.mxu0 0.0
        %1377 = vmatprep.subr.mxu0 0.0
        %1378 = vmatpush1.xpose.msra.mxu0 0.0
        %1379 = vmatprep.subr.mxu0 0.0
        %1380 = vmatpush1.xpose.msra.mxu0 0.0
        %1381 = vmatprep.subr.mxu0 0.0
        %1382 = vmatpush1.xpose.msra.mxu0 0.0
        %1383 = vmatprep.subr.mxu0 0.0
        %1384 = vmatpush1.xpose.msra.mxu0 0.0
        %1385 = vmatprep.subr.mxu0 0.0
        %1386 = vmatpush1.xpose.msra.mxu0 0.0
        %1387 = vmatprep.subr.mxu0 0.0
        %1388 = vmatpush1.xpose.msra.mxu0 0.0
        %1389 = vmatprep.subr.mxu0 0.0
        %1390 = vmatpush1.xpose.msra.mxu0 0.0
        %1391 = vmatprep.subr.mxu0 0.0
        %1392 = vmatpush1.xpose.msra.mxu0 0.0
        %1393 = vmatprep.subr.mxu0 0.0
        %1394 = vmatpush1.xpose.msra.mxu0 0.0
        %1395 = vmatprep.subr.mxu0 0.0
        %1396 = vmatpush1.xpose.msra.mxu0 0.0
        %1397 = vmatprep.subr.mxu0 0.0
        %1398 = vmatpush1.xpose.msra.mxu0 0.0
        %1399 = vmatprep.subr.mxu0 0.0
        %1400 = vmatpush1.xpose.msra.mxu0 0.0
        %1401 = vmatprep.subr.mxu0 0.0
        %1402 = vmatpush1.xpose.msra.mxu0 0.0
        %1403 = vmatprep.subr.mxu0 0.0
        %1404 = vmatpush1.xpose.msra.mxu0 0.0
        %1405 = vmatprep.subr.mxu0 0.0
        %1406 = vmatpush1.xpose.msra.mxu0 0.0
        %1407 = vmatprep.subr.mxu0 0.0
        %1408 = vmatpush1.xpose.msra.mxu0 0.0
        %1409 = vmatprep.subr.mxu0 0.0
        %1410 = vmatpush1.xpose.msra.mxu0 0.0
        %1411 = vmatprep.subr.mxu0 0.0
        %1412 = vmatpush1.xpose.msra.mxu0 0.0
        %1413 = vmatprep.subr.mxu0 0.0
        %1414 = vmatpush1.xpose.msra.mxu0 0.0
        %1415 = vmatprep.subr.mxu0 0.0
        %1416 = vmatpush1.xpose.msra.mxu0 0.0
        %1417 = vmatprep.subr.mxu0 0.0
        %1418 = vmatpush1.xpose.msra.mxu0 0.0
        %1419 = vmatprep.mubr.f32.mxu0 0.0
        %1420 = vmatmul.mubr.f32.gmra.mrb[0].mxu0 %v1351
        %v1421 = vpop.f32.mrb[0].mxu0
        %v1422 = vadd.f32 0.0, %v1421
        %v1423 = vpop.f32.mrb[0].mxu0
        %1424 = vdwg.mxu0
        %1425 = vrot.lane.b32.xlu0 %v523, 112
        %v1426 = vpop.permute.xlu0 %1425
        %1427 = vrot.lane.b32.xlu0 %v606, 112
        %v1428 = vpop.permute.xlu0 %1427
        %v1429 = vsel %vm694, %v1426, 0
        %v1431 = vsel %vm694, %v1428, 0
        %1433 = vmatprep.subr.mxu0 0.0
        %1434 = vmatpush1.xpose.msra.mxu0 %v1431
        %1435 = vmatprep.subr.mxu0 0.0
        %1436 = vmatpush1.xpose.msra.mxu0 0.0
        %1437 = vmatprep.subr.mxu0 0.0
        %1438 = vmatpush1.xpose.msra.mxu0 0.0
        %1439 = vmatprep.subr.mxu0 0.0
        %1440 = vmatpush1.xpose.msra.mxu0 0.0
        %1441 = vmatprep.subr.mxu0 0.0
        %1442 = vmatpush1.xpose.msra.mxu0 0.0
        %1443 = vmatprep.subr.mxu0 0.0
        %1444 = vmatpush1.xpose.msra.mxu0 0.0
        %1445 = vmatprep.subr.mxu0 0.0
        %1446 = vmatpush1.xpose.msra.mxu0 0.0
        %1447 = vmatprep.subr.mxu0 0.0
        %1448 = vmatpush1.xpose.msra.mxu0 0.0
        %1449 = vmatprep.subr.mxu0 0.0
        %1450 = vmatpush1.xpose.msra.mxu0 0.0
        %1451 = vmatprep.subr.mxu0 0.0
        %1452 = vmatpush1.xpose.msra.mxu0 0.0
        %1453 = vmatprep.subr.mxu0 0.0
        %1454 = vmatpush1.xpose.msra.mxu0 0.0
        %1455 = vmatprep.subr.mxu0 0.0
        %1456 = vmatpush1.xpose.msra.mxu0 0.0
        %1457 = vmatprep.subr.mxu0 0.0
        %1458 = vmatpush1.xpose.msra.mxu0 0.0
        %1459 = vmatprep.subr.mxu0 0.0
        %1460 = vmatpush1.xpose.msra.mxu0 0.0
        %1461 = vmatprep.subr.mxu0 0.0
        %1462 = vmatpush1.xpose.msra.mxu0 0.0
        %1463 = vmatprep.subr.mxu0 0.0
        %1464 = vmatpush1.xpose.msra.mxu0 0.0
        %1465 = vmatprep.subr.mxu0 0.0
        %1466 = vmatpush1.xpose.msra.mxu0 0.0
        %1467 = vmatprep.subr.mxu0 0.0
        %1468 = vmatpush1.xpose.msra.mxu0 0.0
        %1469 = vmatprep.subr.mxu0 0.0
        %1470 = vmatpush1.xpose.msra.mxu0 0.0
        %1471 = vmatprep.subr.mxu0 0.0
        %1472 = vmatpush1.xpose.msra.mxu0 0.0
        %1473 = vmatprep.subr.mxu0 0.0
        %1474 = vmatpush1.xpose.msra.mxu0 0.0
        %1475 = vmatprep.subr.mxu0 0.0
        %1476 = vmatpush1.xpose.msra.mxu0 0.0
        %1477 = vmatprep.subr.mxu0 0.0
        %1478 = vmatpush1.xpose.msra.mxu0 0.0
        %1479 = vmatprep.subr.mxu0 0.0
        %1480 = vmatpush1.xpose.msra.mxu0 0.0
        %1481 = vmatprep.subr.mxu0 0.0
        %1482 = vmatpush1.xpose.msra.mxu0 0.0
        %1483 = vmatprep.subr.mxu0 0.0
        %1484 = vmatpush1.xpose.msra.mxu0 0.0
        %1485 = vmatprep.subr.mxu0 0.0
        %1486 = vmatpush1.xpose.msra.mxu0 0.0
        %1487 = vmatprep.subr.mxu0 0.0
        %1488 = vmatpush1.xpose.msra.mxu0 0.0
        %1489 = vmatprep.subr.mxu0 0.0
        %1490 = vmatpush1.xpose.msra.mxu0 0.0
        %1491 = vmatprep.subr.mxu0 0.0
        %1492 = vmatpush1.xpose.msra.mxu0 0.0
        %1493 = vmatprep.subr.mxu0 0.0
        %1494 = vmatpush1.xpose.msra.mxu0 0.0
        %1495 = vmatprep.subr.mxu0 0.0
        %1496 = vmatpush1.xpose.msra.mxu0 0.0
        %1497 = vmatprep.mubr.f32.mxu0 0.0
        %1498 = vmatmul.mubr.f32.gmra.mrb[0].mxu0 %v1429
        %v1499 = vpop.f32.mrb[0].mxu0
        %v1500 = vadd.f32 0.0, %v1499
        %v1501 = vpop.f32.mrb[0].mxu0
        %1502 = vdwg.mxu0
        %v1503 = vsel %vm694, %v1422, -inf
        %1504 = vmax.xlane.f32.xlu0 %v1503
        %v1505 = vpop.xlane.xlu0 %1504
        %v1506 = vsel %vm694, %v1500, -inf
        %1507 = vmax.xlane.f32.xlu0 %v1506
        %v1508 = vpop.xlane.xlu0 %1507
        %v1509 = vsub.f32 %v1422, %v1505
        %v1510 = vsub.f32 %v1500, %v1508
        %v1511 = vmul.f32 %v1509, 1.442695
        %v1512 = vpow.pop %v1511
        %v1513 = vmul.f32 %v1510, 1.442695
        %v1514 = vpow.pop %v1513
        %v1515 = vsel %vm694, %v1512, 0.0
        %1516 = vadd.xlane.f32.xlu0 %v1515
        %v1517 = vpop.xlane.xlu0 %1516
        %v1518 = vsel %vm694, %v1514, 0.0
        %1519 = vadd.xlane.f32.xlu0 %v1518
        %v1520 = vpop.xlane.xlu0 %1519
        %1521 = vrot.lane.b32.xlu0 %v686, 112
        %v1522 = vpop.permute.xlu0 %1521
        %v1525 = vsel %vm694, %v1512, 0
        %1527 = vmatprep.subr.mxu0 0.0
        %1528 = vmatpush1.msra.mxu0 %v1522
        %1529 = vmatprep.subr.mxu0 0.0
        %1530 = vmatpush1.msra.mxu0 0.0
        %1531 = vmatprep.subr.mxu0 0.0
        %1532 = vmatpush1.msra.mxu0 0.0
        %1533 = vmatprep.subr.mxu0 0.0
        %1534 = vmatpush1.msra.mxu0 0.0
        %1535 = vmatprep.subr.mxu0 0.0
        %1536 = vmatpush1.msra.mxu0 0.0
        %1537 = vmatprep.subr.mxu0 0.0
        %1538 = vmatpush1.msra.mxu0 0.0
        %1539 = vmatprep.subr.mxu0 0.0
        %1540 = vmatpush1.msra.mxu0 0.0
        %1541 = vmatprep.subr.mxu0 0.0
        %1542 = vmatpush1.msra.mxu0 0.0
        %1543 = vmatprep.subr.mxu0 0.0
        %1544 = vmatpush1.msra.mxu0 0.0
        %1545 = vmatprep.subr.mxu0 0.0
        %1546 = vmatpush1.msra.mxu0 0.0
        %1547 = vmatprep.subr.mxu0 0.0
        %1548 = vmatpush1.msra.mxu0 0.0
        %1549 = vmatprep.subr.mxu0 0.0
        %1550 = vmatpush1.msra.mxu0 0.0
        %1551 = vmatprep.subr.mxu0 0.0
        %1552 = vmatpush1.msra.mxu0 0.0
        %1553 = vmatprep.subr.mxu0 0.0
        %1554 = vmatpush1.msra.mxu0 0.0
        %1555 = vmatprep.subr.mxu0 0.0
        %1556 = vmatpush1.msra.mxu0 0.0
        %1557 = vmatprep.subr.mxu0 0.0
        %1558 = vmatpush1.msra.mxu0 0.0
        %1559 = vmatprep.subr.mxu0 0.0
        %1560 = vmatpush1.msra.mxu0 0.0
        %1561 = vmatprep.subr.mxu0 0.0
        %1562 = vmatpush1.msra.mxu0 0.0
        %1563 = vmatprep.subr.mxu0 0.0
        %1564 = vmatpush1.msra.mxu0 0.0
        %1565 = vmatprep.subr.mxu0 0.0
        %1566 = vmatpush1.msra.mxu0 0.0
        %1567 = vmatprep.subr.mxu0 0.0
        %1568 = vmatpush1.msra.mxu0 0.0
        %1569 = vmatprep.subr.mxu0 0.0
        %1570 = vmatpush1.msra.mxu0 0.0
        %1571 = vmatprep.subr.mxu0 0.0
        %1572 = vmatpush1.msra.mxu0 0.0
        %1573 = vmatprep.subr.mxu0 0.0
        %1574 = vmatpush1.msra.mxu0 0.0
        %1575 = vmatprep.subr.mxu0 0.0
        %1576 = vmatpush1.msra.mxu0 0.0
        %1577 = vmatprep.subr.mxu0 0.0
        %1578 = vmatpush1.msra.mxu0 0.0
        %1579 = vmatprep.subr.mxu0 0.0
        %1580 = vmatpush1.msra.mxu0 0.0
        %1581 = vmatprep.subr.mxu0 0.0
        %1582 = vmatpush1.msra.mxu0 0.0
        %1583 = vmatprep.subr.mxu0 0.0
        %1584 = vmatpush1.msra.mxu0 0.0
        %1585 = vmatprep.subr.mxu0 0.0
        %1586 = vmatpush1.msra.mxu0 0.0
        %1587 = vmatprep.subr.mxu0 0.0
        %1588 = vmatpush1.msra.mxu0 0.0
        %1589 = vmatprep.subr.mxu0 0.0
        %1590 = vmatpush1.msra.mxu0 0.0
        %1591 = vmatprep.mubr.f32.mxu0 0.0
        %1592 = vmatmul.mubr.f32.gmra.mrb[0].mxu0 %v1525
        %v1593 = vpop.f32.mrb[0].mxu0
        %v1594 = vadd.f32 0.0, %v1593
        %v1595 = vpop.f32.mrb[0].mxu0
        %1596 = vdwg.mxu0
        %1597 = vrot.lane.b32.xlu0 %v691, 112
        %v1598 = vpop.permute.xlu0 %1597
        %v1601 = vsel %vm694, %v1514, 0
        %1603 = vmatprep.subr.mxu0 0.0
        %1604 = vmatpush1.msra.mxu0 %v1598
        %1605 = vmatprep.subr.mxu0 0.0
        %1606 = vmatpush1.msra.mxu0 0.0
        %1607 = vmatprep.subr.mxu0 0.0
        %1608 = vmatpush1.msra.mxu0 0.0
        %1609 = vmatprep.subr.mxu0 0.0
        %1610 = vmatpush1.msra.mxu0 0.0
        %1611 = vmatprep.subr.mxu0 0.0
        %1612 = vmatpush1.msra.mxu0 0.0
        %1613 = vmatprep.subr.mxu0 0.0
        %1614 = vmatpush1.msra.mxu0 0.0
        %1615 = vmatprep.subr.mxu0 0.0
        %1616 = vmatpush1.msra.mxu0 0.0
        %1617 = vmatprep.subr.mxu0 0.0
        %1618 = vmatpush1.msra.mxu0 0.0
        %1619 = vmatprep.subr.mxu0 0.0
        %1620 = vmatpush1.msra.mxu0 0.0
        %1621 = vmatprep.subr.mxu0 0.0
        %1622 = vmatpush1.msra.mxu0 0.0
        %1623 = vmatprep.subr.mxu0 0.0
        %1624 = vmatpush1.msra.mxu0 0.0
        %1625 = vmatprep.subr.mxu0 0.0
        %1626 = vmatpush1.msra.mxu0 0.0
        %1627 = vmatprep.subr.mxu0 0.0
        %1628 = vmatpush1.msra.mxu0 0.0
        %1629 = vmatprep.subr.mxu0 0.0
        %1630 = vmatpush1.msra.mxu0 0.0
        %1631 = vmatprep.subr.mxu0 0.0
        %1632 = vmatpush1.msra.mxu0 0.0
        %1633 = vmatprep.subr.mxu0 0.0
        %1634 = vmatpush1.msra.mxu0 0.0
        %1635 = vmatprep.subr.mxu0 0.0
        %1636 = vmatpush1.msra.mxu0 0.0
        %1637 = vmatprep.subr.mxu0 0.0
        %1638 = vmatpush1.msra.mxu0 0.0
        %1639 = vmatprep.subr.mxu0 0.0
        %1640 = vmatpush1.msra.mxu0 0.0
        %1641 = vmatprep.subr.mxu0 0.0
        %1642 = vmatpush1.msra.mxu0 0.0
        %1643 = vmatprep.subr.mxu0 0.0
        %1644 = vmatpush1.msra.mxu0 0.0
        %1645 = vmatprep.subr.mxu0 0.0
        %1646 = vmatpush1.msra.mxu0 0.0
        %1647 = vmatprep.subr.mxu0 0.0
        %1648 = vmatpush1.msra.mxu0 0.0
        %1649 = vmatprep.subr.mxu0 0.0
        %1650 = vmatpush1.msra.mxu0 0.0
        %1651 = vmatprep.subr.mxu0 0.0
        %1652 = vmatpush1.msra.mxu0 0.0
        %1653 = vmatprep.subr.mxu0 0.0
        %1654 = vmatpush1.msra.mxu0 0.0
        %1655 = vmatprep.subr.mxu0 0.0
        %1656 = vmatpush1.msra.mxu0 0.0
        %1657 = vmatprep.subr.mxu0 0.0
        %1658 = vmatpush1.msra.mxu0 0.0
        %1659 = vmatprep.subr.mxu0 0.0
        %1660 = vmatpush1.msra.mxu0 0.0
        %1661 = vmatprep.subr.mxu0 0.0
        %1662 = vmatpush1.msra.mxu0 0.0
        %1663 = vmatprep.subr.mxu0 0.0
        %1664 = vmatpush1.msra.mxu0 0.0
        %1665 = vmatprep.subr.mxu0 0.0
        %1666 = vmatpush1.msra.mxu0 0.0
        %1667 = vmatprep.mubr.f32.mxu0 0.0
        %1668 = vmatmul.mubr.f32.gmra.mrb[0].mxu0 %v1601
        %v1669 = vpop.f32.mrb[0].mxu0
        %v1670 = vadd.f32 0.0, %v1669
        %v1671 = vpop.f32.mrb[0].mxu0
        %1672 = vdwg.mxu0
        %v1673 = vrcp.pop %v1517
        %v1674 = vrcp.pop %v1520
        %v1675 = vmul.f32 %v1594, %v1673
        %v1676 = vmul.f32 %v1670, %v1674
        %1677 = vrot.lane.b32.xlu0 %v522, 104
        %v1678 = vpop.permute.xlu0 %1677
        %1679 = vrot.lane.b32.xlu0 %v601, 104
        %v1680 = vpop.permute.xlu0 %1679
        %v1681 = vsel %vm694, %v1678, 0
        %v1683 = vsel %vm694, %v1680, 0
        %1685 = vmatprep.subr.mxu0 0.0
        %1686 = vmatpush1.xpose.msra.mxu0 %v1683
        %1687 = vmatprep.subr.mxu0 0.0
        %1688 = vmatpush1.xpose.msra.mxu0 0.0
        %1689 = vmatprep.subr.mxu0 0.0
        %1690 = vmatpush1.xpose.msra.mxu0 0.0
        %1691 = vmatprep.subr.mxu0 0.0
        %1692 = vmatpush1.xpose.msra.mxu0 0.0
        %1693 = vmatprep.subr.mxu0 0.0
        %1694 = vmatpush1.xpose.msra.mxu0 0.0
        %1695 = vmatprep.subr.mxu0 0.0
        %1696 = vmatpush1.xpose.msra.mxu0 0.0
        %1697 = vmatprep.subr.mxu0 0.0
        %1698 = vmatpush1.xpose.msra.mxu0 0.0
        %1699 = vmatprep.subr.mxu0 0.0
        %1700 = vmatpush1.xpose.msra.mxu0 0.0
        %1701 = vmatprep.subr.mxu0 0.0
        %1702 = vmatpush1.xpose.msra.mxu0 0.0
        %1703 = vmatprep.subr.mxu0 0.0
        %1704 = vmatpush1.xpose.msra.mxu0 0.0
        %1705 = vmatprep.subr.mxu0 0.0
        %1706 = vmatpush1.xpose.msra.mxu0 0.0
        %1707 = vmatprep.subr.mxu0 0.0
        %1708 = vmatpush1.xpose.msra.mxu0 0.0
        %1709 = vmatprep.subr.mxu0 0.0
        %1710 = vmatpush1.xpose.msra.mxu0 0.0
        %1711 = vmatprep.subr.mxu0 0.0
        %1712 = vmatpush1.xpose.msra.mxu0 0.0
        %1713 = vmatprep.subr.mxu0 0.0
        %1714 = vmatpush1.xpose.msra.mxu0 0.0
        %1715 = vmatprep.subr.mxu0 0.0
        %1716 = vmatpush1.xpose.msra.mxu0 0.0
        %1717 = vmatprep.subr.mxu0 0.0
        %1718 = vmatpush1.xpose.msra.mxu0 0.0
        %1719 = vmatprep.subr.mxu0 0.0
        %1720 = vmatpush1.xpose.msra.mxu0 0.0
        %1721 = vmatprep.subr.mxu0 0.0
        %1722 = vmatpush1.xpose.msra.mxu0 0.0
        %1723 = vmatprep.subr.mxu0 0.0
        %1724 = vmatpush1.xpose.msra.mxu0 0.0
        %1725 = vmatprep.subr.mxu0 0.0
        %1726 = vmatpush1.xpose.msra.mxu0 0.0
        %1727 = vmatprep.subr.mxu0 0.0
        %1728 = vmatpush1.xpose.msra.mxu0 0.0
        %1729 = vmatprep.subr.mxu0 0.0
        %1730 = vmatpush1.xpose.msra.mxu0 0.0
        %1731 = vmatprep.subr.mxu0 0.0
        %1732 = vmatpush1.xpose.msra.mxu0 0.0
        %1733 = vmatprep.subr.mxu0 0.0
        %1734 = vmatpush1.xpose.msra.mxu0 0.0
        %1735 = vmatprep.subr.mxu0 0.0
        %1736 = vmatpush1.xpose.msra.mxu0 0.0
        %1737 = vmatprep.subr.mxu0 0.0
        %1738 = vmatpush1.xpose.msra.mxu0 0.0
        %1739 = vmatprep.subr.mxu0 0.0
        %1740 = vmatpush1.xpose.msra.mxu0 0.0
        %1741 = vmatprep.subr.mxu0 0.0
        %1742 = vmatpush1.xpose.msra.mxu0 0.0
        %1743 = vmatprep.subr.mxu0 0.0
        %1744 = vmatpush1.xpose.msra.mxu0 0.0
        %1745 = vmatprep.subr.mxu0 0.0
        %1746 = vmatpush1.xpose.msra.mxu0 0.0
        %1747 = vmatprep.subr.mxu0 0.0
        %1748 = vmatpush1.xpose.msra.mxu0 0.0
        %1749 = vmatprep.mubr.f32.mxu0 0.0
        %1750 = vmatmul.mubr.f32.gmra.mrb[0].mxu0 %v1681
        %v1751 = vpop.f32.mrb[0].mxu0
        %v1752 = vadd.f32 0.0, %v1751
        %v1753 = vpop.f32.mrb[0].mxu0
        %1754 = vdwg.mxu0
        %1755 = vrot.lane.b32.xlu0 %v523, 104
        %v1756 = vpop.permute.xlu0 %1755
        %1757 = vrot.lane.b32.xlu0 %v606, 104
        %v1758 = vpop.permute.xlu0 %1757
        %v1759 = vsel %vm694, %v1756, 0
        %v1761 = vsel %vm694, %v1758, 0
        %1763 = vmatprep.subr.mxu0 0.0
        %1764 = vmatpush1.xpose.msra.mxu0 %v1761
        %1765 = vmatprep.subr.mxu0 0.0
        %1766 = vmatpush1.xpose.msra.mxu0 0.0
        %1767 = vmatprep.subr.mxu0 0.0
        %1768 = vmatpush1.xpose.msra.mxu0 0.0
        %1769 = vmatprep.subr.mxu0 0.0
        %1770 = vmatpush1.xpose.msra.mxu0 0.0
        %1771 = vmatprep.subr.mxu0 0.0
        %1772 = vmatpush1.xpose.msra.mxu0 0.0
        %1773 = vmatprep.subr.mxu0 0.0
        %1774 = vmatpush1.xpose.msra.mxu0 0.0
        %1775 = vmatprep.subr.mxu0 0.0
        %1776 = vmatpush1.xpose.msra.mxu0 0.0
        %1777 = vmatprep.subr.mxu0 0.0
        %1778 = vmatpush1.xpose.msra.mxu0 0.0
        %1779 = vmatprep.subr.mxu0 0.0
        %1780 = vmatpush1.xpose.msra.mxu0 0.0
        %1781 = vmatprep.subr.mxu0 0.0
        %1782 = vmatpush1.xpose.msra.mxu0 0.0
        %1783 = vmatprep.subr.mxu0 0.0
        %1784 = vmatpush1.xpose.msra.mxu0 0.0
        %1785 = vmatprep.subr.mxu0 0.0
        %1786 = vmatpush1.xpose.msra.mxu0 0.0
        %1787 = vmatprep.subr.mxu0 0.0
        %1788 = vmatpush1.xpose.msra.mxu0 0.0
        %1789 = vmatprep.subr.mxu0 0.0
        %1790 = vmatpush1.xpose.msra.mxu0 0.0
        %1791 = vmatprep.subr.mxu0 0.0
        %1792 = vmatpush1.xpose.msra.mxu0 0.0
        %1793 = vmatprep.subr.mxu0 0.0
        %1794 = vmatpush1.xpose.msra.mxu0 0.0
        %1795 = vmatprep.subr.mxu0 0.0
        %1796 = vmatpush1.xpose.msra.mxu0 0.0
        %1797 = vmatprep.subr.mxu0 0.0
        %1798 = vmatpush1.xpose.msra.mxu0 0.0
        %1799 = vmatprep.subr.mxu0 0.0
        %1800 = vmatpush1.xpose.msra.mxu0 0.0
        %1801 = vmatprep.subr.mxu0 0.0
        %1802 = vmatpush1.xpose.msra.mxu0 0.0
        %1803 = vmatprep.subr.mxu0 0.0
        %1804 = vmatpush1.xpose.msra.mxu0 0.0
        %1805 = vmatprep.subr.mxu0 0.0
        %1806 = vmatpush1.xpose.msra.mxu0 0.0
        %1807 = vmatprep.subr.mxu0 0.0
        %1808 = vmatpush1.xpose.msra.mxu0 0.0
        %1809 = vmatprep.subr.mxu0 0.0
        %1810 = vmatpush1.xpose.msra.mxu0 0.0
        %1811 = vmatprep.subr.mxu0 0.0
        %1812 = vmatpush1.xpose.msra.mxu0 0.0
        %1813 = vmatprep.subr.mxu0 0.0
        %1814 = vmatpush1.xpose.msra.mxu0 0.0
        %1815 = vmatprep.subr.mxu0 0.0
        %1816 = vmatpush1.xpose.msra.mxu0 0.0
        %1817 = vmatprep.subr.mxu0 0.0
        %1818 = vmatpush1.xpose.msra.mxu0 0.0
        %1819 = vmatprep.subr.mxu0 0.0
        %1820 = vmatpush1.xpose.msra.mxu0 0.0
        %1821 = vmatprep.subr.mxu0 0.0
        %1822 = vmatpush1.xpose.msra.mxu0 0.0
        %1823 = vmatprep.subr.mxu0 0.0
        %1824 = vmatpush1.xpose.msra.mxu0 0.0
        %1825 = vmatprep.subr.mxu0 0.0
        %1826 = vmatpush1.xpose.msra.mxu0 0.0
        %1827 = vmatprep.mubr.f32.mxu0 0.0
        %1828 = vmatmul.mubr.f32.gmra.mrb[0].mxu0 %v1759
        %v1829 = vpop.f32.mrb[0].mxu0
        %v1830 = vadd.f32 0.0, %v1829
        %v1831 = vpop.f32.mrb[0].mxu0
        %1832 = vdwg.mxu0
        %v1833 = vsel %vm694, %v1752, -inf
        %1834 = vmax.xlane.f32.xlu0 %v1833
        %v1835 = vpop.xlane.xlu0 %1834
        %v1836 = vsel %vm694, %v1830, -inf
        %1837 = vmax.xlane.f32.xlu0 %v1836
        %v1838 = vpop.xlane.xlu0 %1837
        %v1839 = vsub.f32 %v1752, %v1835
        %v1840 = vsub.f32 %v1830, %v1838
        %v1841 = vmul.f32 %v1839, 1.442695
        %v1842 = vpow.pop %v1841
        %v1843 = vmul.f32 %v1840, 1.442695
        %v1844 = vpow.pop %v1843
        %v1845 = vsel %vm694, %v1842, 0.0
        %1846 = vadd.xlane.f32.xlu0 %v1845
        %v1847 = vpop.xlane.xlu0 %1846
        %v1848 = vsel %vm694, %v1844, 0.0
        %1849 = vadd.xlane.f32.xlu0 %v1848
        %v1850 = vpop.xlane.xlu0 %1849
        %1851 = vrot.lane.b32.xlu0 %v686, 104
        %v1852 = vpop.permute.xlu0 %1851
        %v1855 = vsel %vm694, %v1842, 0
        %1857 = vmatprep.subr.mxu0 0.0
        %1858 = vmatpush1.msra.mxu0 %v1852
        %1859 = vmatprep.subr.mxu0 0.0
        %1860 = vmatpush1.msra.mxu0 0.0
        %1861 = vmatprep.subr.mxu0 0.0
        %1862 = vmatpush1.msra.mxu0 0.0
        %1863 = vmatprep.subr.mxu0 0.0
        %1864 = vmatpush1.msra.mxu0 0.0
        %1865 = vmatprep.subr.mxu0 0.0
        %1866 = vmatpush1.msra.mxu0 0.0
        %1867 = vmatprep.subr.mxu0 0.0
        %1868 = vmatpush1.msra.mxu0 0.0
        %1869 = vmatprep.subr.mxu0 0.0
        %1870 = vmatpush1.msra.mxu0 0.0
        %1871 = vmatprep.subr.mxu0 0.0
        %1872 = vmatpush1.msra.mxu0 0.0
        %1873 = vmatprep.subr.mxu0 0.0
        %1874 = vmatpush1.msra.mxu0 0.0
        %1875 = vmatprep.subr.mxu0 0.0
        %1876 = vmatpush1.msra.mxu0 0.0
        %1877 = vmatprep.subr.mxu0 0.0
        %1878 = vmatpush1.msra.mxu0 0.0
        %1879 = vmatprep.subr.mxu0 0.0
        %1880 = vmatpush1.msra.mxu0 0.0
        %1881 = vmatprep.subr.mxu0 0.0
        %1882 = vmatpush1.msra.mxu0 0.0
        %1883 = vmatprep.subr.mxu0 0.0
        %1884 = vmatpush1.msra.mxu0 0.0
        %1885 = vmatprep.subr.mxu0 0.0
        %1886 = vmatpush1.msra.mxu0 0.0
        %1887 = vmatprep.subr.mxu0 0.0
        %1888 = vmatpush1.msra.mxu0 0.0
        %1889 = vmatprep.subr.mxu0 0.0
        %1890 = vmatpush1.msra.mxu0 0.0
        %1891 = vmatprep.subr.mxu0 0.0
        %1892 = vmatpush1.msra.mxu0 0.0
        %1893 = vmatprep.subr.mxu0 0.0
        %1894 = vmatpush1.msra.mxu0 0.0
        %1895 = vmatprep.subr.mxu0 0.0
        %1896 = vmatpush1.msra.mxu0 0.0
        %1897 = vmatprep.subr.mxu0 0.0
        %1898 = vmatpush1.msra.mxu0 0.0
        %1899 = vmatprep.subr.mxu0 0.0
        %1900 = vmatpush1.msra.mxu0 0.0
        %1901 = vmatprep.subr.mxu0 0.0
        %1902 = vmatpush1.msra.mxu0 0.0
        %1903 = vmatprep.subr.mxu0 0.0
        %1904 = vmatpush1.msra.mxu0 0.0
        %1905 = vmatprep.subr.mxu0 0.0
        %1906 = vmatpush1.msra.mxu0 0.0
        %1907 = vmatprep.subr.mxu0 0.0
        %1908 = vmatpush1.msra.mxu0 0.0
        %1909 = vmatprep.subr.mxu0 0.0
        %1910 = vmatpush1.msra.mxu0 0.0
        %1911 = vmatprep.subr.mxu0 0.0
        %1912 = vmatpush1.msra.mxu0 0.0
        %1913 = vmatprep.subr.mxu0 0.0
        %1914 = vmatpush1.msra.mxu0 0.0
        %1915 = vmatprep.subr.mxu0 0.0
        %1916 = vmatpush1.msra.mxu0 0.0
        %1917 = vmatprep.subr.mxu0 0.0
        %1918 = vmatpush1.msra.mxu0 0.0
        %1919 = vmatprep.subr.mxu0 0.0
        %1920 = vmatpush1.msra.mxu0 0.0
        %1921 = vmatprep.mubr.f32.mxu0 0.0
        %1922 = vmatmul.mubr.f32.gmra.mrb[0].mxu0 %v1855
        %v1923 = vpop.f32.mrb[0].mxu0
        %v1924 = vadd.f32 0.0, %v1923
        %v1925 = vpop.f32.mrb[0].mxu0
        %1926 = vdwg.mxu0
        %1927 = vrot.lane.b32.xlu0 %v691, 104
        %v1928 = vpop.permute.xlu0 %1927
        %v1931 = vsel %vm694, %v1844, 0
        %1933 = vmatprep.subr.mxu0 0.0
        %1934 = vmatpush1.msra.mxu0 %v1928
        %1935 = vmatprep.subr.mxu0 0.0
        %1936 = vmatpush1.msra.mxu0 0.0
        %1937 = vmatprep.subr.mxu0 0.0
        %1938 = vmatpush1.msra.mxu0 0.0
        %1939 = vmatprep.subr.mxu0 0.0
        %1940 = vmatpush1.msra.mxu0 0.0
        %1941 = vmatprep.subr.mxu0 0.0
        %1942 = vmatpush1.msra.mxu0 0.0
        %1943 = vmatprep.subr.mxu0 0.0
        %1944 = vmatpush1.msra.mxu0 0.0
        %1945 = vmatprep.subr.mxu0 0.0
        %1946 = vmatpush1.msra.mxu0 0.0
        %1947 = vmatprep.subr.mxu0 0.0
        %1948 = vmatpush1.msra.mxu0 0.0
        %1949 = vmatprep.subr.mxu0 0.0
        %1950 = vmatpush1.msra.mxu0 0.0
        %1951 = vmatprep.subr.mxu0 0.0
        %1952 = vmatpush1.msra.mxu0 0.0
        %1953 = vmatprep.subr.mxu0 0.0
        %1954 = vmatpush1.msra.mxu0 0.0
        %1955 = vmatprep.subr.mxu0 0.0
        %1956 = vmatpush1.msra.mxu0 0.0
        %1957 = vmatprep.subr.mxu0 0.0
        %1958 = vmatpush1.msra.mxu0 0.0
        %1959 = vmatprep.subr.mxu0 0.0
        %1960 = vmatpush1.msra.mxu0 0.0
        %1961 = vmatprep.subr.mxu0 0.0
        %1962 = vmatpush1.msra.mxu0 0.0
        %1963 = vmatprep.subr.mxu0 0.0
        %1964 = vmatpush1.msra.mxu0 0.0
        %1965 = vmatprep.subr.mxu0 0.0
        %1966 = vmatpush1.msra.mxu0 0.0
        %1967 = vmatprep.subr.mxu0 0.0
        %1968 = vmatpush1.msra.mxu0 0.0
        %1969 = vmatprep.subr.mxu0 0.0
        %1970 = vmatpush1.msra.mxu0 0.0
        %1971 = vmatprep.subr.mxu0 0.0
        %1972 = vmatpush1.msra.mxu0 0.0
        %1973 = vmatprep.subr.mxu0 0.0
        %1974 = vmatpush1.msra.mxu0 0.0
        %1975 = vmatprep.subr.mxu0 0.0
        %1976 = vmatpush1.msra.mxu0 0.0
        %1977 = vmatprep.subr.mxu0 0.0
        %1978 = vmatpush1.msra.mxu0 0.0
        %1979 = vmatprep.subr.mxu0 0.0
        %1980 = vmatpush1.msra.mxu0 0.0
        %1981 = vmatprep.subr.mxu0 0.0
        %1982 = vmatpush1.msra.mxu0 0.0
        %1983 = vmatprep.subr.mxu0 0.0
        %1984 = vmatpush1.msra.mxu0 0.0
        %1985 = vmatprep.subr.mxu0 0.0
        %1986 = vmatpush1.msra.mxu0 0.0
        %1987 = vmatprep.subr.mxu0 0.0
        %1988 = vmatpush1.msra.mxu0 0.0
        %1989 = vmatprep.subr.mxu0 0.0
        %1990 = vmatpush1.msra.mxu0 0.0
        %1991 = vmatprep.subr.mxu0 0.0
        %1992 = vmatpush1.msra.mxu0 0.0
        %1993 = vmatprep.subr.mxu0 0.0
        %1994 = vmatpush1.msra.mxu0 0.0
        %1995 = vmatprep.subr.mxu0 0.0
        %1996 = vmatpush1.msra.mxu0 0.0
        %1997 = vmatprep.mubr.f32.mxu0 0.0
        %1998 = vmatmul.mubr.f32.gmra.mrb[0].mxu0 %v1931
        %v1999 = vpop.f32.mrb[0].mxu0
        %v2000 = vadd.f32 0.0, %v1999
        %v2001 = vpop.f32.mrb[0].mxu0
        %2002 = vdwg.mxu0
        %v2003 = vrcp.pop %v1847
        %v2004 = vrcp.pop %v1850
        %v2005 = vmul.f32 %v1924, %v2003
        %v2006 = vmul.f32 %v2000, %v2004
        %2009 = vrot.lane.b32.xlu0 %v1345, 8
        %v2010 = vpop.permute.xlu0 %2009
        %2011 = vrot.lane.b32.xlu0 %v1346, 8
        %v2012 = vpop.permute.xlu0 %2011
        %2017 = vrot.lane.b32.xlu0 %v1675, 16
        %v2018 = vpop.permute.xlu0 %2017
        %2019 = vrot.lane.b32.xlu0 %v1676, 16
        %v2020 = vpop.permute.xlu0 %2019
        %2025 = vrot.lane.b32.xlu0 %v2005, 24
        %v2026 = vpop.permute.xlu0 %2025
        %2027 = vrot.lane.b32.xlu0 %v2006, 24
        %v2028 = vpop.permute.xlu0 %2027
        %v2031 = vsel %vm694, %v1013, %v2010
        %v2032 = vsel %vm694, %v1014, %v2012
        %vm2033 = vcmask 130048
        %v2034 = vsel %vm2033, %v2031, %v2018
        %v2035 = vsel %vm2033, %v2032, %v2020
        %vm2036 = vcmask 195584
        %v2037 = vsel %vm2036, %v2034, %v2026
        %v2038 = vsel %vm2036, %v2035, %v2028
        %v2039 = vlaneseq
        %v2040 = vshrl.u32 %v2039, 7
        %v2041 = vsub.s32 0, %v2040
        %v2042 = vrot.slane %v304, %v2041
        %v2044 = vsel %vm337, %v2037, 0
        %v2047 = vsel %vm337, %v2038, 0
        %2049 = vmatprep.subr.mxu0 0.0
        %2050 = vmatpush1.msra.mxu0 %v297
        %2051 = vmatprep.subr.mxu0 0.0
        %2052 = vmatpush1.msra.mxu0 %v298
        %2053 = vmatprep.subr.mxu0 0.0
        %2054 = vmatpush1.msra.mxu0 %v299
        %2055 = vmatprep.subr.mxu0 0.0
        %2056 = vmatpush1.msra.mxu0 %v300
        %2057 = vmatprep.subr.mxu0 0.0
        %2058 = vmatpush1.msra.mxu0 0.0
        %2059 = vmatprep.subr.mxu0 0.0
        %2060 = vmatpush1.msra.mxu0 0.0
        %2061 = vmatprep.subr.mxu0 0.0
        %2062 = vmatpush1.msra.mxu0 0.0
        %2063 = vmatprep.subr.mxu0 0.0
        %2064 = vmatpush1.msra.mxu0 0.0
        %2065 = vmatprep.subr.mxu0 0.0
        %2066 = vmatpush1.msra.mxu0 0.0
        %2067 = vmatprep.subr.mxu0 0.0
        %2068 = vmatpush1.msra.mxu0 0.0
        %2069 = vmatprep.subr.mxu0 0.0
        %2070 = vmatpush1.msra.mxu0 0.0
        %2071 = vmatprep.subr.mxu0 0.0
        %2072 = vmatpush1.msra.mxu0 0.0
        %2073 = vmatprep.subr.mxu0 0.0
        %2074 = vmatpush1.msra.mxu0 0.0
        %2075 = vmatprep.subr.mxu0 0.0
        %2076 = vmatpush1.msra.mxu0 0.0
        %2077 = vmatprep.subr.mxu0 0.0
        %2078 = vmatpush1.msra.mxu0 0.0
        %2079 = vmatprep.subr.mxu0 0.0
        %2080 = vmatpush1.msra.mxu0 0.0
        %2081 = vmatprep.subr.mxu0 0.0
        %2082 = vmatpush1.msra.mxu0 0.0
        %2083 = vmatprep.subr.mxu0 0.0
        %2084 = vmatpush1.msra.mxu0 0.0
        %2085 = vmatprep.subr.mxu0 0.0
        %2086 = vmatpush1.msra.mxu0 0.0
        %2087 = vmatprep.subr.mxu0 0.0
        %2088 = vmatpush1.msra.mxu0 0.0
        %2089 = vmatprep.subr.mxu0 0.0
        %2090 = vmatpush1.msra.mxu0 0.0
        %2091 = vmatprep.subr.mxu0 0.0
        %2092 = vmatpush1.msra.mxu0 0.0
        %2093 = vmatprep.subr.mxu0 0.0
        %2094 = vmatpush1.msra.mxu0 0.0
        %2095 = vmatprep.subr.mxu0 0.0
        %2096 = vmatpush1.msra.mxu0 0.0
        %2097 = vmatprep.subr.mxu0 0.0
        %2098 = vmatpush1.msra.mxu0 0.0
        %2099 = vmatprep.subr.mxu0 0.0
        %2100 = vmatpush1.msra.mxu0 0.0
        %2101 = vmatprep.subr.mxu0 0.0
        %2102 = vmatpush1.msra.mxu0 0.0
        %2103 = vmatprep.subr.mxu0 0.0
        %2104 = vmatpush1.msra.mxu0 0.0
        %2105 = vmatprep.subr.mxu0 0.0
        %2106 = vmatpush1.msra.mxu0 0.0
        %2107 = vmatprep.subr.mxu0 0.0
        %2108 = vmatpush1.msra.mxu0 0.0
        %2109 = vmatprep.subr.mxu0 0.0
        %2110 = vmatpush1.msra.mxu0 0.0
        %2111 = vmatprep.subr.mxu0 0.0
        %2112 = vmatpush1.msra.mxu0 0.0
        %2113 = vmatprep.mubr.f32.mxu0 0.0
        %2114 = vmatmul.mubr.f32.gmra.mrb[0].mxu0 %v2044
        %v2115 = vpop.f32.mrb[0].mxu0
        %v2116 = vadd.f32 %v2042, %v2115
        %v2117 = vpop.f32.mrb[0].mxu0
        %2118 = vmatprep.mubr.f32.mxu0 0.0
        %2119 = vmatmul.mubr.f32.gmra.mrb[0].mxu0 %v2047
        %v2120 = vpop.f32.mrb[0].mxu0
        %v2121 = vadd.f32 %v2042, %v2120
        %v2122 = vpop.f32.mrb[0].mxu0
        %2123 = vdwg.mxu0
        %v2124 = vadd.f32 %v335, %v2116
        %v2125 = vadd.f32 %v336, %v2121
        %v2126 = vsel %vm337, %v2124, 0.0
        %2127 = vadd.xlane.f32.xlu0 %v2126
        %v2128 = vpop.xlane.xlu0 %2127
        %v2129 = vsel %vm337, %v2125, 0.0
        %2130 = vadd.xlane.f32.xlu0 %v2129
        %v2131 = vpop.xlane.xlu0 %2130
        %v2132 = vmul.f32 %v2128, %v356
        %v2133 = vmul.f32 %v2131, %v356
        %v2134 = vsub.f32 %v2124, %v2132
        %v2135 = vsub.f32 %v2125, %v2133
        %v2136 = vmul.f32 %v2134, %v2134
        %v2137 = vmul.f32 %v2135, %v2135
        %v2138 = vsel %vm337, %v2136, 0.0
        %2139 = vadd.xlane.f32.xlu0 %v2138
        %v2140 = vpop.xlane.xlu0 %2139
        %v2141 = vsel %vm337, %v2137, 0.0
        %2142 = vadd.xlane.f32.xlu0 %v2141
        %v2143 = vpop.xlane.xlu0 %2142
        %v2144 = vmul.f32 %v2140, %v356
        %v2145 = vmul.f32 %v2143, %v356
        %v2146 = vadd.f32 %v2144, 1e-06
        %v2147 = vadd.f32 %v2145, 1e-06
        %v2148 = vrsqrt.pop %v2146
        %v2149 = vrsqrt.pop %v2147
        %v2150 = vmul.f32 %v2134, %v2148
        %v2151 = vmul.f32 %v2135, %v2149
        %v2152 = vlaneseq
        %v2153 = vshrl.u32 %v2152, 7
        %v2154 = vsub.s32 0, %v2153
        %v2155 = vrot.slane %v305, %v2154
        %v2156 = vmul.f32 %v2150, %v2155
        %v2157 = vmul.f32 %v2151, %v2155
        %v2158 = vlaneseq
        %v2159 = vshrl.u32 %v2158, 7
        %v2160 = vsub.s32 0, %v2159
        %v2161 = vrot.slane %v306, %v2160
        %v2162 = vadd.f32 %v2156, %v2161
        %v2163 = vadd.f32 %v2157, %v2161
        %v2164 = vlaneseq
        %v2165 = vshrl.u32 %v2164, 7
        %v2166 = vsub.s32 0, %v2165
        %v2167 = vrot.slane %v330, %v2166
        %v2169 = vsel %vm337, %v2162, 0
        %v2172 = vsel %vm337, %v2163, 0
        %2174 = vmatprep.subr.mxu0 0.0
        %2175 = vmatpush1.msra.mxu0 %v326
        %2176 = vmatprep.subr.mxu0 0.0
        %2177 = vmatpush1.msra.mxu0 %v327
        %2178 = vmatprep.subr.mxu0 0.0
        %2179 = vmatpush1.msra.mxu0 %v328
        %2180 = vmatprep.subr.mxu0 0.0
        %2181 = vmatpush1.msra.mxu0 %v329
        %2182 = vmatprep.subr.mxu0 0.0
        %2183 = vmatpush1.msra.mxu0 0.0
        %2184 = vmatprep.subr.mxu0 0.0
        %2185 = vmatpush1.msra.mxu0 0.0
        %2186 = vmatprep.subr.mxu0 0.0
        %2187 = vmatpush1.msra.mxu0 0.0
        %2188 = vmatprep.subr.mxu0 0.0
        %2189 = vmatpush1.msra.mxu0 0.0
        %2190 = vmatprep.subr.mxu0 0.0
        %2191 = vmatpush1.msra.mxu0 0.0
        %2192 = vmatprep.subr.mxu0 0.0
        %2193 = vmatpush1.msra.mxu0 0.0
        %2194 = vmatprep.subr.mxu0 0.0
        %2195 = vmatpush1.msra.mxu0 0.0
        %2196 = vmatprep.subr.mxu0 0.0
        %2197 = vmatpush1.msra.mxu0 0.0
        %2198 = vmatprep.subr.mxu0 0.0
        %2199 = vmatpush1.msra.mxu0 0.0
        %2200 = vmatprep.subr.mxu0 0.0
        %2201 = vmatpush1.msra.mxu0 0.0
        %2202 = vmatprep.subr.mxu0 0.0
        %2203 = vmatpush1.msra.mxu0 0.0
        %2204 = vmatprep.subr.mxu0 0.0
        %2205 = vmatpush1.msra.mxu0 0.0
        %2206 = vmatprep.subr.mxu0 0.0
        %2207 = vmatpush1.msra.mxu0 0.0
        %2208 = vmatprep.subr.mxu0 0.0
        %2209 = vmatpush1.msra.mxu0 0.0
        %2210 = vmatprep.subr.mxu0 0.0
        %2211 = vmatpush1.msra.mxu0 0.0
        %2212 = vmatprep.subr.mxu0 0.0
        %2213 = vmatpush1.msra.mxu0 0.0
        %2214 = vmatprep.subr.mxu0 0.0
        %2215 = vmatpush1.msra.mxu0 0.0
        %2216 = vmatprep.subr.mxu0 0.0
        %2217 = vmatpush1.msra.mxu0 0.0
        %2218 = vmatprep.subr.mxu0 0.0
        %2219 = vmatpush1.msra.mxu0 0.0
        %2220 = vmatprep.subr.mxu0 0.0
        %2221 = vmatpush1.msra.mxu0 0.0
        %2222 = vmatprep.subr.mxu0 0.0
        %2223 = vmatpush1.msra.mxu0 0.0
        %2224 = vmatprep.subr.mxu0 0.0
        %2225 = vmatpush1.msra.mxu0 0.0
        %2226 = vmatprep.subr.mxu0 0.0
        %2227 = vmatpush1.msra.mxu0 0.0
        %2228 = vmatprep.subr.mxu0 0.0
        %2229 = vmatpush1.msra.mxu0 0.0
        %2230 = vmatprep.subr.mxu0 0.0
        %2231 = vmatpush1.msra.mxu0 0.0
        %2232 = vmatprep.subr.mxu0 0.0
        %2233 = vmatpush1.msra.mxu0 0.0
        %2234 = vmatprep.subr.mxu0 0.0
        %2235 = vmatpush1.msra.mxu0 0.0
        %2236 = vmatprep.subr.mxu0 0.0
        %2237 = vmatpush1.msra.mxu0 0.0
        %2238 = vmatprep.mubr.f32.mxu0 0.0
        %2239 = vmatmul.mubr.f32.gmra.mrb[0].mxu0 %v2169
        %v2240 = vpop.f32.mrb[0].mxu0
        %v2241 = vadd.f32 %v2167, %v2240
        %v2242 = vpop.f32.mrb[0].mxu0
        %2243 = vmatprep.mubr.f32.mxu0 0.0
        %2244 = vmatmul.mubr.f32.gmra.mrb[0].mxu0 %v2172
        %v2245 = vpop.f32.mrb[0].mxu0
        %v2246 = vadd.f32 %v2167, %v2245
        %v2247 = vpop.f32.mrb[0].mxu0
        %2248 = vdwg.mxu0
        %v2249 = vmul.f32 %v2241, 0.5
        %v2250 = vmul.f32 %v2246, 0.5
        %v2251 = vmul.f32 %v2241, 0.70710677
        %v2252 = vmul.f32 %v2246, 0.70710677
        %v2253 = vand.u32 2147483647, %v2251
        %v2254 = vand.u32 2147483647, %v2252
        %v2255 = vmul.f32 %v2253, 0.3275911
        %v2256 = vmul.f32 %v2254, 0.3275911
        %v2257 = vadd.f32 %v2255, 1.0
        %v2258 = vadd.f32 %v2256, 1.0
        %v2259 = vrcp.pop %v2257
        %v2260 = vmul.f32 1.0, %v2259
        %v2261 = vrcp.pop %v2258
        %v2262 = vmul.f32 1.0, %v2261
        %v2263 = vmul.f32 %v2260, 1.0614054
        %v2264 = vmul.f32 %v2262, 1.0614054
        %v2265 = vadd.f32 %v2263, -1.4531521
        %v2266 = vadd.f32 %v2264, -1.4531521
        %v2267 = vmul.f32 %v2265, %v2260
        %v2268 = vmul.f32 %v2266, %v2262
        %v2269 = vadd.f32 %v2267, 1.4214138
        %v2270 = vadd.f32 %v2268, 1.4214138
        %v2271 = vmul.f32 %v2269, %v2260
        %v2272 = vmul.f32 %v2270, %v2262
        %v2273 = vadd.f32 %v2271, -0.28449672
        %v2274 = vadd.f32 %v2272, -0.28449672
        %v2275 = vmul.f32 %v2273, %v2260
        %v2276 = vmul.f32 %v2274, %v2262
        %v2277 = vadd.f32 %v2275, 0.2548296
        %v2278 = vadd.f32 %v2276, 0.2548296
        %v2279 = vmul.f32 %v2277, %v2260
        %v2280 = vmul.f32 %v2278, %v2262
        %v2281 = vsub.f32 0.0, %v2253
        %v2282 = vsub.f32 0.0, %v2254
        %v2283 = vmul.f32 %v2281, %v2253
        %v2284 = vmul.f32 %v2282, %v2254
        %v2285 = vmul.f32 %v2283, 1.442695
        %v2286 = vpow.pop %v2285
        %v2287 = vmul.f32 %v2284, 1.442695
        %v2288 = vpow.pop %v2287
        %v2289 = vmul.f32 %v2279, %v2286
        %v2290 = vmul.f32 %v2280, %v2288
        %v2291 = vsub.f32 1.0, %v2289
        %v2292 = vsub.f32 1.0, %v2290
        %vm2293 = vcmp.ge.f32.partialorder %v2251, 0.0
        %vm2294 = vcmp.ge.f32.partialorder %v2252, 0.0
        %v2295 = vsub.f32 0.0, %v2291
        %v2296 = vsub.f32 0.0, %v2292
        %v2297 = vsel %vm2293, %v2291, %v2295
        %v2298 = vsel %vm2294, %v2292, %v2296
        %v2299 = vadd.f32 %v2297, 1.0
        %v2300 = vadd.f32 %v2298, 1.0
        %v2301 = vmul.f32 %v2249, %v2299
        %v2302 = vmul.f32 %v2250, %v2300
        %2303 = vmatprep.subr.mxu0 0.0
        %2304 = vmatpush1.msra.mxu0 %v307
        %2305 = vmatprep.subr.mxu0 0.0
        %2306 = vmatpush1.msra.mxu0 %v308
        %2307 = vmatprep.subr.mxu0 0.0
        %2308 = vmatpush1.msra.mxu0 %v309
        %2309 = vmatprep.subr.mxu0 0.0
        %2310 = vmatpush1.msra.mxu0 %v310
        %2311 = vmatprep.subr.mxu0 0.0
        %2312 = vmatpush1.msra.mxu0 %v311
        %2313 = vmatprep.subr.mxu0 0.0
        %2314 = vmatpush1.msra.mxu0 %v312
        %2315 = vmatprep.subr.mxu0 0.0
        %2316 = vmatpush1.msra.mxu0 %v313
        %2317 = vmatprep.subr.mxu0 0.0
        %2318 = vmatpush1.msra.mxu0 %v314
        %2319 = vmatprep.subr.mxu0 0.0
        %2320 = vmatpush1.msra.mxu0 %v315
        %2321 = vmatprep.subr.mxu0 0.0
        %2322 = vmatpush1.msra.mxu0 %v316
        %2323 = vmatprep.subr.mxu0 0.0
        %2324 = vmatpush1.msra.mxu0 %v317
        %2325 = vmatprep.subr.mxu0 0.0
        %2326 = vmatpush1.msra.mxu0 %v318
        %2327 = vmatprep.subr.mxu0 0.0
        %2328 = vmatpush1.msra.mxu0 %v319
        %2329 = vmatprep.subr.mxu0 0.0
        %2330 = vmatpush1.msra.mxu0 %v320
        %2331 = vmatprep.subr.mxu0 0.0
        %2332 = vmatpush1.msra.mxu0 %v321
        %2333 = vmatprep.subr.mxu0 0.0
        %2334 = vmatpush1.msra.mxu0 %v322
        %2335 = vmatprep.subr.mxu0 0.0
        %2336 = vmatpush1.msra.mxu0 0.0
        %2337 = vmatprep.subr.mxu0 0.0
        %2338 = vmatpush1.msra.mxu0 0.0
        %2339 = vmatprep.subr.mxu0 0.0
        %2340 = vmatpush1.msra.mxu0 0.0
        %2341 = vmatprep.subr.mxu0 0.0
        %2342 = vmatpush1.msra.mxu0 0.0
        %2343 = vmatprep.subr.mxu0 0.0
        %2344 = vmatpush1.msra.mxu0 0.0
        %2345 = vmatprep.subr.mxu0 0.0
        %2346 = vmatpush1.msra.mxu0 0.0
        %2347 = vmatprep.subr.mxu0 0.0
        %2348 = vmatpush1.msra.mxu0 0.0
        %2349 = vmatprep.subr.mxu0 0.0
        %2350 = vmatpush1.msra.mxu0 0.0
        %2351 = vmatprep.subr.mxu0 0.0
        %2352 = vmatpush1.msra.mxu0 0.0
        %2353 = vmatprep.subr.mxu0 0.0
        %2354 = vmatpush1.msra.mxu0 0.0
        %2355 = vmatprep.subr.mxu0 0.0
        %2356 = vmatpush1.msra.mxu0 0.0
        %2357 = vmatprep.subr.mxu0 0.0
        %2358 = vmatpush1.msra.mxu0 0.0
        %2359 = vmatprep.subr.mxu0 0.0
        %2360 = vmatpush1.msra.mxu0 0.0
        %2361 = vmatprep.subr.mxu0 0.0
        %2362 = vmatpush1.msra.mxu0 0.0
        %2363 = vmatprep.subr.mxu0 0.0
        %2364 = vmatpush1.msra.mxu0 0.0
        %2365 = vmatprep.subr.mxu0 0.0
        %2366 = vmatpush1.msra.mxu0 0.0
        %2367 = vmatprep.mubr.f32.mxu0 0.0
        %2368 = vmatmul.mubr.f32.gmra.mrb[0].mxu0 %v2301
        %v2369 = vpop.f32.mrb[0].mxu0
        %v2370 = vadd.f32 0.0, %v2369
        %v2371 = vpop.f32.mrb[0].mxu0
        %2372 = vmatprep.mubr.f32.mxu0 0.0
        %2373 = vmatmul.mubr.f32.gmra.mrb[0].mxu0 %v2302
        %v2374 = vpop.f32.mrb[0].mxu0
        %v2375 = vadd.f32 0.0, %v2374
        %v2376 = vpop.f32.mrb[0].mxu0
        %2377 = vdwg.mxu0
        %v2378 = vadd.f32 %v2124, %v2370
        %v2379 = vadd.f32 %v2125, %v2375
        %v2380 = vlaneseq
        %v2381 = vshrl.u32 %v2380, 7
        %v2382 = vsub.s32 0, %v2381
        %v2383 = vrot.slane %v323, %v2382
        %v2384 = vadd.f32 %v2378, %v2383
        %v2385 = vadd.f32 %v2379, %v2383
        %v2386 = vsel %vm337, %v2384, 0.0
        %2387 = vadd.xlane.f32.xlu0 %v2386
        %v2388 = vpop.xlane.xlu0 %2387
        %v2389 = vsel %vm337, %v2385, 0.0
        %2390 = vadd.xlane.f32.xlu0 %v2389
        %v2391 = vpop.xlane.xlu0 %2390
        %v2392 = vmul.f32 %v2388, %v356
        %v2393 = vmul.f32 %v2391, %v356
        %v2394 = vsub.f32 %v2384, %v2392
        %v2395 = vsub.f32 %v2385, %v2393
        %v2396 = vmul.f32 %v2394, %v2394
        %v2397 = vmul.f32 %v2395, %v2395
        %v2398 = vsel %vm337, %v2396, 0.0
        %2399 = vadd.xlane.f32.xlu0 %v2398
        %v2400 = vpop.xlane.xlu0 %2399
        %v2401 = vsel %vm337, %v2397, 0.0
        %2402 = vadd.xlane.f32.xlu0 %v2401
        %v2403 = vpop.xlane.xlu0 %2402
        %v2404 = vmul.f32 %v2400, %v356
        %v2405 = vmul.f32 %v2403, %v356
        %v2406 = vadd.f32 %v2404, 1e-06
        %v2407 = vadd.f32 %v2405, 1e-06
        %v2408 = vrsqrt.pop %v2406
        %v2409 = vrsqrt.pop %v2407
        %v2410 = vmul.f32 %v2394, %v2408
        %v2411 = vmul.f32 %v2395, %v2409
        %v2412 = vlaneseq
        %v2413 = vshrl.u32 %v2412, 7
        %v2414 = vsub.s32 0, %v2413
        %v2415 = vrot.slane %v324, %v2414
        %v2416 = vmul.f32 %v2410, %v2415
        %v2417 = vmul.f32 %v2411, %v2415
        %v2418 = vlaneseq
        %v2419 = vshrl.u32 %v2418, 7
        %v2420 = vsub.s32 0, %v2419
        %v2421 = vrot.slane %v325, %v2420
        %v2422 = vadd.f32 %v2416, %v2421
        %v2423 = vadd.f32 %v2417, %v2421
        %p2424 = scmp.eq.s32.totalorder %s21, 1
        // Predicated region
        $region41: #{tpu_custom_call.1} parent=35 // pred_check
          %p2425 = pneg %p2424
        $region42: #{tpu_custom_call.1} parent=35 // pred_check_branch
          %2427 = sbr.rel (%p2425) target = $region44
        $region43: #{tpu_custom_call.1} parent=35 // pred_region
          %2428 = vst.msk [vmem:[#allocation3] sm:$0xff] %vm337, %v2422
          %2429 = vst.msk [vmem:[#allocation3 + $0x8] sm:$0xff] %vm337, %v2423
        $region44: #{tpu_custom_call.1} parent=35 // pred_fallthru
          _
        %p2430 = scmp.ne.s32.totalorder %s21, 1
        // Predicated region
        $region45: #{tpu_custom_call.1} parent=35 // pred_check
          %p2431 = pneg %p2430
        $region46: #{tpu_custom_call.1} parent=35 // pred_check_branch
          %2433 = sbr.rel (%p2431) target = $region48
        $region47: #{tpu_custom_call.1} parent=35 // pred_region
          %2434 = vst.msk [vmem:[#allocation2] sm:$0xff] %vm337, %v431
          %2435 = vst.msk [vmem:[#allocation2 + $0x8] sm:$0xff] %vm337, %v432
          %2436 = vst.msk [vmem:[#allocation2 + $0x10] sm:$0xff] %vm337, %v2384
          %2437 = vst.msk [vmem:[#allocation2 + $0x18] sm:$0xff] %vm337, %v2385
          %2438 = vst.msk [vmem:[#allocation2 + $0x20] sm:$0xff] %vm337, %v2422
          %2439 = vst.msk [vmem:[#allocation2 + $0x28] sm:$0xff] %vm337, %v2423
        $region48: #{tpu_custom_call.1} parent=35 // pred_fallthru
          _
        // Predicated region
        $region49: #{tpu_custom_call.1} parent=35 // pred_check
          %p2440 = pneg %p150
        $region50: #{tpu_custom_call.1} parent=35 // pred_check_branch
          %2442 = sbr.rel (%p2440) target = $region52
        $region51: #{tpu_custom_call.1} parent=35 // pred_region
          %s2443 = smul.u32 2, %s20
          %s2445 = ssub.s32 256, 256
          %2446 = vsyncadd [#allocation4], %s2445
          %s2447 = smul.addr %s2443, 128
          %s2448 = scalar_lea.hbm %s4, %s2447
          %s2449 = sshll.u32 [#allocation3], 4
          %s2450 = int_to_ptr.vmem [resolvable:$true] %s2449
          %2455 = dma.vmem_to_hbm [thread:$0]  %s2450, 256, %s2448, [#allocation4], 128, 128, 8
        $region52: #{tpu_custom_call.1} parent=35 // pred_fallthru
          _
        // Predicated region
        $region53: #{tpu_custom_call.1} parent=35 // pred_check
          %p2456 = pneg %p150
        $region54: #{tpu_custom_call.1} parent=35 // pred_check_branch
          %2458 = sbr.rel (%p2456) target = $region56
        $region55: #{tpu_custom_call.1} parent=35 // pred_region
          %2459 = dma.done [#allocation4], 256
        $region56: #{tpu_custom_call.1} parent=35 // pred_fallthru
          _
      $region36: #{tpu_custom_call.1} parent=5 // pred_fallthru
        _
      %p2460 = scmp.le.s32.totalorder 2, %s11
      // Predicated region
      $region57: #{tpu_custom_call.1} parent=5 // pred_check
        %p2461 = pneg %p2460
      $region58: #{tpu_custom_call.1} parent=5 // pred_check_branch
        %2463 = sbr.rel (%p2461) target = $region60
      $region59: #{tpu_custom_call.1} parent=5 // pred_region
        %s2464 = ssub.s32 %s11, 2
      $region60: #{tpu_custom_call.1} parent=5 // pred_fallthru
        _
    $region6: #{tpu_custom_call.1} parent=1 // loop_footer
      %s15 = sadd.s32 1, %s11
    $region7: #{tpu_custom_call.1} parent=1 // loop_footer_branch
      %10 = sbr.rel target = $region3
    $region8: #{tpu_custom_call.1} parent=1 // loop_exit
      _
    %2465 = vsyncpa [#allocation4], 1
    %s2466 = scalar_lea.sflag [#allocation4], 1
    %2467 = vsyncpa %s2466, 1

</llo_original>
